<compile_context>
chip_gen: v5e
topology: v5e:2x2
jax: 0.10.0
libtpu: 0.0.40
codegen_flags: <defaults>
</compile_context>

<pallas_src>
import functools

import jax
import jax.numpy as jnp
from jax import lax
from jax.experimental import pallas as pl
from jax.experimental.pallas import tpu as pltpu


# ----------------------------------------------------------------------------
# cfg (embedded; same grammar as cfg/yolov3.cfg, shrunk to small shapes)
# ----------------------------------------------------------------------------
CFG_TEXT = """
[net]
height=16
width=16
channels=3

[convolutional]
batch_normalize=1
filters=8
size=3
stride=1
pad=1
activation=leaky

[convolutional]
batch_normalize=1
filters=16
size=3
stride=2
pad=1
activation=leaky

[convolutional]
batch_normalize=1
filters=8
size=1
stride=1
pad=1
activation=leaky

[convolutional]
batch_normalize=1
filters=16
size=3
stride=1
pad=1
activation=leaky

[shortcut]
from=-3
activation=linear

[convolutional]
batch_normalize=1
filters=32
size=3
stride=2
pad=1
activation=leaky

[convolutional]
filters=21
size=1
stride=1
pad=1
activation=linear

[yolo]
mask=3,4,5
anchors=2,3, 4,5, 6,7, 8,9, 10,11, 12,13
classes=2
num=6

[route]
layers=-3

[convolutional]
batch_normalize=1
filters=16
size=1
stride=1
pad=1
activation=leaky

[upsample]
stride=2

[route]
layers=-1, -7

[convolutional]
filters=21
size=1
stride=1
pad=1
activation=linear

[yolo]
mask=0,1,2
anchors=2,3, 4,5, 6,7, 8,9, 10,11, 12,13
classes=2
num=6
"""


def parse_cfg_str(cfg_str):
    lines = cfg_str.split("\n")
    lines = [x for x in lines if len(x) > 0]
    lines = [x for x in lines if x[0] != "#"]
    lines = [x.lstrip().rstrip() for x in lines]
    block = {}
    blocks = []
    for line in lines:
        if line[0] == "[":
            if len(block) != 0:
                blocks.append(block)
                block = {}
            block["type"] = line[1:-1].rstrip()
        else:
            key, value = line.split("=")
            block[key.rstrip()] = value.lstrip()
    blocks.append(block)
    return blocks


def _round_up(x, m):
    return (x + m - 1) // m * m


# ----------------------------------------------------------------------------
# Pallas kernels
# ----------------------------------------------------------------------------
def _matmul_bias_act_kernel(p_ref, w_ref, b_ref, o_ref, acc_ref, *, leaky):
    """Tiled (TM,TK)@(TK,TN) matmul with f32 accumulator + bias + LeakyReLU."""
    k = pl.program_id(2)

    @pl.when(k == 0)
    def _():
        acc_ref[...] = jnp.zeros_like(acc_ref)

    acc_ref[...] += jnp.dot(p_ref[...], w_ref[...],
                            preferred_element_type=jnp.float32)

    @pl.when(k == pl.num_programs(2) - 1)
    def _():
        y = acc_ref[...] + b_ref[...]          # BN scale already folded into W
        if leaky:
            y = jnp.where(y > 0, y, 0.1 * y)
        o_ref[...] = y.astype(o_ref.dtype)


def _yolo_decode_kernel(x_ref, o_ref, *, g, na, stride, anchors, tcol):
    """Lane-dense YOLO decode on an (8, TCOL) tile.

    Rows are the bbox attributes (0..ba-1 valid), columns are (b, gy, gx, a)
    flattened.  Grid offsets and anchor scales are generated in-kernel from
    iota (float index math only), so the kernel streams 1 input -> 1 output.
    """
    x = x_ref[...]                                      # (8, TCOL) f32
    shape = x.shape
    row = lax.broadcasted_iota(jnp.int32, shape, 0)
    col = lax.broadcasted_iota(jnp.int32, shape, 1) + pl.program_id(0) * tcol
    colf = col.astype(jnp.float32)

    per_b = float(g * g * na)
    b_idx = jnp.floor(colf / per_b)
    within = colf - b_idx * per_b                       # cell * na + anchor
    cell = jnp.floor(within / float(na))
    a = within - cell * float(na)                       # anchor index (float)
    gy = jnp.floor(cell / float(g))
    gx = cell - gy * float(g)

    aw = jnp.full(shape, anchors[0][0] / stride, jnp.float32)
    ah = jnp.full(shape, anchors[0][1] / stride, jnp.float32)
    for ai in range(1, na):
        sel = jnp.abs(a - float(ai)) < 0.5
        aw = jnp.where(sel, anchors[ai][0] / stride, aw)
        ah = jnp.where(sel, anchors[ai][1] / stride, ah)

    add = jnp.where(row == 0, gx, jnp.where(row == 1, gy, 0.0))
    mul = jnp.where(row == 2, aw, ah)
    is_exp = (row == 2) | (row == 3)

    # One transcendental per element: t = exp(-|x|) serves sigmoid and exp.
    t = jnp.exp(-jnp.abs(x))
    inv1pt = 1.0 / (1.0 + t)
    sig = jnp.where(x >= 0, inv1pt, t * inv1pt)         # sigmoid(x)
    ex = jnp.where(x >= 0, 1.0 / t, t)                  # exp(x)

    y = jnp.where(is_exp, ex * mul, sig + add)
    o_ref[...] = y * jnp.where(row < 4, jnp.float32(stride), jnp.float32(1.0))


# ----------------------------------------------------------------------------
# Conv wrapper: NHWC im2col + tiled Pallas matmul (fused BN/bias + LeakyReLU)
# ----------------------------------------------------------------------------
def conv2d_bn_act_nhwc(x, weight, scale, shift, stride, pad, leaky):
    """NHWC conv (+folded BN or bias) (+LeakyReLU) via tiled Pallas matmul.

    weight: (Cout, Cin, kh, kw) in PyTorch layout.
    """
    N, H, W, C = x.shape
    Cout, Cin, kh, kw = weight.shape
    Ho = (H + 2 * pad - kh) // stride + 1
    Wo = (W + 2 * pad - kw) // stride + 1

    # im2col in NHWC.  A 1x1 conv is just a (strided) reshape, no inflation.
    # TODO(synk): fuse the 3x3 im2col gather into the kernel (strided window
    # DMA over the padded NHWC input) to remove the kh*kw HBM inflation.
    if kh == 1 and kw == 1 and pad == 0:
        patches = x[:, ::stride, ::stride, :].reshape(N * Ho * Wo, C)
    else:
        xp = jnp.pad(x, ((0, 0), (pad, pad), (pad, pad), (0, 0)))
        cols = []
        for di in range(kh):
            for dj in range(kw):
                cols.append(xp[:, di:di + stride * Ho:stride,
                               dj:dj + stride * Wo:stride, :])
        patches = jnp.concatenate(cols, axis=-1).reshape(
            N * Ho * Wo, kh * kw * C)

    # (kh, kw, Cin, Cout) flattening matches the (di, dj, c) patch ordering.
    wmat = weight.transpose(2, 3, 1, 0).reshape(kh * kw * Cin, Cout)
    wmat = wmat * scale[None, :]          # fold BN scale into the weights

    M, K = patches.shape

    # Tiles: multiples of (8, 128), sized well inside a 32 MiB scoped-VMEM
    # budget with double buffering (safe for v7x's 64 MiB physical VMEM).
    TM = min(256, _round_up(M, 8))
    TK = min(512, _round_up(K, 128))
    TN = min(256, _round_up(Cout, 128))
    Mp = _round_up(M, TM)
    Kp = _round_up(K, TK)
    Cp = _round_up(Cout, TN)

    patches_p = jnp.pad(patches, ((0, Mp - M), (0, Kp - K)))
    w_p = jnp.pad(wmat, ((0, Kp - K), (0, Cp - Cout)))
    shift_p = jnp.pad(shift, (0, Cp - Cout)).reshape(1, Cp)

    grid = (Mp // TM, Cp // TN, Kp // TK)
    out = pl.pallas_call(
        functools.partial(_matmul_bias_act_kernel, leaky=leaky),
        out_shape=jax.ShapeDtypeStruct((Mp, Cp), jnp.float32),
        grid_spec=pltpu.PrefetchScalarGridSpec(
            num_scalar_prefetch=0,
            grid=grid,
            in_specs=[
                pl.BlockSpec((TM, TK), lambda i, j, k: (i, k)),
                pl.BlockSpec((TK, TN), lambda i, j, k: (k, j)),
                pl.BlockSpec((1, TN), lambda i, j, k: (0, j)),
            ],
            out_specs=pl.BlockSpec((TM, TN), lambda i, j, k: (i, j)),
            scratch_shapes=[pltpu.VMEM((TM, TN), jnp.float32)],
        ),
        compiler_params=pltpu.CompilerParams(
            dimension_semantics=("parallel", "parallel", "arbitrary"),
            vmem_limit_bytes=32 * 1024 * 1024,
        ),
        cost_estimate=pl.CostEstimate(
            flops=int(2 * Mp * Kp * Cp),
            transcendentals=0,
            bytes_accessed=int(4 * (Mp * Kp + Kp * Cp + Mp * Cp)),
        ),
    )(patches_p, w_p, shift_p)

    return out[:M, :Cout].reshape(N, Ho, Wo, Cout)


# ----------------------------------------------------------------------------
# YOLO decode wrapper (standard YOLOv3 predict_transform), NHWC input
# ----------------------------------------------------------------------------
def predict_transform_nhwc(x, inp_dim, anchors, num_classes):
    B, G, _, _ = x.shape                  # (B, G, G, na*ba)
    stride = inp_dim // G
    na = len(anchors)
    ba = 5 + num_classes
    R = B * G * G * na

    # (B, G, G, na*ba) -> (R, ba) -> lane-dense (ba, R) for the kernel.
    flat = x.reshape(R, ba).T

    SUB = _round_up(ba, 8)                # ba=7 -> one 8-row sublane group
    TCOL = min(2048, _round_up(R, 128))
    Rp = _round_up(R, TCOL)
    flat_p = jnp.pad(flat, ((0, SUB - ba), (0, Rp - R)))

    out = pl.pallas_call(
        functools.partial(_yolo_decode_kernel, g=G, na=na, stride=stride,
                          anchors=anchors, tcol=TCOL),
        out_shape=jax.ShapeDtypeStruct((SUB, Rp), jnp.float32),
        grid_spec=pltpu.PrefetchScalarGridSpec(
            num_scalar_prefetch=0,
            grid=(Rp // TCOL,),
            in_specs=[pl.BlockSpec((SUB, TCOL), lambda c: (0, c))],
            out_specs=pl.BlockSpec((SUB, TCOL), lambda c: (0, c)),
        ),
        compiler_params=pltpu.CompilerParams(
            dimension_semantics=("parallel",),
            vmem_limit_bytes=32 * 1024 * 1024,
        ),
        cost_estimate=pl.CostEstimate(
            flops=int(20 * SUB * Rp),
            transcendentals=int(SUB * Rp),
            bytes_accessed=int(4 * 2 * SUB * Rp),
        ),
    )(flat_p)

    return out[:ba, :R].T.reshape(B, G * G * na, ba)


# ----------------------------------------------------------------------------
# Module construction (deterministic synthetic parameters) & forward
# ----------------------------------------------------------------------------
def create_modules_params(blocks, key):
    net_info = blocks[0]
    prev_filters = int(net_info.get("channels", 3))
    output_filters = []
    layers = []
    for index, b in enumerate(blocks[1:]):
        t = b["type"]
        params = {"type": t}
        filters = prev_filters
        if t == "convolutional":
            bn = int(b.get("batch_normalize", 0))
            filters = int(b["filters"])
            ksize = int(b["size"])
            stride = int(b["stride"])
            pad = (ksize - 1) // 2 if int(b["pad"]) else 0
            k = jax.random.fold_in(key, index)
            kw_, kb, kg, kbe, km, kv = jax.random.split(k, 6)
            w = jax.random.normal(kw_, (filters, prev_filters, ksize, ksize),
                                  jnp.float32) * 0.1
            if bn:
                gamma = 1.0 + 0.1 * jax.random.normal(kg, (filters,), jnp.float32)
                beta = 0.1 * jax.random.normal(kbe, (filters,), jnp.float32)
                mean = 0.1 * jax.random.normal(km, (filters,), jnp.float32)
                var = jnp.abs(jax.random.normal(kv, (filters,), jnp.float32)) * 0.1 + 1.0
                eps = 1e-5
                scale = gamma / jnp.sqrt(var + eps)
                shift = beta - mean * scale
            else:
                bias = 0.1 * jax.random.normal(kb, (filters,), jnp.float32)
                scale = jnp.ones((filters,), jnp.float32)
                shift = bias
            params.update(weight=w, scale=scale, shift=shift, stride=stride,
                          pad=pad, leaky=(b["activation"] == "leaky"))
        elif t == "route":
            ls = [int(v) for v in b["layers"].split(",")]
            start = ls[0]
            end = ls[1] if len(ls) > 1 else 0
            if start > 0:
                start -= index
            if end > 0:
                end -= index
            if end < 0:
                filters = output_filters[index + start] + output_filters[index + end]
            else:
                filters = output_filters[index + start]
        elif t == "yolo":
            mask = [int(v) for v in b["mask"].split(",")]
            anch = list(map(int, b["anchors"].split(",")))
            anch = [(anch[i], anch[i + 1]) for i in range(0, len(anch), 2)]
            params["anchors"] = [anch[m] for m in mask]
        # upsample / shortcut keep prev_filters
        layers.append(params)
        prev_filters = filters
        output_filters.append(filters)
    return net_info, layers


def darknet_forward(blocks, net_info, layers, x_nchw):
    # Single NCHW -> NHWC transpose at the input; NHWC everywhere after.
    x = jnp.transpose(x_nchw, (0, 2, 3, 1))
    outputs = {}
    detections = None
    for i, b in enumerate(blocks[1:]):
        t = b["type"]
        p = layers[i]
        if t == "convolutional":
            x = conv2d_bn_act_nhwc(x, p["weight"], p["scale"], p["shift"],
                                   p["stride"], p["pad"], p["leaky"])
        elif t == "upsample":
            # nn.Upsample(scale_factor=2, mode='bilinear'), NHWC spatial resize
            N, H, W, C = x.shape
            x = jax.image.resize(x, (N, 2 * H, 2 * W, C), method="bilinear")
        elif t == "route":
            ls = [int(v) for v in b["layers"].split(",")]
            if ls[0] > 0:
                ls[0] = ls[0] - i
            if len(ls) == 1:
                x = outputs[i + ls[0]]
            else:
                if ls[1] > 0:
                    ls[1] = ls[1] - i
                x = jnp.concatenate([outputs[i + ls[0]], outputs[i + ls[1]]],
                                    axis=-1)          # channel concat (NHWC)
        elif t == "shortcut":
            frm = int(b["from"])
            x = outputs[i - 1] + outputs[i + frm]
        elif t == "yolo":
            anchors = p["anchors"]
            inp_dim = int(net_info["height"])
            num_classes = int(b["classes"])
            x = predict_transform_nhwc(x, inp_dim, anchors, num_classes)
            if detections is None:
                detections = x
            else:
                detections = jnp.concatenate([detections, x], axis=1)
        outputs[i] = x
    return detections


if __name__ == "__main__":
    blocks = parse_cfg_str(CFG_TEXT)
    key = jax.random.PRNGKey(0)
    net_info, layers = create_modules_params(blocks, jax.random.fold_in(key, 1))

    # Input: batch=2, channels=3, spatial=16x16 (NCHW, matching cfg [net]).
    x = jax.random.normal(jax.random.fold_in(key, 2), (2, 3, 16, 16), jnp.float32)

    fwd = jax.jit(lambda inp: darknet_forward(blocks, net_info, layers, inp))
    detections = jax.block_until_ready(fwd(x))

    assert detections.shape == (2, 4 * 4 * 3 + 8 * 8 * 3, 7), detections.shape
    assert jnp.all(jnp.isfinite(detections))
    print("KERNEL_OK")
</pallas_src>

<mosaic_0001>
module attributes {stable_mosaic.version = 11 : i64} {
  func.func @_matmul_bias_act_kernel(%arg0: i32, %arg1: i32, %arg2: i32, %arg3: memref<256x128xf32, #tpu.memory_space<vmem>>, %arg4: memref<128x128xf32, #tpu.memory_space<vmem>>, %arg5: memref<1x128xf32, #tpu.memory_space<vmem>>, %arg6: memref<256x128xf32, #tpu.memory_space<vmem>>, %arg7: memref<256x128xf32, #tpu.memory_space<vmem>>) attributes {dimension_semantics = [#tpu.dimension_semantics<parallel>, #tpu.dimension_semantics<parallel>, #tpu.dimension_semantics<arbitrary>], iteration_bounds = array<i64: 2, 1, 1>, scalar_prefetch = 0 : i64, scratch_operands = 1 : i64, tpu.core_type = #tpu.core_type<tc>, window_params = [{transform_indices = @transform_0, window_bounds = array<i64: 256, 128>}, {transform_indices = @transform_1, window_bounds = array<i64: 128, 128>}, {transform_indices = @transform_2, window_bounds = array<i64: 1, 128>}, {transform_indices = @transform_3, window_bounds = array<i64: 256, 128>}]} {
    %c0_i32 = arith.constant 0 : i32
    %0 = arith.cmpi eq, %arg2, %c0_i32 : i32
    %1 = arith.extui %0 : i1 to i32
    %c0_i32_0 = arith.constant 0 : i32
    %2 = arith.cmpi ne, %1, %c0_i32_0 : i32
    scf.if %2 {
      %cst_10 = arith.constant 0.000000e+00 : f32
      %12 = vector.broadcast %cst_10 : f32 to vector<256x128xf32>
      %c0_11 = arith.constant 0 : index
      %c0_12 = arith.constant 0 : index
      %13 = vector.load %arg7[%c0_11, %c0_12] : memref<256x128xf32, #tpu.memory_space<vmem>>, vector<256x128xf32>
      tpu.vector_store %arg7[%c0_11, %c0_12], %12 {strides = array<i32>} : memref<256x128xf32, #tpu.memory_space<vmem>>, vector<256x128xf32>,
    } else {
    }
    %c0 = arith.constant 0 : index
    %c0_1 = arith.constant 0 : index
    %3 = vector.load %arg7[%c0, %c0_1] : memref<256x128xf32, #tpu.memory_space<vmem>>, vector<256x128xf32>
    %c0_2 = arith.constant 0 : index
    %c0_3 = arith.constant 0 : index
    %4 = vector.load %arg3[%c0_2, %c0_3] : memref<256x128xf32, #tpu.memory_space<vmem>>, vector<256x128xf32>
    %c0_4 = arith.constant 0 : index
    %c0_5 = arith.constant 0 : index
    %5 = vector.load %arg4[%c0_4, %c0_5] : memref<128x128xf32, #tpu.memory_space<vmem>>, vector<128x128xf32>
    %cst = arith.constant dense<0.000000e+00> : vector<256x128xf32>
    %6 = tpu.matmul %4, %5, %cst {dimension_numbers = #tpu.dot_dimension_numbers<[1], [0], [0], [1], [0, 0, 1, 1], [], []>} : vector<256x128xf32>, vector<128x128xf32>, vector<256x128xf32> -> vector<256x128xf32>
    %7 = arith.addf %3, %6 : vector<256x128xf32>
    %c0_6 = arith.constant 0 : index
    %c0_7 = arith.constant 0 : index
    %8 = vector.load %arg7[%c0_6, %c0_7] : memref<256x128xf32, #tpu.memory_space<vmem>>, vector<256x128xf32>
    tpu.vector_store %arg7[%c0_6, %c0_7], %7 {strides = array<i32>} : memref<256x128xf32, #tpu.memory_space<vmem>>, vector<256x128xf32>,
    %c0_i32_8 = arith.constant 0 : i32
    %9 = arith.cmpi eq, %arg2, %c0_i32_8 : i32
    %10 = arith.extui %9 : i1 to i32
    %c0_i32_9 = arith.constant 0 : i32
    %11 = arith.cmpi ne, %10, %c0_i32_9 : i32
    scf.if %11 {
      %c0_10 = arith.constant 0 : index
      %c0_11 = arith.constant 0 : index
      %12 = vector.load %arg7[%c0_10, %c0_11] : memref<256x128xf32, #tpu.memory_space<vmem>>, vector<256x128xf32>
      %c0_12 = arith.constant 0 : index
      %c0_13 = arith.constant 0 : index
      %13 = vector.load %arg5[%c0_12, %c0_13] : memref<1x128xf32, #tpu.memory_space<vmem>>, vector<1x128xf32>
      %14 = vector.broadcast %13 : vector<1x128xf32> to vector<256x128xf32>
      %15 = arith.addf %12, %14 : vector<256x128xf32>
      %cst_14 = arith.constant 0.000000e+00 : f32
      %16 = vector.broadcast %cst_14 : f32 to vector<256x128xf32>
      %17 = arith.cmpf ogt, %15, %16 : vector<256x128xf32>
      %cst_15 = arith.constant 1.000000e-01 : f32
      %18 = vector.broadcast %cst_15 : f32 to vector<256x128xf32>
      %19 = arith.mulf %18, %15 : vector<256x128xf32>
      %20 = arith.select %17, %15, %19 : vector<256x128xi1>, vector<256x128xf32>
      %c0_16 = arith.constant 0 : index
      %c0_17 = arith.constant 0 : index
      %21 = vector.load %arg6[%c0_16, %c0_17] : memref<256x128xf32, #tpu.memory_space<vmem>>, vector<256x128xf32>
      tpu.vector_store %arg6[%c0_16, %c0_17], %20 {strides = array<i32>} : memref<256x128xf32, #tpu.memory_space<vmem>>, vector<256x128xf32>,
    } else {
    }
    return
  }
  func.func @transform_0(%arg0: i32, %arg1: i32, %arg2: i32) -> (i32, i32) {
    %c0_i32 = arith.constant 0 : i32
    return %arg0, %arg2 : i32, i32
  }
  func.func @transform_1(%arg0: i32, %arg1: i32, %arg2: i32) -> (i32, i32) {
    %c0_i32 = arith.constant 0 : i32
    return %arg2, %arg1 : i32, i32
  }
  func.func @transform_2(%arg0: i32, %arg1: i32, %arg2: i32) -> (i32, i32) {
    %c0_i32 = arith.constant 0 : i32
    %c0_i32_0 = arith.constant 0 : i32
    return %c0_i32, %arg1 : i32, i32
  }
  func.func @transform_3(%arg0: i32, %arg1: i32, %arg2: i32) -> (i32, i32) {
    %c0_i32 = arith.constant 0 : i32
    return %arg0, %arg1 : i32, i32
  }
}

module attributes {stable_mosaic.version = 11 : i64} {
  func.func @_matmul_bias_act_kernel(%arg0: i32, %arg1: i32, %arg2: i32, %arg3: memref<128x128xf32, #tpu.memory_space<vmem>>, %arg4: memref<128x128xf32, #tpu.memory_space<vmem>>, %arg5: memref<1x128xf32, #tpu.memory_space<vmem>>, %arg6: memref<128x128xf32, #tpu.memory_space<vmem>>, %arg7: memref<128x128xf32, #tpu.memory_space<vmem>>) attributes {dimension_semantics = [#tpu.dimension_semantics<parallel>, #tpu.dimension_semantics<parallel>, #tpu.dimension_semantics<arbitrary>], iteration_bounds = array<i64: 1, 1, 1>, scalar_prefetch = 0 : i64, scratch_operands = 1 : i64, tpu.core_type = #tpu.core_type<tc>, window_params = [{transform_indices = @transform_0, window_bounds = array<i64: 128, 128>}, {transform_indices = @transform_1, window_bounds = array<i64: 128, 128>}, {transform_indices = @transform_2, window_bounds = array<i64: 1, 128>}, {transform_indices = @transform_3, window_bounds = array<i64: 128, 128>}]} {
    %c0_i32 = arith.constant 0 : i32
    %0 = arith.cmpi eq, %arg2, %c0_i32 : i32
    %1 = arith.extui %0 : i1 to i32
    %c0_i32_0 = arith.constant 0 : i32
    %2 = arith.cmpi ne, %1, %c0_i32_0 : i32
    scf.if %2 {
      %cst_10 = arith.constant 0.000000e+00 : f32
      %12 = vector.broadcast %cst_10 : f32 to vector<128x128xf32>
      %c0_11 = arith.constant 0 : index
      %c0_12 = arith.constant 0 : index
      %13 = vector.load %arg7[%c0_11, %c0_12] : memref<128x128xf32, #tpu.memory_space<vmem>>, vector<128x128xf32>
      tpu.vector_store %arg7[%c0_11, %c0_12], %12 {strides = array<i32>} : memref<128x128xf32, #tpu.memory_space<vmem>>, vector<128x128xf32>,
    } else {
    }
    %c0 = arith.constant 0 : index
    %c0_1 = arith.constant 0 : index
    %3 = vector.load %arg7[%c0, %c0_1] : memref<128x128xf32, #tpu.memory_space<vmem>>, vector<128x128xf32>
    %c0_2 = arith.constant 0 : index
    %c0_3 = arith.constant 0 : index
    %4 = vector.load %arg3[%c0_2, %c0_3] : memref<128x128xf32, #tpu.memory_space<vmem>>, vector<128x128xf32>
    %c0_4 = arith.constant 0 : index
    %c0_5 = arith.constant 0 : index
    %5 = vector.load %arg4[%c0_4, %c0_5] : memref<128x128xf32, #tpu.memory_space<vmem>>, vector<128x128xf32>
    %cst = arith.constant dense<0.000000e+00> : vector<128x128xf32>
    %6 = tpu.matmul %4, %5, %cst {dimension_numbers = #tpu.dot_dimension_numbers<[1], [0], [0], [1], [0, 0, 1, 1], [], []>} : vector<128x128xf32>, vector<128x128xf32>, vector<128x128xf32> -> vector<128x128xf32>
    %7 = arith.addf %3, %6 : vector<128x128xf32>
    %c0_6 = arith.constant 0 : index
    %c0_7 = arith.constant 0 : index
    %8 = vector.load %arg7[%c0_6, %c0_7] : memref<128x128xf32, #tpu.memory_space<vmem>>, vector<128x128xf32>
    tpu.vector_store %arg7[%c0_6, %c0_7], %7 {strides = array<i32>} : memref<128x128xf32, #tpu.memory_space<vmem>>, vector<128x128xf32>,
    %c0_i32_8 = arith.constant 0 : i32
    %9 = arith.cmpi eq, %arg2, %c0_i32_8 : i32
    %10 = arith.extui %9 : i1 to i32
    %c0_i32_9 = arith.constant 0 : i32
    %11 = arith.cmpi ne, %10, %c0_i32_9 : i32
    scf.if %11 {
      %c0_10 = arith.constant 0 : index
      %c0_11 = arith.constant 0 : index
      %12 = vector.load %arg7[%c0_10, %c0_11] : memref<128x128xf32, #tpu.memory_space<vmem>>, vector<128x128xf32>
      %c0_12 = arith.constant 0 : index
      %c0_13 = arith.constant 0 : index
      %13 = vector.load %arg5[%c0_12, %c0_13] : memref<1x128xf32, #tpu.memory_space<vmem>>, vector<1x128xf32>
      %14 = vector.broadcast %13 : vector<1x128xf32> to vector<128x128xf32>
      %15 = arith.addf %12, %14 : vector<128x128xf32>
      %cst_14 = arith.constant 0.000000e+00 : f32
      %16 = vector.broadcast %cst_14 : f32 to vector<128x128xf32>
      %17 = arith.cmpf ogt, %15, %16 : vector<128x128xf32>
      %cst_15 = arith.constant 1.000000e-01 : f32
      %18 = vector.broadcast %cst_15 : f32 to vector<128x128xf32>
      %19 = arith.mulf %18, %15 : vector<128x128xf32>
      %20 = arith.select %17, %15, %19 : vector<128x128xi1>, vector<128x128xf32>
      %c0_16 = arith.constant 0 : index
      %c0_17 = arith.constant 0 : index
      %21 = vector.load %arg6[%c0_16, %c0_17] : memref<128x128xf32, #tpu.memory_space<vmem>>, vector<128x128xf32>
      tpu.vector_store %arg6[%c0_16, %c0_17], %20 {strides = array<i32>} : memref<128x128xf32, #tpu.memory_space<vmem>>, vector<128x128xf32>,
    } else {
    }
    return
  }
  func.func @transform_0(%arg0: i32, %arg1: i32, %arg2: i32) -> (i32, i32) {
    %c0_i32 = arith.constant 0 : i32
    return %arg0, %arg2 : i32, i32
  }
  func.func @transform_1(%arg0: i32, %arg1: i32, %arg2: i32) -> (i32, i32) {
    %c0_i32 = arith.constant 0 : i32
    return %arg2, %arg1 : i32, i32
  }
  func.func @transform_2(%arg0: i32, %arg1: i32, %arg2: i32) -> (i32, i32) {
    %c0_i32 = arith.constant 0 : i32
    %c0_i32_0 = arith.constant 0 : i32
    return %c0_i32, %arg1 : i32, i32
  }
  func.func @transform_3(%arg0: i32, %arg1: i32, %arg2: i32) -> (i32, i32) {
    %c0_i32 = arith.constant 0 : i32
    return %arg0, %arg1 : i32, i32
  }
}

module attributes {stable_mosaic.version = 11 : i64} {
  func.func @_matmul_bias_act_kernel(%arg0: i32, %arg1: i32, %arg2: i32, %arg3: memref<32x256xf32, #tpu.memory_space<vmem>>, %arg4: memref<256x128xf32, #tpu.memory_space<vmem>>, %arg5: memref<1x128xf32, #tpu.memory_space<vmem>>, %arg6: memref<32x128xf32, #tpu.memory_space<vmem>>, %arg7: memref<32x128xf32, #tpu.memory_space<vmem>>) attributes {dimension_semantics = [#tpu.dimension_semantics<parallel>, #tpu.dimension_semantics<parallel>, #tpu.dimension_semantics<arbitrary>], iteration_bounds = array<i64: 1, 1, 1>, scalar_prefetch = 0 : i64, scratch_operands = 1 : i64, tpu.core_type = #tpu.core_type<tc>, window_params = [{transform_indices = @transform_0, window_bounds = array<i64: 32, 256>}, {transform_indices = @transform_1, window_bounds = array<i64: 256, 128>}, {transform_indices = @transform_2, window_bounds = array<i64: 1, 128>}, {transform_indices = @transform_3, window_bounds = array<i64: 32, 128>}]} {
    %c0_i32 = arith.constant 0 : i32
    %0 = arith.cmpi eq, %arg2, %c0_i32 : i32
    %1 = arith.extui %0 : i1 to i32
    %c0_i32_0 = arith.constant 0 : i32
    %2 = arith.cmpi ne, %1, %c0_i32_0 : i32
    scf.if %2 {
      %cst_10 = arith.constant 0.000000e+00 : f32
      %12 = vector.broadcast %cst_10 : f32 to vector<32x128xf32>
      %c0_11 = arith.constant 0 : index
      %c0_12 = arith.constant 0 : index
      %13 = vector.load %arg7[%c0_11, %c0_12] : memref<32x128xf32, #tpu.memory_space<vmem>>, vector<32x128xf32>
      tpu.vector_store %arg7[%c0_11, %c0_12], %12 {strides = array<i32>} : memref<32x128xf32, #tpu.memory_space<vmem>>, vector<32x128xf32>,
    } else {
    }
    %c0 = arith.constant 0 : index
    %c0_1 = arith.constant 0 : index
    %3 = vector.load %arg7[%c0, %c0_1] : memref<32x128xf32, #tpu.memory_space<vmem>>, vector<32x128xf32>
    %c0_2 = arith.constant 0 : index
    %c0_3 = arith.constant 0 : index
    %4 = vector.load %arg3[%c0_2, %c0_3] : memref<32x256xf32, #tpu.memory_space<vmem>>, vector<32x256xf32>
    %c0_4 = arith.constant 0 : index
    %c0_5 = arith.constant 0 : index
    %5 = vector.load %arg4[%c0_4, %c0_5] : memref<256x128xf32, #tpu.memory_space<vmem>>, vector<256x128xf32>
    %cst = arith.constant dense<0.000000e+00> : vector<32x128xf32>
    %6 = tpu.matmul %4, %5, %cst {dimension_numbers = #tpu.dot_dimension_numbers<[1], [0], [0], [1], [0, 0, 1, 1], [], []>} : vector<32x256xf32>, vector<256x128xf32>, vector<32x128xf32> -> vector<32x128xf32>
    %7 = arith.addf %3, %6 : vector<32x128xf32>
    %c0_6 = arith.constant 0 : index
    %c0_7 = arith.constant 0 : index
    %8 = vector.load %arg7[%c0_6, %c0_7] : memref<32x128xf32, #tpu.memory_space<vmem>>, vector<32x128xf32>
    tpu.vector_store %arg7[%c0_6, %c0_7], %7 {strides = array<i32>} : memref<32x128xf32, #tpu.memory_space<vmem>>, vector<32x128xf32>,
    %c0_i32_8 = arith.constant 0 : i32
    %9 = arith.cmpi eq, %arg2, %c0_i32_8 : i32
    %10 = arith.extui %9 : i1 to i32
    %c0_i32_9 = arith.constant 0 : i32
    %11 = arith.cmpi ne, %10, %c0_i32_9 : i32
    scf.if %11 {
      %c0_10 = arith.constant 0 : index
      %c0_11 = arith.constant 0 : index
      %12 = vector.load %arg7[%c0_10, %c0_11] : memref<32x128xf32, #tpu.memory_space<vmem>>, vector<32x128xf32>
      %c0_12 = arith.constant 0 : index
      %c0_13 = arith.constant 0 : index
      %13 = vector.load %arg5[%c0_12, %c0_13] : memref<1x128xf32, #tpu.memory_space<vmem>>, vector<1x128xf32>
      %14 = vector.broadcast %13 : vector<1x128xf32> to vector<32x128xf32>
      %15 = arith.addf %12, %14 : vector<32x128xf32>
      %cst_14 = arith.constant 0.000000e+00 : f32
      %16 = vector.broadcast %cst_14 : f32 to vector<32x128xf32>
      %17 = arith.cmpf ogt, %15, %16 : vector<32x128xf32>
      %cst_15 = arith.constant 1.000000e-01 : f32
      %18 = vector.broadcast %cst_15 : f32 to vector<32x128xf32>
      %19 = arith.mulf %18, %15 : vector<32x128xf32>
      %20 = arith.select %17, %15, %19 : vector<32x128xi1>, vector<32x128xf32>
      %c0_16 = arith.constant 0 : index
      %c0_17 = arith.constant 0 : index
      %21 = vector.load %arg6[%c0_16, %c0_17] : memref<32x128xf32, #tpu.memory_space<vmem>>, vector<32x128xf32>
      tpu.vector_store %arg6[%c0_16, %c0_17], %20 {strides = array<i32>} : memref<32x128xf32, #tpu.memory_space<vmem>>, vector<32x128xf32>,
    } else {
    }
    return
  }
  func.func @transform_0(%arg0: i32, %arg1: i32, %arg2: i32) -> (i32, i32) {
    %c0_i32 = arith.constant 0 : i32
    return %arg0, %arg2 : i32, i32
  }
  func.func @transform_1(%arg0: i32, %arg1: i32, %arg2: i32) -> (i32, i32) {
    %c0_i32 = arith.constant 0 : i32
    return %arg2, %arg1 : i32, i32
  }
  func.func @transform_2(%arg0: i32, %arg1: i32, %arg2: i32) -> (i32, i32) {
    %c0_i32 = arith.constant 0 : i32
    %c0_i32_0 = arith.constant 0 : i32
    return %c0_i32, %arg1 : i32, i32
  }
  func.func @transform_3(%arg0: i32, %arg1: i32, %arg2: i32) -> (i32, i32) {
    %c0_i32 = arith.constant 0 : i32
    return %arg0, %arg1 : i32, i32
  }
}

module attributes {stable_mosaic.version = 11 : i64} {
  func.func @_matmul_bias_act_kernel(%arg0: i32, %arg1: i32, %arg2: i32, %arg3: memref<32x128xf32, #tpu.memory_space<vmem>>, %arg4: memref<128x128xf32, #tpu.memory_space<vmem>>, %arg5: memref<1x128xf32, #tpu.memory_space<vmem>>, %arg6: memref<32x128xf32, #tpu.memory_space<vmem>>, %arg7: memref<32x128xf32, #tpu.memory_space<vmem>>) attributes {dimension_semantics = [#tpu.dimension_semantics<parallel>, #tpu.dimension_semantics<parallel>, #tpu.dimension_semantics<arbitrary>], iteration_bounds = array<i64: 1, 1, 1>, scalar_prefetch = 0 : i64, scratch_operands = 1 : i64, tpu.core_type = #tpu.core_type<tc>, window_params = [{transform_indices = @transform_0, window_bounds = array<i64: 32, 128>}, {transform_indices = @transform_1, window_bounds = array<i64: 128, 128>}, {transform_indices = @transform_2, window_bounds = array<i64: 1, 128>}, {transform_indices = @transform_3, window_bounds = array<i64: 32, 128>}]} {
    %c0_i32 = arith.constant 0 : i32
    %0 = arith.cmpi eq, %arg2, %c0_i32 : i32
    %1 = arith.extui %0 : i1 to i32
    %c0_i32_0 = arith.constant 0 : i32
    %2 = arith.cmpi ne, %1, %c0_i32_0 : i32
    scf.if %2 {
      %cst_10 = arith.constant 0.000000e+00 : f32
      %12 = vector.broadcast %cst_10 : f32 to vector<32x128xf32>
      %c0_11 = arith.constant 0 : index
      %c0_12 = arith.constant 0 : index
      %13 = vector.load %arg7[%c0_11, %c0_12] : memref<32x128xf32, #tpu.memory_space<vmem>>, vector<32x128xf32>
      tpu.vector_store %arg7[%c0_11, %c0_12], %12 {strides = array<i32>} : memref<32x128xf32, #tpu.memory_space<vmem>>, vector<32x128xf32>,
    } else {
    }
    %c0 = arith.constant 0 : index
    %c0_1 = arith.constant 0 : index
    %3 = vector.load %arg7[%c0, %c0_1] : memref<32x128xf32, #tpu.memory_space<vmem>>, vector<32x128xf32>
    %c0_2 = arith.constant 0 : index
    %c0_3 = arith.constant 0 : index
    %4 = vector.load %arg3[%c0_2, %c0_3] : memref<32x128xf32, #tpu.memory_space<vmem>>, vector<32x128xf32>
    %c0_4 = arith.constant 0 : index
    %c0_5 = arith.constant 0 : index
    %5 = vector.load %arg4[%c0_4, %c0_5] : memref<128x128xf32, #tpu.memory_space<vmem>>, vector<128x128xf32>
    %cst = arith.constant dense<0.000000e+00> : vector<32x128xf32>
    %6 = tpu.matmul %4, %5, %cst {dimension_numbers = #tpu.dot_dimension_numbers<[1], [0], [0], [1], [0, 0, 1, 1], [], []>} : vector<32x128xf32>, vector<128x128xf32>, vector<32x128xf32> -> vector<32x128xf32>
    %7 = arith.addf %3, %6 : vector<32x128xf32>
    %c0_6 = arith.constant 0 : index
    %c0_7 = arith.constant 0 : index
    %8 = vector.load %arg7[%c0_6, %c0_7] : memref<32x128xf32, #tpu.memory_space<vmem>>, vector<32x128xf32>
    tpu.vector_store %arg7[%c0_6, %c0_7], %7 {strides = array<i32>} : memref<32x128xf32, #tpu.memory_space<vmem>>, vector<32x128xf32>,
    %c0_i32_8 = arith.constant 0 : i32
    %9 = arith.cmpi eq, %arg2, %c0_i32_8 : i32
    %10 = arith.extui %9 : i1 to i32
    %c0_i32_9 = arith.constant 0 : i32
    %11 = arith.cmpi ne, %10, %c0_i32_9 : i32
    scf.if %11 {
      %c0_10 = arith.constant 0 : index
      %c0_11 = arith.constant 0 : index
      %12 = vector.load %arg7[%c0_10, %c0_11] : memref<32x128xf32, #tpu.memory_space<vmem>>, vector<32x128xf32>
      %c0_12 = arith.constant 0 : index
      %c0_13 = arith.constant 0 : index
      %13 = vector.load %arg5[%c0_12, %c0_13] : memref<1x128xf32, #tpu.memory_space<vmem>>, vector<1x128xf32>
      %14 = vector.broadcast %13 : vector<1x128xf32> to vector<32x128xf32>
      %15 = arith.addf %12, %14 : vector<32x128xf32>
      %cst_14 = arith.constant 0.000000e+00 : f32
      %16 = vector.broadcast %cst_14 : f32 to vector<32x128xf32>
      %17 = arith.cmpf ogt, %15, %16 : vector<32x128xf32>
      %cst_15 = arith.constant 1.000000e-01 : f32
      %18 = vector.broadcast %cst_15 : f32 to vector<32x128xf32>
      %19 = arith.mulf %18, %15 : vector<32x128xf32>
      %20 = arith.select %17, %15, %19 : vector<32x128xi1>, vector<32x128xf32>
      %c0_16 = arith.constant 0 : index
      %c0_17 = arith.constant 0 : index
      %21 = vector.load %arg6[%c0_16, %c0_17] : memref<32x128xf32, #tpu.memory_space<vmem>>, vector<32x128xf32>
      tpu.vector_store %arg6[%c0_16, %c0_17], %20 {strides = array<i32>} : memref<32x128xf32, #tpu.memory_space<vmem>>, vector<32x128xf32>,
    } else {
    }
    return
  }
  func.func @transform_0(%arg0: i32, %arg1: i32, %arg2: i32) -> (i32, i32) {
    %c0_i32 = arith.constant 0 : i32
    return %arg0, %arg2 : i32, i32
  }
  func.func @transform_1(%arg0: i32, %arg1: i32, %arg2: i32) -> (i32, i32) {
    %c0_i32 = arith.constant 0 : i32
    return %arg2, %arg1 : i32, i32
  }
  func.func @transform_2(%arg0: i32, %arg1: i32, %arg2: i32) -> (i32, i32) {
    %c0_i32 = arith.constant 0 : i32
    %c0_i32_0 = arith.constant 0 : i32
    return %c0_i32, %arg1 : i32, i32
  }
  func.func @transform_3(%arg0: i32, %arg1: i32, %arg2: i32) -> (i32, i32) {
    %c0_i32 = arith.constant 0 : i32
    return %arg0, %arg1 : i32, i32
  }
}

module attributes {stable_mosaic.version = 11 : i64} {
  func.func @_matmul_bias_act_kernel(%arg0: i32, %arg1: i32, %arg2: i32, %arg3: memref<128x128xf32, #tpu.memory_space<vmem>>, %arg4: memref<128x128xf32, #tpu.memory_space<vmem>>, %arg5: memref<1x128xf32, #tpu.memory_space<vmem>>, %arg6: memref<128x128xf32, #tpu.memory_space<vmem>>, %arg7: memref<128x128xf32, #tpu.memory_space<vmem>>) attributes {dimension_semantics = [#tpu.dimension_semantics<parallel>, #tpu.dimension_semantics<parallel>, #tpu.dimension_semantics<arbitrary>], iteration_bounds = array<i64: 1, 1, 1>, scalar_prefetch = 0 : i64, scratch_operands = 1 : i64, tpu.core_type = #tpu.core_type<tc>, window_params = [{transform_indices = @transform_0, window_bounds = array<i64: 128, 128>}, {transform_indices = @transform_1, window_bounds = array<i64: 128, 128>}, {transform_indices = @transform_2, window_bounds = array<i64: 1, 128>}, {transform_indices = @transform_3, window_bounds = array<i64: 128, 128>}]} {
    %c0_i32 = arith.constant 0 : i32
    %0 = arith.cmpi eq, %arg2, %c0_i32 : i32
    %1 = arith.extui %0 : i1 to i32
    %c0_i32_0 = arith.constant 0 : i32
    %2 = arith.cmpi ne, %1, %c0_i32_0 : i32
    scf.if %2 {
      %cst_10 = arith.constant 0.000000e+00 : f32
      %12 = vector.broadcast %cst_10 : f32 to vector<128x128xf32>
      %c0_11 = arith.constant 0 : index
      %c0_12 = arith.constant 0 : index
      %13 = vector.load %arg7[%c0_11, %c0_12] : memref<128x128xf32, #tpu.memory_space<vmem>>, vector<128x128xf32>
      tpu.vector_store %arg7[%c0_11, %c0_12], %12 {strides = array<i32>} : memref<128x128xf32, #tpu.memory_space<vmem>>, vector<128x128xf32>,
    } else {
    }
    %c0 = arith.constant 0 : index
    %c0_1 = arith.constant 0 : index
    %3 = vector.load %arg7[%c0, %c0_1] : memref<128x128xf32, #tpu.memory_space<vmem>>, vector<128x128xf32>
    %c0_2 = arith.constant 0 : index
    %c0_3 = arith.constant 0 : index
    %4 = vector.load %arg3[%c0_2, %c0_3] : memref<128x128xf32, #tpu.memory_space<vmem>>, vector<128x128xf32>
    %c0_4 = arith.constant 0 : index
    %c0_5 = arith.constant 0 : index
    %5 = vector.load %arg4[%c0_4, %c0_5] : memref<128x128xf32, #tpu.memory_space<vmem>>, vector<128x128xf32>
    %cst = arith.constant dense<0.000000e+00> : vector<128x128xf32>
    %6 = tpu.matmul %4, %5, %cst {dimension_numbers = #tpu.dot_dimension_numbers<[1], [0], [0], [1], [0, 0, 1, 1], [], []>} : vector<128x128xf32>, vector<128x128xf32>, vector<128x128xf32> -> vector<128x128xf32>
    %7 = arith.addf %3, %6 : vector<128x128xf32>
    %c0_6 = arith.constant 0 : index
    %c0_7 = arith.constant 0 : index
    %8 = vector.load %arg7[%c0_6, %c0_7] : memref<128x128xf32, #tpu.memory_space<vmem>>, vector<128x128xf32>
    tpu.vector_store %arg7[%c0_6, %c0_7], %7 {strides = array<i32>} : memref<128x128xf32, #tpu.memory_space<vmem>>, vector<128x128xf32>,
    %c0_i32_8 = arith.constant 0 : i32
    %9 = arith.cmpi eq, %arg2, %c0_i32_8 : i32
    %10 = arith.extui %9 : i1 to i32
    %c0_i32_9 = arith.constant 0 : i32
    %11 = arith.cmpi ne, %10, %c0_i32_9 : i32
    scf.if %11 {
      %c0_10 = arith.constant 0 : index
      %c0_11 = arith.constant 0 : index
      %12 = vector.load %arg7[%c0_10, %c0_11] : memref<128x128xf32, #tpu.memory_space<vmem>>, vector<128x128xf32>
      %c0_12 = arith.constant 0 : index
      %c0_13 = arith.constant 0 : index
      %13 = vector.load %arg5[%c0_12, %c0_13] : memref<1x128xf32, #tpu.memory_space<vmem>>, vector<1x128xf32>
      %14 = vector.broadcast %13 : vector<1x128xf32> to vector<128x128xf32>
      %15 = arith.addf %12, %14 : vector<128x128xf32>
      %c0_14 = arith.constant 0 : index
      %c0_15 = arith.constant 0 : index
      %16 = vector.load %arg6[%c0_14, %c0_15] : memref<128x128xf32, #tpu.memory_space<vmem>>, vector<128x128xf32>
      tpu.vector_store %arg6[%c0_14, %c0_15], %15 {strides = array<i32>} : memref<128x128xf32, #tpu.memory_space<vmem>>, vector<128x128xf32>,
    } else {
    }
    return
  }
  func.func @transform_0(%arg0: i32, %arg1: i32, %arg2: i32) -> (i32, i32) {
    %c0_i32 = arith.constant 0 : i32
    return %arg0, %arg2 : i32, i32
  }
  func.func @transform_1(%arg0: i32, %arg1: i32, %arg2: i32) -> (i32, i32) {
    %c0_i32 = arith.constant 0 : i32
    return %arg2, %arg1 : i32, i32
  }
  func.func @transform_2(%arg0: i32, %arg1: i32, %arg2: i32) -> (i32, i32) {
    %c0_i32 = arith.constant 0 : i32
    %c0_i32_0 = arith.constant 0 : i32
    return %c0_i32, %arg1 : i32, i32
  }
  func.func @transform_3(%arg0: i32, %arg1: i32, %arg2: i32) -> (i32, i32) {
    %c0_i32 = arith.constant 0 : i32
    return %arg0, %arg1 : i32, i32
  }
}

module attributes {stable_mosaic.version = 11 : i64} {
  func.func @_yolo_decode_kernel(%arg0: i32, %arg1: memref<8x384xf32, #tpu.memory_space<vmem>>, %arg2: memref<8x384xf32, #tpu.memory_space<vmem>>) attributes {dimension_semantics = [#tpu.dimension_semantics<parallel>], iteration_bounds = array<i64: 1>, scalar_prefetch = 0 : i64, scratch_operands = 0 : i64, tpu.core_type = #tpu.core_type<tc>, window_params = [{transform_indices = @transform_0, window_bounds = array<i64: 8, 384>}, {transform_indices = @transform_1, window_bounds = array<i64: 8, 384>}]} {
    %c0 = arith.constant 0 : index
    %c0_0 = arith.constant 0 : index
    %0 = vector.load %arg1[%c0, %c0_0] : memref<8x384xf32, #tpu.memory_space<vmem>>, vector<8x384xf32>
    %1 = tpu.iota {dimensions = array<i32: 0>} : vector<8x384xi32>
    %2 = tpu.iota {dimensions = array<i32: 1>} : vector<8x384xi32>
    %c384_i32 = arith.constant 384 : i32
    %3 = arith.muli %arg0, %c384_i32 : i32
    %4 = vector.broadcast %3 : i32 to vector<8x384xi32>
    %5 = arith.addi %2, %4 : vector<8x384xi32>
    %6 = arith.sitofp %5 : vector<8x384xi32> to vector<8x384xf32>
    %cst = arith.constant 1.920000e+02 : f32
    %7 = vector.broadcast %cst : f32 to vector<8x384xf32>
    %8 = arith.divf %6, %7 : vector<8x384xf32>
    %9 = math.floor %8 : vector<8x384xf32>
    %cst_1 = arith.constant 1.920000e+02 : f32
    %10 = vector.broadcast %cst_1 : f32 to vector<8x384xf32>
    %11 = arith.mulf %9, %10 : vector<8x384xf32>
    %12 = arith.subf %6, %11 : vector<8x384xf32>
    %cst_2 = arith.constant 3.000000e+00 : f32
    %13 = vector.broadcast %cst_2 : f32 to vector<8x384xf32>
    %14 = arith.divf %12, %13 : vector<8x384xf32>
    %15 = math.floor %14 : vector<8x384xf32>
    %cst_3 = arith.constant 3.000000e+00 : f32
    %16 = vector.broadcast %cst_3 : f32 to vector<8x384xf32>
    %17 = arith.mulf %15, %16 : vector<8x384xf32>
    %18 = arith.subf %12, %17 : vector<8x384xf32>
    %cst_4 = arith.constant 8.000000e+00 : f32
    %19 = vector.broadcast %cst_4 : f32 to vector<8x384xf32>
    %20 = arith.divf %15, %19 : vector<8x384xf32>
    %21 = math.floor %20 : vector<8x384xf32>
    %cst_5 = arith.constant 8.000000e+00 : f32
    %22 = vector.broadcast %cst_5 : f32 to vector<8x384xf32>
    %23 = arith.mulf %21, %22 : vector<8x384xf32>
    %24 = arith.subf %15, %23 : vector<8x384xf32>
    %cst_6 = arith.constant 1.000000e+00 : f32
    %25 = vector.broadcast %cst_6 : f32 to vector<8x384xf32>
    %cst_7 = arith.constant 1.500000e+00 : f32
    %26 = vector.broadcast %cst_7 : f32 to vector<8x384xf32>
    %cst_8 = arith.constant 1.000000e+00 : f32
    %27 = vector.broadcast %cst_8 : f32 to vector<8x384xf32>
    %28 = arith.subf %18, %27 : vector<8x384xf32>
    %29 = math.absf %28 : vector<8x384xf32>
    %cst_9 = arith.constant 5.000000e-01 : f32
    %30 = vector.broadcast %cst_9 : f32 to vector<8x384xf32>
    %31 = arith.cmpf olt, %29, %30 : vector<8x384xf32>
    %cst_10 = arith.constant 2.000000e+00 : f32
    %32 = vector.broadcast %cst_10 : f32 to vector<8x384xf32>
    %33 = arith.select %31, %32, %25 : vector<8x384xi1>, vector<8x384xf32>
    %cst_11 = arith.constant 2.500000e+00 : f32
    %34 = vector.broadcast %cst_11 : f32 to vector<8x384xf32>
    %35 = arith.select %31, %34, %26 : vector<8x384xi1>, vector<8x384xf32>
    %cst_12 = arith.constant 2.000000e+00 : f32
    %36 = vector.broadcast %cst_12 : f32 to vector<8x384xf32>
    %37 = arith.subf %18, %36 : vector<8x384xf32>
    %38 = math.absf %37 : vector<8x384xf32>
    %cst_13 = arith.constant 5.000000e-01 : f32
    %39 = vector.broadcast %cst_13 : f32 to vector<8x384xf32>
    %40 = arith.cmpf olt, %38, %39 : vector<8x384xf32>
    %cst_14 = arith.constant 3.000000e+00 : f32
    %41 = vector.broadcast %cst_14 : f32 to vector<8x384xf32>
    %42 = arith.select %40, %41, %33 : vector<8x384xi1>, vector<8x384xf32>
    %cst_15 = arith.constant 3.500000e+00 : f32
    %43 = vector.broadcast %cst_15 : f32 to vector<8x384xf32>
    %44 = arith.select %40, %43, %35 : vector<8x384xi1>, vector<8x384xf32>
    %c0_i32 = arith.constant 0 : i32
    %45 = vector.broadcast %c0_i32 : i32 to vector<8x384xi32>
    %46 = arith.cmpi eq, %1, %45 : vector<8x384xi32>
    %c1_i32 = arith.constant 1 : i32
    %47 = vector.broadcast %c1_i32 : i32 to vector<8x384xi32>
    %48 = arith.cmpi eq, %1, %47 : vector<8x384xi32>
    %cst_16 = arith.constant 0.000000e+00 : f32
    %49 = vector.broadcast %cst_16 : f32 to vector<8x384xf32>
    %50 = arith.select %48, %21, %49 : vector<8x384xi1>, vector<8x384xf32>
    %51 = arith.select %46, %24, %50 : vector<8x384xi1>, vector<8x384xf32>
    %c2_i32 = arith.constant 2 : i32
    %52 = vector.broadcast %c2_i32 : i32 to vector<8x384xi32>
    %53 = arith.cmpi eq, %1, %52 : vector<8x384xi32>
    %54 = arith.select %53, %42, %44 : vector<8x384xi1>, vector<8x384xf32>
    %c2_i32_17 = arith.constant 2 : i32
    %55 = vector.broadcast %c2_i32_17 : i32 to vector<8x384xi32>
    %56 = arith.cmpi eq, %1, %55 : vector<8x384xi32>
    %c3_i32 = arith.constant 3 : i32
    %57 = vector.broadcast %c3_i32 : i32 to vector<8x384xi32>
    %58 = arith.cmpi eq, %1, %57 : vector<8x384xi32>
    %59 = arith.ori %56, %58 : vector<8x384xi1>
    %60 = math.absf %0 : vector<8x384xf32>
    %cst_18 = arith.constant 0.000000e+00 : f32
    %61 = vector.broadcast %cst_18 : f32 to vector<8x384xf32>
    %62 = arith.subf %61, %60 : vector<8x384xf32>
    %63 = math.exp %62 : vector<8x384xf32>
    %cst_19 = arith.constant 1.000000e+00 : f32
    %64 = vector.broadcast %cst_19 : f32 to vector<8x384xf32>
    %65 = arith.addf %64, %63 : vector<8x384xf32>
    %cst_20 = arith.constant 1.000000e+00 : f32
    %66 = vector.broadcast %cst_20 : f32 to vector<8x384xf32>
    %67 = arith.divf %66, %65 : vector<8x384xf32>
    %cst_21 = arith.constant 0.000000e+00 : f32
    %68 = vector.broadcast %cst_21 : f32 to vector<8x384xf32>
    %69 = arith.cmpf oge, %0, %68 : vector<8x384xf32>
    %70 = arith.mulf %63, %67 : vector<8x384xf32>
    %71 = arith.select %69, %67, %70 : vector<8x384xi1>, vector<8x384xf32>
    %cst_22 = arith.constant 0.000000e+00 : f32
    %72 = vector.broadcast %cst_22 : f32 to vector<8x384xf32>
    %73 = arith.cmpf oge, %0, %72 : vector<8x384xf32>
    %cst_23 = arith.constant 1.000000e+00 : f32
    %74 = vector.broadcast %cst_23 : f32 to vector<8x384xf32>
    %75 = arith.divf %74, %63 : vector<8x384xf32>
    %76 = arith.select %73, %75, %63 : vector<8x384xi1>, vector<8x384xf32>
    %77 = arith.mulf %76, %54 : vector<8x384xf32>
    %78 = arith.addf %71, %51 : vector<8x384xf32>
    %79 = arith.select %59, %77, %78 : vector<8x384xi1>, vector<8x384xf32>
    %c4_i32 = arith.constant 4 : i32
    %80 = vector.broadcast %c4_i32 : i32 to vector<8x384xi32>
    %81 = arith.cmpi slt, %1, %80 : vector<8x384xi32>
    %cst_24 = arith.constant 2.000000e+00 : f32
    %cst_25 = arith.constant 1.000000e+00 : f32
    %82 = vector.broadcast %cst_24 : f32 to vector<8x384xf32>
    %83 = vector.broadcast %cst_25 : f32 to vector<8x384xf32>
    %84 = arith.select %81, %82, %83 : vector<8x384xi1>, vector<8x384xf32>
    %85 = arith.mulf %79, %84 : vector<8x384xf32>
    %c0_26 = arith.constant 0 : index
    %c0_27 = arith.constant 0 : index
    %86 = vector.load %arg2[%c0_26, %c0_27] : memref<8x384xf32, #tpu.memory_space<vmem>>, vector<8x384xf32>
    tpu.vector_store %arg2[%c0_26, %c0_27], %85 {strides = array<i32>} : memref<8x384xf32, #tpu.memory_space<vmem>>, vector<8x384xf32>,
    return
  }
  func.func @transform_0(%arg0: i32) -> (i32, i32) {
    %c0_i32 = arith.constant 0 : i32
    %c0_i32_0 = arith.constant 0 : i32
    return %c0_i32, %arg0 : i32, i32
  }
  func.func @transform_1(%arg0: i32) -> (i32, i32) {
    %c0_i32 = arith.constant 0 : i32
    %c0_i32_0 = arith.constant 0 : i32
    return %c0_i32, %arg0 : i32, i32
  }
}

module attributes {stable_mosaic.version = 11 : i64} {
  func.func @_matmul_bias_act_kernel(%arg0: i32, %arg1: i32, %arg2: i32, %arg3: memref<32x128xf32, #tpu.memory_space<vmem>>, %arg4: memref<128x128xf32, #tpu.memory_space<vmem>>, %arg5: memref<1x128xf32, #tpu.memory_space<vmem>>, %arg6: memref<32x128xf32, #tpu.memory_space<vmem>>, %arg7: memref<32x128xf32, #tpu.memory_space<vmem>>) attributes {dimension_semantics = [#tpu.dimension_semantics<parallel>, #tpu.dimension_semantics<parallel>, #tpu.dimension_semantics<arbitrary>], iteration_bounds = array<i64: 1, 1, 1>, scalar_prefetch = 0 : i64, scratch_operands = 1 : i64, tpu.core_type = #tpu.core_type<tc>, window_params = [{transform_indices = @transform_0, window_bounds = array<i64: 32, 128>}, {transform_indices = @transform_1, window_bounds = array<i64: 128, 128>}, {transform_indices = @transform_2, window_bounds = array<i64: 1, 128>}, {transform_indices = @transform_3, window_bounds = array<i64: 32, 128>}]} {
    %c0_i32 = arith.constant 0 : i32
    %0 = arith.cmpi eq, %arg2, %c0_i32 : i32
    %1 = arith.extui %0 : i1 to i32
    %c0_i32_0 = arith.constant 0 : i32
    %2 = arith.cmpi ne, %1, %c0_i32_0 : i32
    scf.if %2 {
      %cst_10 = arith.constant 0.000000e+00 : f32
      %12 = vector.broadcast %cst_10 : f32 to vector<32x128xf32>
      %c0_11 = arith.constant 0 : index
      %c0_12 = arith.constant 0 : index
      %13 = vector.load %arg7[%c0_11, %c0_12] : memref<32x128xf32, #tpu.memory_space<vmem>>, vector<32x128xf32>
      tpu.vector_store %arg7[%c0_11, %c0_12], %12 {strides = array<i32>} : memref<32x128xf32, #tpu.memory_space<vmem>>, vector<32x128xf32>,
    } else {
    }
    %c0 = arith.constant 0 : index
    %c0_1 = arith.constant 0 : index
    %3 = vector.load %arg7[%c0, %c0_1] : memref<32x128xf32, #tpu.memory_space<vmem>>, vector<32x128xf32>
    %c0_2 = arith.constant 0 : index
    %c0_3 = arith.constant 0 : index
    %4 = vector.load %arg3[%c0_2, %c0_3] : memref<32x128xf32, #tpu.memory_space<vmem>>, vector<32x128xf32>
    %c0_4 = arith.constant 0 : index
    %c0_5 = arith.constant 0 : index
    %5 = vector.load %arg4[%c0_4, %c0_5] : memref<128x128xf32, #tpu.memory_space<vmem>>, vector<128x128xf32>
    %cst = arith.constant dense<0.000000e+00> : vector<32x128xf32>
    %6 = tpu.matmul %4, %5, %cst {dimension_numbers = #tpu.dot_dimension_numbers<[1], [0], [0], [1], [0, 0, 1, 1], [], []>} : vector<32x128xf32>, vector<128x128xf32>, vector<32x128xf32> -> vector<32x128xf32>
    %7 = arith.addf %3, %6 : vector<32x128xf32>
    %c0_6 = arith.constant 0 : index
    %c0_7 = arith.constant 0 : index
    %8 = vector.load %arg7[%c0_6, %c0_7] : memref<32x128xf32, #tpu.memory_space<vmem>>, vector<32x128xf32>
    tpu.vector_store %arg7[%c0_6, %c0_7], %7 {strides = array<i32>} : memref<32x128xf32, #tpu.memory_space<vmem>>, vector<32x128xf32>,
    %c0_i32_8 = arith.constant 0 : i32
    %9 = arith.cmpi eq, %arg2, %c0_i32_8 : i32
    %10 = arith.extui %9 : i1 to i32
    %c0_i32_9 = arith.constant 0 : i32
    %11 = arith.cmpi ne, %10, %c0_i32_9 : i32
    scf.if %11 {
      %c0_10 = arith.constant 0 : index
      %c0_11 = arith.constant 0 : index
      %12 = vector.load %arg7[%c0_10, %c0_11] : memref<32x128xf32, #tpu.memory_space<vmem>>, vector<32x128xf32>
      %c0_12 = arith.constant 0 : index
      %c0_13 = arith.constant 0 : index
      %13 = vector.load %arg5[%c0_12, %c0_13] : memref<1x128xf32, #tpu.memory_space<vmem>>, vector<1x128xf32>
      %14 = vector.broadcast %13 : vector<1x128xf32> to vector<32x128xf32>
      %15 = arith.addf %12, %14 : vector<32x128xf32>
      %c0_14 = arith.constant 0 : index
      %c0_15 = arith.constant 0 : index
      %16 = vector.load %arg6[%c0_14, %c0_15] : memref<32x128xf32, #tpu.memory_space<vmem>>, vector<32x128xf32>
      tpu.vector_store %arg6[%c0_14, %c0_15], %15 {strides = array<i32>} : memref<32x128xf32, #tpu.memory_space<vmem>>, vector<32x128xf32>,
    } else {
    }
    return
  }
  func.func @transform_0(%arg0: i32, %arg1: i32, %arg2: i32) -> (i32, i32) {
    %c0_i32 = arith.constant 0 : i32
    return %arg0, %arg2 : i32, i32
  }
  func.func @transform_1(%arg0: i32, %arg1: i32, %arg2: i32) -> (i32, i32) {
    %c0_i32 = arith.constant 0 : i32
    return %arg2, %arg1 : i32, i32
  }
  func.func @transform_2(%arg0: i32, %arg1: i32, %arg2: i32) -> (i32, i32) {
    %c0_i32 = arith.constant 0 : i32
    %c0_i32_0 = arith.constant 0 : i32
    return %c0_i32, %arg1 : i32, i32
  }
  func.func @transform_3(%arg0: i32, %arg1: i32, %arg2: i32) -> (i32, i32) {
    %c0_i32 = arith.constant 0 : i32
    return %arg0, %arg1 : i32, i32
  }
}

module attributes {stable_mosaic.version = 11 : i64} {
  func.func @_yolo_decode_kernel(%arg0: i32, %arg1: memref<8x128xf32, #tpu.memory_space<vmem>>, %arg2: memref<8x128xf32, #tpu.memory_space<vmem>>) attributes {dimension_semantics = [#tpu.dimension_semantics<parallel>], iteration_bounds = array<i64: 1>, scalar_prefetch = 0 : i64, scratch_operands = 0 : i64, tpu.core_type = #tpu.core_type<tc>, window_params = [{transform_indices = @transform_0, window_bounds = array<i64: 8, 128>}, {transform_indices = @transform_1, window_bounds = array<i64: 8, 128>}]} {
    %c0 = arith.constant 0 : index
    %c0_0 = arith.constant 0 : index
    %0 = vector.load %arg1[%c0, %c0_0] : memref<8x128xf32, #tpu.memory_space<vmem>>, vector<8x128xf32>
    %1 = tpu.iota {dimensions = array<i32: 0>} : vector<8x128xi32>
    %2 = tpu.iota {dimensions = array<i32: 1>} : vector<8x128xi32>
    %c128_i32 = arith.constant 128 : i32
    %3 = arith.muli %arg0, %c128_i32 : i32
    %4 = vector.broadcast %3 : i32 to vector<8x128xi32>
    %5 = arith.addi %2, %4 : vector<8x128xi32>
    %6 = arith.sitofp %5 : vector<8x128xi32> to vector<8x128xf32>
    %cst = arith.constant 4.800000e+01 : f32
    %7 = vector.broadcast %cst : f32 to vector<8x128xf32>
    %8 = arith.divf %6, %7 : vector<8x128xf32>
    %9 = math.floor %8 : vector<8x128xf32>
    %cst_1 = arith.constant 4.800000e+01 : f32
    %10 = vector.broadcast %cst_1 : f32 to vector<8x128xf32>
    %11 = arith.mulf %9, %10 : vector<8x128xf32>
    %12 = arith.subf %6, %11 : vector<8x128xf32>
    %cst_2 = arith.constant 3.000000e+00 : f32
    %13 = vector.broadcast %cst_2 : f32 to vector<8x128xf32>
    %14 = arith.divf %12, %13 : vector<8x128xf32>
    %15 = math.floor %14 : vector<8x128xf32>
    %cst_3 = arith.constant 3.000000e+00 : f32
    %16 = vector.broadcast %cst_3 : f32 to vector<8x128xf32>
    %17 = arith.mulf %15, %16 : vector<8x128xf32>
    %18 = arith.subf %12, %17 : vector<8x128xf32>
    %cst_4 = arith.constant 4.000000e+00 : f32
    %19 = vector.broadcast %cst_4 : f32 to vector<8x128xf32>
    %20 = arith.divf %15, %19 : vector<8x128xf32>
    %21 = math.floor %20 : vector<8x128xf32>
    %cst_5 = arith.constant 4.000000e+00 : f32
    %22 = vector.broadcast %cst_5 : f32 to vector<8x128xf32>
    %23 = arith.mulf %21, %22 : vector<8x128xf32>
    %24 = arith.subf %15, %23 : vector<8x128xf32>
    %cst_6 = arith.constant 2.000000e+00 : f32
    %25 = vector.broadcast %cst_6 : f32 to vector<8x128xf32>
    %cst_7 = arith.constant 2.250000e+00 : f32
    %26 = vector.broadcast %cst_7 : f32 to vector<8x128xf32>
    %cst_8 = arith.constant 1.000000e+00 : f32
    %27 = vector.broadcast %cst_8 : f32 to vector<8x128xf32>
    %28 = arith.subf %18, %27 : vector<8x128xf32>
    %29 = math.absf %28 : vector<8x128xf32>
    %cst_9 = arith.constant 5.000000e-01 : f32
    %30 = vector.broadcast %cst_9 : f32 to vector<8x128xf32>
    %31 = arith.cmpf olt, %29, %30 : vector<8x128xf32>
    %cst_10 = arith.constant 2.500000e+00 : f32
    %32 = vector.broadcast %cst_10 : f32 to vector<8x128xf32>
    %33 = arith.select %31, %32, %25 : vector<8x128xi1>, vector<8x128xf32>
    %cst_11 = arith.constant 2.750000e+00 : f32
    %34 = vector.broadcast %cst_11 : f32 to vector<8x128xf32>
    %35 = arith.select %31, %34, %26 : vector<8x128xi1>, vector<8x128xf32>
    %cst_12 = arith.constant 2.000000e+00 : f32
    %36 = vector.broadcast %cst_12 : f32 to vector<8x128xf32>
    %37 = arith.subf %18, %36 : vector<8x128xf32>
    %38 = math.absf %37 : vector<8x128xf32>
    %cst_13 = arith.constant 5.000000e-01 : f32
    %39 = vector.broadcast %cst_13 : f32 to vector<8x128xf32>
    %40 = arith.cmpf olt, %38, %39 : vector<8x128xf32>
    %cst_14 = arith.constant 3.000000e+00 : f32
    %41 = vector.broadcast %cst_14 : f32 to vector<8x128xf32>
    %42 = arith.select %40, %41, %33 : vector<8x128xi1>, vector<8x128xf32>
    %cst_15 = arith.constant 3.250000e+00 : f32
    %43 = vector.broadcast %cst_15 : f32 to vector<8x128xf32>
    %44 = arith.select %40, %43, %35 : vector<8x128xi1>, vector<8x128xf32>
    %c0_i32 = arith.constant 0 : i32
    %45 = vector.broadcast %c0_i32 : i32 to vector<8x128xi32>
    %46 = arith.cmpi eq, %1, %45 : vector<8x128xi32>
    %c1_i32 = arith.constant 1 : i32
    %47 = vector.broadcast %c1_i32 : i32 to vector<8x128xi32>
    %48 = arith.cmpi eq, %1, %47 : vector<8x128xi32>
    %cst_16 = arith.constant 0.000000e+00 : f32
    %49 = vector.broadcast %cst_16 : f32 to vector<8x128xf32>
    %50 = arith.select %48, %21, %49 : vector<8x128xi1>, vector<8x128xf32>
    %51 = arith.select %46, %24, %50 : vector<8x128xi1>, vector<8x128xf32>
    %c2_i32 = arith.constant 2 : i32
    %52 = vector.broadcast %c2_i32 : i32 to vector<8x128xi32>
    %53 = arith.cmpi eq, %1, %52 : vector<8x128xi32>
    %54 = arith.select %53, %42, %44 : vector<8x128xi1>, vector<8x128xf32>
    %c2_i32_17 = arith.constant 2 : i32
    %55 = vector.broadcast %c2_i32_17 : i32 to vector<8x128xi32>
    %56 = arith.cmpi eq, %1, %55 : vector<8x128xi32>
    %c3_i32 = arith.constant 3 : i32
    %57 = vector.broadcast %c3_i32 : i32 to vector<8x128xi32>
    %58 = arith.cmpi eq, %1, %57 : vector<8x128xi32>
    %59 = arith.ori %56, %58 : vector<8x128xi1>
    %60 = math.absf %0 : vector<8x128xf32>
    %cst_18 = arith.constant 0.000000e+00 : f32
    %61 = vector.broadcast %cst_18 : f32 to vector<8x128xf32>
    %62 = arith.subf %61, %60 : vector<8x128xf32>
    %63 = math.exp %62 : vector<8x128xf32>
    %cst_19 = arith.constant 1.000000e+00 : f32
    %64 = vector.broadcast %cst_19 : f32 to vector<8x128xf32>
    %65 = arith.addf %64, %63 : vector<8x128xf32>
    %cst_20 = arith.constant 1.000000e+00 : f32
    %66 = vector.broadcast %cst_20 : f32 to vector<8x128xf32>
    %67 = arith.divf %66, %65 : vector<8x128xf32>
    %cst_21 = arith.constant 0.000000e+00 : f32
    %68 = vector.broadcast %cst_21 : f32 to vector<8x128xf32>
    %69 = arith.cmpf oge, %0, %68 : vector<8x128xf32>
    %70 = arith.mulf %63, %67 : vector<8x128xf32>
    %71 = arith.select %69, %67, %70 : vector<8x128xi1>, vector<8x128xf32>
    %cst_22 = arith.constant 0.000000e+00 : f32
    %72 = vector.broadcast %cst_22 : f32 to vector<8x128xf32>
    %73 = arith.cmpf oge, %0, %72 : vector<8x128xf32>
    %cst_23 = arith.constant 1.000000e+00 : f32
    %74 = vector.broadcast %cst_23 : f32 to vector<8x128xf32>
    %75 = arith.divf %74, %63 : vector<8x128xf32>
    %76 = arith.select %73, %75, %63 : vector<8x128xi1>, vector<8x128xf32>
    %77 = arith.mulf %76, %54 : vector<8x128xf32>
    %78 = arith.addf %71, %51 : vector<8x128xf32>
    %79 = arith.select %59, %77, %78 : vector<8x128xi1>, vector<8x128xf32>
    %c4_i32 = arith.constant 4 : i32
    %80 = vector.broadcast %c4_i32 : i32 to vector<8x128xi32>
    %81 = arith.cmpi slt, %1, %80 : vector<8x128xi32>
    %cst_24 = arith.constant 4.000000e+00 : f32
    %cst_25 = arith.constant 1.000000e+00 : f32
    %82 = vector.broadcast %cst_24 : f32 to vector<8x128xf32>
    %83 = vector.broadcast %cst_25 : f32 to vector<8x128xf32>
    %84 = arith.select %81, %82, %83 : vector<8x128xi1>, vector<8x128xf32>
    %85 = arith.mulf %79, %84 : vector<8x128xf32>
    %c0_26 = arith.constant 0 : index
    %c0_27 = arith.constant 0 : index
    %86 = vector.load %arg2[%c0_26, %c0_27] : memref<8x128xf32, #tpu.memory_space<vmem>>, vector<8x128xf32>
    tpu.vector_store %arg2[%c0_26, %c0_27], %85 {strides = array<i32>} : memref<8x128xf32, #tpu.memory_space<vmem>>, vector<8x128xf32>,
    return
  }
  func.func @transform_0(%arg0: i32) -> (i32, i32) {
    %c0_i32 = arith.constant 0 : i32
    %c0_i32_0 = arith.constant 0 : i32
    return %c0_i32, %arg0 : i32, i32
  }
  func.func @transform_1(%arg0: i32) -> (i32, i32) {
    %c0_i32 = arith.constant 0 : i32
    %c0_i32_0 = arith.constant 0 : i32
    return %c0_i32, %arg0 : i32, i32
  }
}

</mosaic_0001>

<llo_original>
// kernel: _lambda_.10
$region0: #{_lambda_.10}
  #allocation0 [shape = 'u32[]', space=smem, size = 0x4, offset = 0x4, fixed_abs, tag = 'smem constant byte address 0x4 - core index']
  #allocation1 [shape = 'u32[72,128]{1,0:T(1,128)}', space=vmem, size = 0x9000, scoped, tag = 'internal scratch']
  #allocation2 [shape = 'f32[256,128]{1,0:T(8,128)}', space=vmem, size = 0x20000, scoped, tag = 'scratch operand']
  %s0 = inlined_call_operand.vmem [shape: f32[512,128], index: 0, kind: input, shape index: {}]
  %s1 = inlined_call_operand.vmem [shape: f32[128,128], index: 1, kind: input, shape index: {}]
  %s2 = inlined_call_operand.vmem [shape: f32[1,128], index: 2, kind: input, shape index: {}]
  %s3 = inlined_call_operand.vmem [shape: f32[512,128], index: 3, kind: output, shape index: {}]
  %s4 = sld [smem:[#allocation0]]
  $region53: #{_lambda_.10} parent=0
    _
  %s6 = ssub.s32 1, %s4
  %s7 = scalar_select 0, %s6, %s4
  loop: start=0, step=1, limit=4
  $region2: #{_lambda_.10} parent=0 // loop_pre_header
    _
  $region3: #{_lambda_.10} parent=0 // loop_header
    %s9 = sphi 0, %s13
    %p10 = scmp.ge.s32.totalorder %s9, 4
    %s16 = sphi 0, %s35
    %s17 = sphi 0, %s31
    %s18 = sphi 0, %s27
    %s19 = sphi 0, %s16
    %s20 = sphi 0, %s17
    %s21 = sphi 0, %s18
    %s22 = sphi 0, %s19
    %s23 = sphi 0, %s20
    %s24 = sphi 0, %s21
    %s40 = sphi 0, %s42
    %s43 = sphi 0, %s40
    %s44 = sphi 0, %s43
    %s60 = sphi 0, %s44
    %s68 = sphi 0, %s70
    %s71 = sphi 0, %s68
    %s72 = sphi 0, %s71
    %s88 = sphi 0, %s72
    %s94 = sphi 0, %s96
    %s97 = sphi 0, %s94
    %s98 = sphi 0, %s97
    %s114 = sphi 0, %s98
    %s122 = sphi 0, %s124
    %s125 = sphi 0, %s122
    %s126 = sphi 0, %s125
    %s142 = sphi 0, %s126
  $region4: #{_lambda_.10} parent=0 // loop_header_branch
    %12 = sbr.rel (%p10) target = $region8
  $region5: #{_lambda_.10} parent=0 // loop_body
    %s14 = ssub.s32 %s9, 1
    %s15 = ssub.s32 %s9, 2
    %s25 = sadd.s32 1, %s18
    %p26 = scmp.ge.s32.totalorder %s25, 1
    %s27 = scalar_select %p26, 0, %s25
    %s28 = sadd.s32 1, %s17
    %s29 = scalar_select %p26, %s28, %s17
    %p30 = scmp.ge.s32.totalorder %s29, 1
    %s31 = scalar_select %p30, 0, %s29
    %s32 = sadd.s32 1, %s16
    %s33 = scalar_select %p30, %s32, %s16
    %p34 = scmp.ge.s32.totalorder %s33, 2
    %s35 = scalar_select %p34, 0, %s33
    %s36 = ssub.s32 %s16, %s35
    %s37 = ssub.s32 %s18, %s27
    %s38 = sor.u32 %s36, %s37
    %p39 = scmp.eq.s32.totalorder %s38, 0
    %s41 = sadd.s32 %s40, 1
    %s42 = scalar_select %p39, %s40, %s41
    %p45 = pneg %p39
    %p46 = scmp.eq.s32.totalorder %s9, 1
    %p47 = por %p45, %p46
    %p48 = scmp.ne.s32.totalorder %s40, %s43
    %p49 = scmp.eq.s32.totalorder %s9, 0
    %p50 = por %p48, %p49
    %p51 = scmp.ne.s32.totalorder %s40, %s43
    %p52 = scmp.eq.s32.totalorder %s14, 1
    %p53 = por %p51, %p52
    %p54 = scmp.ne.s32.totalorder %s43, %s44
    %p55 = scmp.eq.s32.totalorder %s14, 0
    %p56 = por %p54, %p55
    %p57 = scmp.ne.s32.totalorder %s43, %s44
    %p58 = scmp.eq.s32.totalorder %s15, 1
    %p59 = por %p57, %p58
    %p61 = scmp.ne.s32.totalorder %s44, %s60
    %p62 = scmp.eq.s32.totalorder %s15, 0
    %p63 = por %p61, %p62
    %s64 = ssub.s32 %s18, %s27
    %s65 = ssub.s32 %s17, %s31
    %s66 = sor.u32 %s64, %s65
    %p67 = scmp.eq.s32.totalorder %s66, 0
    %s69 = sadd.s32 %s68, 1
    %s70 = scalar_select %p67, %s68, %s69
    %p73 = pneg %p67
    %p74 = scmp.eq.s32.totalorder %s9, 1
    %p75 = por %p73, %p74
    %p76 = scmp.ne.s32.totalorder %s68, %s71
    %p77 = scmp.eq.s32.totalorder %s9, 0
    %p78 = por %p76, %p77
    %p79 = scmp.ne.s32.totalorder %s68, %s71
    %p80 = scmp.eq.s32.totalorder %s14, 1
    %p81 = por %p79, %p80
    %p82 = scmp.ne.s32.totalorder %s71, %s72
    %p83 = scmp.eq.s32.totalorder %s14, 0
    %p84 = por %p82, %p83
    %p85 = scmp.ne.s32.totalorder %s71, %s72
    %p86 = scmp.eq.s32.totalorder %s15, 1
    %p87 = por %p85, %p86
    %p89 = scmp.ne.s32.totalorder %s72, %s88
    %p90 = scmp.eq.s32.totalorder %s15, 0
    %p91 = por %p89, %p90
    %s92 = ssub.s32 %s17, %s31
    %p93 = scmp.eq.s32.totalorder %s92, 0
    %s95 = sadd.s32 %s94, 1
    %s96 = scalar_select %p93, %s94, %s95
    %p99 = pneg %p93
    %p100 = scmp.eq.s32.totalorder %s9, 1
    %p101 = por %p99, %p100
    %p102 = scmp.ne.s32.totalorder %s94, %s97
    %p103 = scmp.eq.s32.totalorder %s9, 0
    %p104 = por %p102, %p103
    %p105 = scmp.ne.s32.totalorder %s94, %s97
    %p106 = scmp.eq.s32.totalorder %s14, 1
    %p107 = por %p105, %p106
    %p108 = scmp.ne.s32.totalorder %s97, %s98
    %p109 = scmp.eq.s32.totalorder %s14, 0
    %p110 = por %p108, %p109
    %p111 = scmp.ne.s32.totalorder %s97, %s98
    %p112 = scmp.eq.s32.totalorder %s15, 1
    %p113 = por %p111, %p112
    %p115 = scmp.ne.s32.totalorder %s98, %s114
    %p116 = scmp.eq.s32.totalorder %s15, 0
    %p117 = por %p115, %p116
    %s118 = ssub.s32 %s16, %s35
    %s119 = ssub.s32 %s17, %s31
    %s120 = sor.u32 %s118, %s119
    %p121 = scmp.eq.s32.totalorder %s120, 0
    %s123 = sadd.s32 %s122, 1
    %s124 = scalar_select %p121, %s122, %s123
    %p127 = pneg %p121
    %p128 = scmp.eq.s32.totalorder %s9, 1
    %p129 = por %p127, %p128
    %p130 = scmp.ne.s32.totalorder %s122, %s125
    %p131 = scmp.eq.s32.totalorder %s9, 0
    %p132 = por %p130, %p131
    %p133 = scmp.ne.s32.totalorder %s122, %s125
    %p134 = scmp.eq.s32.totalorder %s14, 1
    %p135 = por %p133, %p134
    %p136 = scmp.ne.s32.totalorder %s125, %s126
    %p137 = scmp.eq.s32.totalorder %s14, 0
    %p138 = por %p136, %p137
    %p139 = scmp.ne.s32.totalorder %s125, %s126
    %p140 = scmp.eq.s32.totalorder %s15, 1
    %p141 = por %p139, %p140
    %p143 = scmp.ne.s32.totalorder %s126, %s142
    %p144 = scmp.eq.s32.totalorder %s15, 0
    %p145 = por %p143, %p144
    %p146 = scmp.le.s32.totalorder 1, %s9
    %p147 = scmp.lt.s32.totalorder %s9, 3
    %p148 = pnand %p146, %p147
    %p149 = pneg %p148
    // Predicated region
    $region9: #{_lambda_.10} parent=5 // pred_check
      _
    $region10: #{_lambda_.10} parent=5 // pred_check_branch
      %151 = sbr.rel (%p148) target = $region12
    $region11: #{_lambda_.10} parent=5 // pred_region
      %s152 = ssub.s32 %s9, 1
      // Predicated region
      $region13: #{_lambda_.10} parent=11 // pred_check
        %p153 = pneg %p84
      $region14: #{_lambda_.10} parent=11 // pred_check_branch
        %155 = sbr.rel (%p153) target = $region16
      $region15: #{_lambda_.10} parent=11 // pred_region
        %s156 = smul.u32 16, %s21
        %p157 = scmp.lt.s32.totalorder %s156, 15
        %s158 = scalar_select %p157, %s156, 15
        %p159 = scmp.lt.s32.totalorder %s20, 0
        %s160 = scalar_select %p159, %s20, 0
        %s161 = sadd.s32 %s160, %s158
        %s162 = smul.addr %s161, 8
        %s163 = scalar_lea.vmem %s1, %s162
        %s164 = smul.u32 16, %s21
      $region16: #{_lambda_.10} parent=11 // pred_fallthru
        _
      // Predicated region
      $region17: #{_lambda_.10} parent=11 // pred_check
        %p165 = pneg %p110
      $region18: #{_lambda_.10} parent=11 // pred_check_branch
        %167 = sbr.rel (%p165) target = $region20
      $region19: #{_lambda_.10} parent=11 // pred_region
        %p168 = scmp.lt.s32.totalorder %s20, 0
        %s169 = scalar_select %p168, %s20, 0
        %s170 = scalar_lea.vmem %s2, %s169
      $region20: #{_lambda_.10} parent=11 // pred_fallthru
        _
    $region12: #{_lambda_.10} parent=5 // pred_fallthru
      _
    %p171 = scmp.lt.s32.totalorder %s9, 2
    // Predicated region
    $region21: #{_lambda_.10} parent=5 // pred_check
      %p172 = pneg %p171
    $region22: #{_lambda_.10} parent=5 // pred_check_branch
      %174 = sbr.rel (%p172) target = $region24
    $region23: #{_lambda_.10} parent=5 // pred_region
      // Predicated region
      $region25: #{_lambda_.10} parent=23 // pred_check
        %p175 = pneg %p50
      $region26: #{_lambda_.10} parent=23 // pred_check_branch
        %177 = sbr.rel (%p175) target = $region28
      $region27: #{_lambda_.10} parent=23 // pred_region
        %s178 = smul.u32 32, %s16
        %p179 = scmp.lt.s32.totalorder %s178, 63
        %s180 = scalar_select %p179, %s178, 63
        %p181 = scmp.lt.s32.totalorder %s18, 0
        %s182 = scalar_select %p181, %s18, 0
        %s183 = sadd.s32 %s182, %s180
        %s184 = smul.addr %s183, 8
        %s185 = scalar_lea.vmem %s0, %s184
        %s186 = smul.u32 32, %s16
      $region28: #{_lambda_.10} parent=23 // pred_fallthru
        _
    $region24: #{_lambda_.10} parent=5 // pred_fallthru
      _
    %p187 = scmp.le.s32.totalorder 1, %s9
    %p188 = scmp.lt.s32.totalorder %s9, 3
    %p189 = pnand %p187, %p188
    %p190 = pneg %p189
    // Predicated region
    $region29: #{_lambda_.10} parent=5 // pred_check
      _
    $region30: #{_lambda_.10} parent=5 // pred_check_branch
      %192 = sbr.rel (%p189) target = $region32
    $region31: #{_lambda_.10} parent=5 // pred_region
      %s193 = ssub.s32 %s9, 1
      %s194 = smul.u32 32, %s19
      %p195 = scmp.lt.s32.totalorder %s194, 63
      %s196 = scalar_select %p195, %s194, 63
      %p197 = scmp.lt.s32.totalorder %s21, 0
      %s198 = scalar_select %p197, %s21, 0
      %s199 = sadd.s32 %s198, %s196
      %s200 = smul.addr %s199, 8
      %s201 = scalar_lea.vmem %s0, %s200
      %p202 = pneg %p56
      %p203 = pneg %p53
      %s204 = smul.u32 16, %s21
      %p205 = scmp.lt.s32.totalorder %s204, 15
      %s206 = scalar_select %p205, %s204, 15
      %p207 = scmp.lt.s32.totalorder %s20, 0
      %s208 = scalar_select %p207, %s20, 0
      %s209 = sadd.s32 %s208, %s206
      %s210 = smul.addr %s209, 8
      %s211 = scalar_lea.vmem %s1, %s210
      %p212 = pneg %p84
      %p213 = pneg %p81
      %p214 = scmp.lt.s32.totalorder %s20, 0
      %s215 = scalar_select %p214, %s20, 0
      %s216 = scalar_lea.vmem %s2, %s215
      %p217 = pneg %p110
      %p218 = pneg %p107
      %p219 = pneg %p138
      %p220 = pneg %p135
      %s221 = smul.u32 32, %s19
      %p222 = scmp.lt.s32.totalorder %s221, 63
      %s223 = scalar_select %p222, %s221, 63
      %p224 = scmp.lt.s32.totalorder %s20, 0
      %s225 = scalar_select %p224, %s20, 0
      %s226 = sadd.s32 %s225, %s223
      %s227 = smul.addr %s226, 8
      %s228 = scalar_lea.vmem %s3, %s227
      %s229 = smul.u32 32, %s19
      %p230 = scmp.lt.s32.totalorder %s229, 63
      %s231 = scalar_select %p230, %s229, 63
      %p232 = scmp.lt.s32.totalorder %s21, 0
      %s233 = scalar_select %p232, %s21, 0
      %s234 = sadd.s32 %s233, %s231
      %s235 = smul.addr %s234, 8
      %s236 = scalar_lea.vmem %s0, %s235
      %s237 = smul.u32 32, %s19
      %s238 = smul.u32 16, %s21
      %p239 = scmp.lt.s32.totalorder %s238, 15
      %s240 = scalar_select %p239, %s238, 15
      %p241 = scmp.lt.s32.totalorder %s20, 0
      %s242 = scalar_select %p241, %s20, 0
      %s243 = sadd.s32 %s242, %s240
      %s244 = smul.addr %s243, 8
      %s245 = scalar_lea.vmem %s1, %s244
      %s246 = smul.u32 16, %s21
      %p247 = scmp.lt.s32.totalorder %s20, 0
      %s248 = scalar_select %p247, %s20, 0
      %s249 = scalar_lea.vmem %s2, %s248
      %s250 = smul.u32 32, %s19
      %p251 = scmp.lt.s32.totalorder %s250, 63
      %s252 = scalar_select %p251, %s250, 63
      %p253 = scmp.lt.s32.totalorder %s20, 0
      %s254 = scalar_select %p253, %s20, 0
      %s255 = sadd.s32 %s254, %s252
      %s256 = smul.addr %s255, 8
      %s257 = scalar_lea.vmem %s3, %s256
      %s258 = smul.u32 32, %s19
      %p259 = scmp.eq.s32.totalorder %s21, 0
      // Predicated region
      $region33: #{_lambda_.10} parent=31 // pred_check
        %p260 = pneg %p259
      $region34: #{_lambda_.10} parent=31 // pred_check_branch
        %262 = sbr.rel (%p260) target = $region36
      $region35: #{_lambda_.10} parent=31 // pred_region
        %263 = vst [vmem:[#allocation2] sm:$0xff] 0.0
        %264 = vst [vmem:[#allocation2 + $0x8] sm:$0xff] 0.0
        %265 = vst [vmem:[#allocation2 + $0x10] sm:$0xff] 0.0
        %266 = vst [vmem:[#allocation2 + $0x18] sm:$0xff] 0.0
        %267 = vst [vmem:[#allocation2 + $0x20] sm:$0xff] 0.0
        %268 = vst [vmem:[#allocation2 + $0x28] sm:$0xff] 0.0
        %269 = vst [vmem:[#allocation2 + $0x30] sm:$0xff] 0.0
        %270 = vst [vmem:[#allocation2 + $0x38] sm:$0xff] 0.0
        %271 = vst [vmem:[#allocation2 + $0x40] sm:$0xff] 0.0
        %272 = vst [vmem:[#allocation2 + $0x48] sm:$0xff] 0.0
        %273 = vst [vmem:[#allocation2 + $0x50] sm:$0xff] 0.0
        %274 = vst [vmem:[#allocation2 + $0x58] sm:$0xff] 0.0
        %275 = vst [vmem:[#allocation2 + $0x60] sm:$0xff] 0.0
        %276 = vst [vmem:[#allocation2 + $0x68] sm:$0xff] 0.0
        %277 = vst [vmem:[#allocation2 + $0x70] sm:$0xff] 0.0
        %278 = vst [vmem:[#allocation2 + $0x78] sm:$0xff] 0.0
        %279 = vst [vmem:[#allocation2 + $0x80] sm:$0xff] 0.0
        %280 = vst [vmem:[#allocation2 + $0x88] sm:$0xff] 0.0
        %281 = vst [vmem:[#allocation2 + $0x90] sm:$0xff] 0.0
        %282 = vst [vmem:[#allocation2 + $0x98] sm:$0xff] 0.0
        %283 = vst [vmem:[#allocation2 + $0xa0] sm:$0xff] 0.0
        %284 = vst [vmem:[#allocation2 + $0xa8] sm:$0xff] 0.0
        %285 = vst [vmem:[#allocation2 + $0xb0] sm:$0xff] 0.0
        %286 = vst [vmem:[#allocation2 + $0xb8] sm:$0xff] 0.0
        %287 = vst [vmem:[#allocation2 + $0xc0] sm:$0xff] 0.0
        %288 = vst [vmem:[#allocation2 + $0xc8] sm:$0xff] 0.0
        %289 = vst [vmem:[#allocation2 + $0xd0] sm:$0xff] 0.0
        %290 = vst [vmem:[#allocation2 + $0xd8] sm:$0xff] 0.0
        %291 = vst [vmem:[#allocation2 + $0xe0] sm:$0xff] 0.0
        %292 = vst [vmem:[#allocation2 + $0xe8] sm:$0xff] 0.0
        %293 = vst [vmem:[#allocation2 + $0xf0] sm:$0xff] 0.0
        %294 = vst [vmem:[#allocation2 + $0xf8] sm:$0xff] 0.0
      $region36: #{_lambda_.10} parent=31 // pred_fallthru
        _
      %v295 = vld [vmem:[#allocation2] sm:$0xff]
      %v296 = vld [vmem:[#allocation2 + $0x8] sm:$0xff]
      %v297 = vld [vmem:[#allocation2 + $0x10] sm:$0xff]
      %v298 = vld [vmem:[#allocation2 + $0x18] sm:$0xff]
      %v299 = vld [vmem:[#allocation2 + $0x20] sm:$0xff]
      %v300 = vld [vmem:[#allocation2 + $0x28] sm:$0xff]
      %v301 = vld [vmem:[#allocation2 + $0x30] sm:$0xff]
      %v302 = vld [vmem:[#allocation2 + $0x38] sm:$0xff]
      %v303 = vld [vmem:[#allocation2 + $0x40] sm:$0xff]
      %v304 = vld [vmem:[#allocation2 + $0x48] sm:$0xff]
      %v305 = vld [vmem:[#allocation2 + $0x50] sm:$0xff]
      %v306 = vld [vmem:[#allocation2 + $0x58] sm:$0xff]
      %v307 = vld [vmem:[#allocation2 + $0x60] sm:$0xff]
      %v308 = vld [vmem:[#allocation2 + $0x68] sm:$0xff]
      %v309 = vld [vmem:[#allocation2 + $0x70] sm:$0xff]
      %v310 = vld [vmem:[#allocation2 + $0x78] sm:$0xff]
      %v311 = vld [vmem:[#allocation2 + $0x80] sm:$0xff]
      %v312 = vld [vmem:[#allocation2 + $0x88] sm:$0xff]
      %v313 = vld [vmem:[#allocation2 + $0x90] sm:$0xff]
      %v314 = vld [vmem:[#allocation2 + $0x98] sm:$0xff]
      %v315 = vld [vmem:[#allocation2 + $0xa0] sm:$0xff]
      %v316 = vld [vmem:[#allocation2 + $0xa8] sm:$0xff]
      %v317 = vld [vmem:[#allocation2 + $0xb0] sm:$0xff]
      %v318 = vld [vmem:[#allocation2 + $0xb8] sm:$0xff]
      %v319 = vld [vmem:[#allocation2 + $0xc0] sm:$0xff]
      %v320 = vld [vmem:[#allocation2 + $0xc8] sm:$0xff]
      %v321 = vld [vmem:[#allocation2 + $0xd0] sm:$0xff]
      %v322 = vld [vmem:[#allocation2 + $0xd8] sm:$0xff]
      %v323 = vld [vmem:[#allocation2 + $0xe0] sm:$0xff]
      %v324 = vld [vmem:[#allocation2 + $0xe8] sm:$0xff]
      %v325 = vld [vmem:[#allocation2 + $0xf0] sm:$0xff]
      %v326 = vld [vmem:[#allocation2 + $0xf8] sm:$0xff]
      %v327 = vld [vmem:[%s236] sm:$0xff]
      %v328 = vld [vmem:[%s236 + $0x8] sm:$0xff]
      %v329 = vld [vmem:[%s236 + $0x10] sm:$0xff]
      %v330 = vld [vmem:[%s236 + $0x18] sm:$0xff]
      %v331 = vld [vmem:[%s236 + $0x20] sm:$0xff]
      %v332 = vld [vmem:[%s236 + $0x28] sm:$0xff]
      %v333 = vld [vmem:[%s236 + $0x30] sm:$0xff]
      %v334 = vld [vmem:[%s236 + $0x38] sm:$0xff]
      %v335 = vld [vmem:[%s236 + $0x40] sm:$0xff]
      %v336 = vld [vmem:[%s236 + $0x48] sm:$0xff]
      %v337 = vld [vmem:[%s236 + $0x50] sm:$0xff]
      %v338 = vld [vmem:[%s236 + $0x58] sm:$0xff]
      %v339 = vld [vmem:[%s236 + $0x60] sm:$0xff]
      %v340 = vld [vmem:[%s236 + $0x68] sm:$0xff]
      %v341 = vld [vmem:[%s236 + $0x70] sm:$0xff]
      %v342 = vld [vmem:[%s236 + $0x78] sm:$0xff]
      %v343 = vld [vmem:[%s236 + $0x80] sm:$0xff]
      %v344 = vld [vmem:[%s236 + $0x88] sm:$0xff]
      %v345 = vld [vmem:[%s236 + $0x90] sm:$0xff]
      %v346 = vld [vmem:[%s236 + $0x98] sm:$0xff]
      %v347 = vld [vmem:[%s236 + $0xa0] sm:$0xff]
      %v348 = vld [vmem:[%s236 + $0xa8] sm:$0xff]
      %v349 = vld [vmem:[%s236 + $0xb0] sm:$0xff]
      %v350 = vld [vmem:[%s236 + $0xb8] sm:$0xff]
      %v351 = vld [vmem:[%s236 + $0xc0] sm:$0xff]
      %v352 = vld [vmem:[%s236 + $0xc8] sm:$0xff]
      %v353 = vld [vmem:[%s236 + $0xd0] sm:$0xff]
      %v354 = vld [vmem:[%s236 + $0xd8] sm:$0xff]
      %v355 = vld [vmem:[%s236 + $0xe0] sm:$0xff]
      %v356 = vld [vmem:[%s236 + $0xe8] sm:$0xff]
      %v357 = vld [vmem:[%s236 + $0xf0] sm:$0xff]
      %v358 = vld [vmem:[%s236 + $0xf8] sm:$0xff]
      %v359 = vld [vmem:[%s245] sm:$0xff]
      %v360 = vld [vmem:[%s245 + $0x8] sm:$0xff]
      %v361 = vld [vmem:[%s245 + $0x10] sm:$0xff]
      %v362 = vld [vmem:[%s245 + $0x18] sm:$0xff]
      %v363 = vld [vmem:[%s245 + $0x20] sm:$0xff]
      %v364 = vld [vmem:[%s245 + $0x28] sm:$0xff]
      %v365 = vld [vmem:[%s245 + $0x30] sm:$0xff]
      %v366 = vld [vmem:[%s245 + $0x38] sm:$0xff]
      %v367 = vld [vmem:[%s245 + $0x40] sm:$0xff]
      %v368 = vld [vmem:[%s245 + $0x48] sm:$0xff]
      %v369 = vld [vmem:[%s245 + $0x50] sm:$0xff]
      %v370 = vld [vmem:[%s245 + $0x58] sm:$0xff]
      %v371 = vld [vmem:[%s245 + $0x60] sm:$0xff]
      %v372 = vld [vmem:[%s245 + $0x68] sm:$0xff]
      %v373 = vld [vmem:[%s245 + $0x70] sm:$0xff]
      %v374 = vld [vmem:[%s245 + $0x78] sm:$0xff]
      %375 = vmatpush.msra.mxu0 %v374
      %376 = vmatpush.msra.mxu0 %v373
      %377 = vmatpush.msra.mxu0 %v372
      %378 = vmatpush.msra.mxu0 %v371
      %379 = vmatpush.msra.mxu0 %v370
      %380 = vmatpush.msra.mxu0 %v369
      %381 = vmatpush.msra.mxu0 %v368
      %382 = vmatpush.msra.mxu0 %v367
      %383 = vmatpush.msra.mxu0 %v366
      %384 = vmatpush.msra.mxu0 %v365
      %385 = vmatpush.msra.mxu0 %v364
      %386 = vmatpush.msra.mxu0 %v363
      %387 = vmatpush.msra.mxu0 %v362
      %388 = vmatpush.msra.mxu0 %v361
      %389 = vmatpush.msra.mxu0 %v360
      %390 = vmatpush.msra.mxu0 %v359
      %391 = vmatmul.f32.gmra.mxu0 %v327
      %v392 = vpop.f32.mrf.mxu0
      %v393 = vadd.f32 0.0, %v392
      %394 = vmatmul.f32.gmra.mxu0 %v328
      %v395 = vpop.f32.mrf.mxu0
      %v396 = vadd.f32 0.0, %v395
      %397 = vmatmul.f32.gmra.mxu0 %v329
      %v398 = vpop.f32.mrf.mxu0
      %v399 = vadd.f32 0.0, %v398
      %400 = vmatmul.f32.gmra.mxu0 %v330
      %v401 = vpop.f32.mrf.mxu0
      %v402 = vadd.f32 0.0, %v401
      %403 = vmatmul.f32.gmra.mxu0 %v331
      %v404 = vpop.f32.mrf.mxu0
      %v405 = vadd.f32 0.0, %v404
      %406 = vmatmul.f32.gmra.mxu0 %v332
      %v407 = vpop.f32.mrf.mxu0
      %v408 = vadd.f32 0.0, %v407
      %409 = vmatmul.f32.gmra.mxu0 %v333
      %v410 = vpop.f32.mrf.mxu0
      %v411 = vadd.f32 0.0, %v410
      %412 = vmatmul.f32.gmra.mxu0 %v334
      %v413 = vpop.f32.mrf.mxu0
      %v414 = vadd.f32 0.0, %v413
      %415 = vmatmul.f32.gmra.mxu0 %v335
      %v416 = vpop.f32.mrf.mxu0
      %v417 = vadd.f32 0.0, %v416
      %418 = vmatmul.f32.gmra.mxu0 %v336
      %v419 = vpop.f32.mrf.mxu0
      %v420 = vadd.f32 0.0, %v419
      %421 = vmatmul.f32.gmra.mxu0 %v337
      %v422 = vpop.f32.mrf.mxu0
      %v423 = vadd.f32 0.0, %v422
      %424 = vmatmul.f32.gmra.mxu0 %v338
      %v425 = vpop.f32.mrf.mxu0
      %v426 = vadd.f32 0.0, %v425
      %427 = vmatmul.f32.gmra.mxu0 %v339
      %v428 = vpop.f32.mrf.mxu0
      %v429 = vadd.f32 0.0, %v428
      %430 = vmatmul.f32.gmra.mxu0 %v340
      %v431 = vpop.f32.mrf.mxu0
      %v432 = vadd.f32 0.0, %v431
      %433 = vmatmul.f32.gmra.mxu0 %v341
      %v434 = vpop.f32.mrf.mxu0
      %v435 = vadd.f32 0.0, %v434
      %436 = vmatmul.f32.gmra.mxu0 %v342
      %v437 = vpop.f32.mrf.mxu0
      %v438 = vadd.f32 0.0, %v437
      %439 = vmatmul.f32.gmra.mxu0 %v343
      %v440 = vpop.f32.mrf.mxu0
      %v441 = vadd.f32 0.0, %v440
      %442 = vmatmul.f32.gmra.mxu0 %v344
      %v443 = vpop.f32.mrf.mxu0
      %v444 = vadd.f32 0.0, %v443
      %445 = vmatmul.f32.gmra.mxu0 %v345
      %v446 = vpop.f32.mrf.mxu0
      %v447 = vadd.f32 0.0, %v446
      %448 = vmatmul.f32.gmra.mxu0 %v346
      %v449 = vpop.f32.mrf.mxu0
      %v450 = vadd.f32 0.0, %v449
      %451 = vmatmul.f32.gmra.mxu0 %v347
      %v452 = vpop.f32.mrf.mxu0
      %v453 = vadd.f32 0.0, %v452
      %454 = vmatmul.f32.gmra.mxu0 %v348
      %v455 = vpop.f32.mrf.mxu0
      %v456 = vadd.f32 0.0, %v455
      %457 = vmatmul.f32.gmra.mxu0 %v349
      %v458 = vpop.f32.mrf.mxu0
      %v459 = vadd.f32 0.0, %v458
      %460 = vmatmul.f32.gmra.mxu0 %v350
      %v461 = vpop.f32.mrf.mxu0
      %v462 = vadd.f32 0.0, %v461
      %463 = vmatmul.f32.gmra.mxu0 %v351
      %v464 = vpop.f32.mrf.mxu0
      %v465 = vadd.f32 0.0, %v464
      %466 = vmatmul.f32.gmra.mxu0 %v352
      %v467 = vpop.f32.mrf.mxu0
      %v468 = vadd.f32 0.0, %v467
      %469 = vmatmul.f32.gmra.mxu0 %v353
      %v470 = vpop.f32.mrf.mxu0
      %v471 = vadd.f32 0.0, %v470
      %472 = vmatmul.f32.gmra.mxu0 %v354
      %v473 = vpop.f32.mrf.mxu0
      %v474 = vadd.f32 0.0, %v473
      %475 = vmatmul.f32.gmra.mxu0 %v355
      %v476 = vpop.f32.mrf.mxu0
      %v477 = vadd.f32 0.0, %v476
      %478 = vmatmul.f32.gmra.mxu0 %v356
      %v479 = vpop.f32.mrf.mxu0
      %v480 = vadd.f32 0.0, %v479
      %481 = vmatmul.f32.gmra.mxu0 %v357
      %v482 = vpop.f32.mrf.mxu0
      %v483 = vadd.f32 0.0, %v482
      %484 = vmatmul.f32.gmra.mxu0 %v358
      %v485 = vpop.f32.mrf.mxu0
      %v486 = vadd.f32 0.0, %v485
      %487 = vdwg.mxu0
      %v488 = vadd.f32 %v295, %v393
      %v489 = vadd.f32 %v296, %v396
      %v490 = vadd.f32 %v297, %v399
      %v491 = vadd.f32 %v298, %v402
      %v492 = vadd.f32 %v299, %v405
      %v493 = vadd.f32 %v300, %v408
      %v494 = vadd.f32 %v301, %v411
      %v495 = vadd.f32 %v302, %v414
      %v496 = vadd.f32 %v303, %v417
      %v497 = vadd.f32 %v304, %v420
      %v498 = vadd.f32 %v305, %v423
      %v499 = vadd.f32 %v306, %v426
      %v500 = vadd.f32 %v307, %v429
      %v501 = vadd.f32 %v308, %v432
      %v502 = vadd.f32 %v309, %v435
      %v503 = vadd.f32 %v310, %v438
      %v504 = vadd.f32 %v311, %v441
      %v505 = vadd.f32 %v312, %v444
      %v506 = vadd.f32 %v313, %v447
      %v507 = vadd.f32 %v314, %v450
      %v508 = vadd.f32 %v315, %v453
      %v509 = vadd.f32 %v316, %v456
      %v510 = vadd.f32 %v317, %v459
      %v511 = vadd.f32 %v318, %v462
      %v512 = vadd.f32 %v319, %v465
      %v513 = vadd.f32 %v320, %v468
      %v514 = vadd.f32 %v321, %v471
      %v515 = vadd.f32 %v322, %v474
      %v516 = vadd.f32 %v323, %v477
      %v517 = vadd.f32 %v324, %v480
      %v518 = vadd.f32 %v325, %v483
      %v519 = vadd.f32 %v326, %v486
      %520 = vst [vmem:[#allocation2] sm:$0xff] %v488
      %521 = vst [vmem:[#allocation2 + $0x8] sm:$0xff] %v489
      %522 = vst [vmem:[#allocation2 + $0x10] sm:$0xff] %v490
      %523 = vst [vmem:[#allocation2 + $0x18] sm:$0xff] %v491
      %524 = vst [vmem:[#allocation2 + $0x20] sm:$0xff] %v492
      %525 = vst [vmem:[#allocation2 + $0x28] sm:$0xff] %v493
      %526 = vst [vmem:[#allocation2 + $0x30] sm:$0xff] %v494
      %527 = vst [vmem:[#allocation2 + $0x38] sm:$0xff] %v495
      %528 = vst [vmem:[#allocation2 + $0x40] sm:$0xff] %v496
      %529 = vst [vmem:[#allocation2 + $0x48] sm:$0xff] %v497
      %530 = vst [vmem:[#allocation2 + $0x50] sm:$0xff] %v498
      %531 = vst [vmem:[#allocation2 + $0x58] sm:$0xff] %v499
      %532 = vst [vmem:[#allocation2 + $0x60] sm:$0xff] %v500
      %533 = vst [vmem:[#allocation2 + $0x68] sm:$0xff] %v501
      %534 = vst [vmem:[#allocation2 + $0x70] sm:$0xff] %v502
      %535 = vst [vmem:[#allocation2 + $0x78] sm:$0xff] %v503
      %536 = vst [vmem:[#allocation2 + $0x80] sm:$0xff] %v504
      %537 = vst [vmem:[#allocation2 + $0x88] sm:$0xff] %v505
      %538 = vst [vmem:[#allocation2 + $0x90] sm:$0xff] %v506
      %539 = vst [vmem:[#allocation2 + $0x98] sm:$0xff] %v507
      %540 = vst [vmem:[#allocation2 + $0xa0] sm:$0xff] %v508
      %541 = vst [vmem:[#allocation2 + $0xa8] sm:$0xff] %v509
      %542 = vst [vmem:[#allocation2 + $0xb0] sm:$0xff] %v510
      %543 = vst [vmem:[#allocation2 + $0xb8] sm:$0xff] %v511
      %544 = vst [vmem:[#allocation2 + $0xc0] sm:$0xff] %v512
      %545 = vst [vmem:[#allocation2 + $0xc8] sm:$0xff] %v513
      %546 = vst [vmem:[#allocation2 + $0xd0] sm:$0xff] %v514
      %547 = vst [vmem:[#allocation2 + $0xd8] sm:$0xff] %v515
      %548 = vst [vmem:[#allocation2 + $0xe0] sm:$0xff] %v516
      %549 = vst [vmem:[#allocation2 + $0xe8] sm:$0xff] %v517
      %550 = vst [vmem:[#allocation2 + $0xf0] sm:$0xff] %v518
      %551 = vst [vmem:[#allocation2 + $0xf8] sm:$0xff] %v519
      // Predicated region
      $region37: #{_lambda_.10} parent=31 // pred_check
        %p552 = pneg %p259
      $region38: #{_lambda_.10} parent=31 // pred_check_branch
        %554 = sbr.rel (%p552) target = $region40
      $region39: #{_lambda_.10} parent=31 // pred_region
        %v555 = vld [vmem:[#allocation2] sm:$0xff]
        %v556 = vld [vmem:[#allocation2 + $0x8] sm:$0xff]
        %v557 = vld [vmem:[#allocation2 + $0x10] sm:$0xff]
        %v558 = vld [vmem:[#allocation2 + $0x18] sm:$0xff]
        %v559 = vld [vmem:[#allocation2 + $0x20] sm:$0xff]
        %v560 = vld [vmem:[#allocation2 + $0x28] sm:$0xff]
        %v561 = vld [vmem:[#allocation2 + $0x30] sm:$0xff]
        %v562 = vld [vmem:[#allocation2 + $0x38] sm:$0xff]
        %v563 = vld [vmem:[#allocation2 + $0x40] sm:$0xff]
        %v564 = vld [vmem:[#allocation2 + $0x48] sm:$0xff]
        %v565 = vld [vmem:[#allocation2 + $0x50] sm:$0xff]
        %v566 = vld [vmem:[#allocation2 + $0x58] sm:$0xff]
        %v567 = vld [vmem:[#allocation2 + $0x60] sm:$0xff]
        %v568 = vld [vmem:[#allocation2 + $0x68] sm:$0xff]
        %v569 = vld [vmem:[#allocation2 + $0x70] sm:$0xff]
        %v570 = vld [vmem:[#allocation2 + $0x78] sm:$0xff]
        %v571 = vld [vmem:[#allocation2 + $0x80] sm:$0xff]
        %v572 = vld [vmem:[#allocation2 + $0x88] sm:$0xff]
        %v573 = vld [vmem:[#allocation2 + $0x90] sm:$0xff]
        %v574 = vld [vmem:[#allocation2 + $0x98] sm:$0xff]
        %v575 = vld [vmem:[#allocation2 + $0xa0] sm:$0xff]
        %v576 = vld [vmem:[#allocation2 + $0xa8] sm:$0xff]
        %v577 = vld [vmem:[#allocation2 + $0xb0] sm:$0xff]
        %v578 = vld [vmem:[#allocation2 + $0xb8] sm:$0xff]
        %v579 = vld [vmem:[#allocation2 + $0xc0] sm:$0xff]
        %v580 = vld [vmem:[#allocation2 + $0xc8] sm:$0xff]
        %v581 = vld [vmem:[#allocation2 + $0xd0] sm:$0xff]
        %v582 = vld [vmem:[#allocation2 + $0xd8] sm:$0xff]
        %v583 = vld [vmem:[#allocation2 + $0xe0] sm:$0xff]
        %v584 = vld [vmem:[#allocation2 + $0xe8] sm:$0xff]
        %v585 = vld [vmem:[#allocation2 + $0xf0] sm:$0xff]
        %v586 = vld [vmem:[#allocation2 + $0xf8] sm:$0xff]
        %v587 = vld [vmem:[%s249] sm:$0x1]
        %v589 = vperm.slane %v587, 0
        %v591 = vadd.f32 %v555, %v589
        %v592 = vadd.f32 %v556, %v589
        %v593 = vadd.f32 %v557, %v589
        %v594 = vadd.f32 %v558, %v589
        %v595 = vadd.f32 %v559, %v589
        %v596 = vadd.f32 %v560, %v589
        %v597 = vadd.f32 %v561, %v589
        %v598 = vadd.f32 %v562, %v589
        %v599 = vadd.f32 %v563, %v589
        %v600 = vadd.f32 %v564, %v589
        %v601 = vadd.f32 %v565, %v589
        %v602 = vadd.f32 %v566, %v589
        %v603 = vadd.f32 %v567, %v589
        %v604 = vadd.f32 %v568, %v589
        %v605 = vadd.f32 %v569, %v589
        %v606 = vadd.f32 %v570, %v589
        %v607 = vadd.f32 %v571, %v589
        %v608 = vadd.f32 %v572, %v589
        %v609 = vadd.f32 %v573, %v589
        %v610 = vadd.f32 %v574, %v589
        %v611 = vadd.f32 %v575, %v589
        %v612 = vadd.f32 %v576, %v589
        %v613 = vadd.f32 %v577, %v589
        %v614 = vadd.f32 %v578, %v589
        %v615 = vadd.f32 %v579, %v589
        %v616 = vadd.f32 %v580, %v589
        %v617 = vadd.f32 %v581, %v589
        %v618 = vadd.f32 %v582, %v589
        %v619 = vadd.f32 %v583, %v589
        %v620 = vadd.f32 %v584, %v589
        %v621 = vadd.f32 %v585, %v589
        %v622 = vadd.f32 %v586, %v589
        %vm623 = vcmp.gt.f32.partialorder %v591, 0.0
        %vm624 = vcmp.gt.f32.partialorder %v592, 0.0
        %vm625 = vcmp.gt.f32.partialorder %v593, 0.0
        %vm626 = vcmp.gt.f32.partialorder %v594, 0.0
        %vm627 = vcmp.gt.f32.partialorder %v595, 0.0
        %vm628 = vcmp.gt.f32.partialorder %v596, 0.0
        %vm629 = vcmp.gt.f32.partialorder %v597, 0.0
        %vm630 = vcmp.gt.f32.partialorder %v598, 0.0
        %vm631 = vcmp.gt.f32.partialorder %v599, 0.0
        %vm632 = vcmp.gt.f32.partialorder %v600, 0.0
        %vm633 = vcmp.gt.f32.partialorder %v601, 0.0
        %vm634 = vcmp.gt.f32.partialorder %v602, 0.0
        %vm635 = vcmp.gt.f32.partialorder %v603, 0.0
        %vm636 = vcmp.gt.f32.partialorder %v604, 0.0
        %vm637 = vcmp.gt.f32.partialorder %v605, 0.0
        %vm638 = vcmp.gt.f32.partialorder %v606, 0.0
        %vm639 = vcmp.gt.f32.partialorder %v607, 0.0
        %vm640 = vcmp.gt.f32.partialorder %v608, 0.0
        %vm641 = vcmp.gt.f32.partialorder %v609, 0.0
        %vm642 = vcmp.gt.f32.partialorder %v610, 0.0
        %vm643 = vcmp.gt.f32.partialorder %v611, 0.0
        %vm644 = vcmp.gt.f32.partialorder %v612, 0.0
        %vm645 = vcmp.gt.f32.partialorder %v613, 0.0
        %vm646 = vcmp.gt.f32.partialorder %v614, 0.0
        %vm647 = vcmp.gt.f32.partialorder %v615, 0.0
        %vm648 = vcmp.gt.f32.partialorder %v616, 0.0
        %vm649 = vcmp.gt.f32.partialorder %v617, 0.0
        %vm650 = vcmp.gt.f32.partialorder %v618, 0.0
        %vm651 = vcmp.gt.f32.partialorder %v619, 0.0
        %vm652 = vcmp.gt.f32.partialorder %v620, 0.0
        %vm653 = vcmp.gt.f32.partialorder %v621, 0.0
        %vm654 = vcmp.gt.f32.partialorder %v622, 0.0
        %v655 = vmul.f32 %v591, 0.1
        %v656 = vmul.f32 %v592, 0.1
        %v657 = vmul.f32 %v593, 0.1
        %v658 = vmul.f32 %v594, 0.1
        %v659 = vmul.f32 %v595, 0.1
        %v660 = vmul.f32 %v596, 0.1
        %v661 = vmul.f32 %v597, 0.1
        %v662 = vmul.f32 %v598, 0.1
        %v663 = vmul.f32 %v599, 0.1
        %v664 = vmul.f32 %v600, 0.1
        %v665 = vmul.f32 %v601, 0.1
        %v666 = vmul.f32 %v602, 0.1
        %v667 = vmul.f32 %v603, 0.1
        %v668 = vmul.f32 %v604, 0.1
        %v669 = vmul.f32 %v605, 0.1
        %v670 = vmul.f32 %v606, 0.1
        %v671 = vmul.f32 %v607, 0.1
        %v672 = vmul.f32 %v608, 0.1
        %v673 = vmul.f32 %v609, 0.1
        %v674 = vmul.f32 %v610, 0.1
        %v675 = vmul.f32 %v611, 0.1
        %v676 = vmul.f32 %v612, 0.1
        %v677 = vmul.f32 %v613, 0.1
        %v678 = vmul.f32 %v614, 0.1
        %v679 = vmul.f32 %v615, 0.1
        %v680 = vmul.f32 %v616, 0.1
        %v681 = vmul.f32 %v617, 0.1
        %v682 = vmul.f32 %v618, 0.1
        %v683 = vmul.f32 %v619, 0.1
        %v684 = vmul.f32 %v620, 0.1
        %v685 = vmul.f32 %v621, 0.1
        %v686 = vmul.f32 %v622, 0.1
        %v687 = vsel %vm623, %v591, %v655
        %v688 = vsel %vm624, %v592, %v656
        %v689 = vsel %vm625, %v593, %v657
        %v690 = vsel %vm626, %v594, %v658
        %v691 = vsel %vm627, %v595, %v659
        %v692 = vsel %vm628, %v596, %v660
        %v693 = vsel %vm629, %v597, %v661
        %v694 = vsel %vm630, %v598, %v662
        %v695 = vsel %vm631, %v599, %v663
        %v696 = vsel %vm632, %v600, %v664
        %v697 = vsel %vm633, %v601, %v665
        %v698 = vsel %vm634, %v602, %v666
        %v699 = vsel %vm635, %v603, %v667
        %v700 = vsel %vm636, %v604, %v668
        %v701 = vsel %vm637, %v605, %v669
        %v702 = vsel %vm638, %v606, %v670
        %v703 = vsel %vm639, %v607, %v671
        %v704 = vsel %vm640, %v608, %v672
        %v705 = vsel %vm641, %v609, %v673
        %v706 = vsel %vm642, %v610, %v674
        %v707 = vsel %vm643, %v611, %v675
        %v708 = vsel %vm644, %v612, %v676
        %v709 = vsel %vm645, %v613, %v677
        %v710 = vsel %vm646, %v614, %v678
        %v711 = vsel %vm647, %v615, %v679
        %v712 = vsel %vm648, %v616, %v680
        %v713 = vsel %vm649, %v617, %v681
        %v714 = vsel %vm650, %v618, %v682
        %v715 = vsel %vm651, %v619, %v683
        %v716 = vsel %vm652, %v620, %v684
        %v717 = vsel %vm653, %v621, %v685
        %v718 = vsel %vm654, %v622, %v686
        %719 = vst [vmem:[%s257] sm:$0xff] %v687
        %720 = vst [vmem:[%s257 + $0x8] sm:$0xff] %v688
        %721 = vst [vmem:[%s257 + $0x10] sm:$0xff] %v689
        %722 = vst [vmem:[%s257 + $0x18] sm:$0xff] %v690
        %723 = vst [vmem:[%s257 + $0x20] sm:$0xff] %v691
        %724 = vst [vmem:[%s257 + $0x28] sm:$0xff] %v692
        %725 = vst [vmem:[%s257 + $0x30] sm:$0xff] %v693
        %726 = vst [vmem:[%s257 + $0x38] sm:$0xff] %v694
        %727 = vst [vmem:[%s257 + $0x40] sm:$0xff] %v695
        %728 = vst [vmem:[%s257 + $0x48] sm:$0xff] %v696
        %729 = vst [vmem:[%s257 + $0x50] sm:$0xff] %v697
        %730 = vst [vmem:[%s257 + $0x58] sm:$0xff] %v698
        %731 = vst [vmem:[%s257 + $0x60] sm:$0xff] %v699
        %732 = vst [vmem:[%s257 + $0x68] sm:$0xff] %v700
        %733 = vst [vmem:[%s257 + $0x70] sm:$0xff] %v701
        %734 = vst [vmem:[%s257 + $0x78] sm:$0xff] %v702
        %735 = vst [vmem:[%s257 + $0x80] sm:$0xff] %v703
        %736 = vst [vmem:[%s257 + $0x88] sm:$0xff] %v704
        %737 = vst [vmem:[%s257 + $0x90] sm:$0xff] %v705
        %738 = vst [vmem:[%s257 + $0x98] sm:$0xff] %v706
        %739 = vst [vmem:[%s257 + $0xa0] sm:$0xff] %v707
        %740 = vst [vmem:[%s257 + $0xa8] sm:$0xff] %v708
        %741 = vst [vmem:[%s257 + $0xb0] sm:$0xff] %v709
        %742 = vst [vmem:[%s257 + $0xb8] sm:$0xff] %v710
        %743 = vst [vmem:[%s257 + $0xc0] sm:$0xff] %v711
        %744 = vst [vmem:[%s257 + $0xc8] sm:$0xff] %v712
        %745 = vst [vmem:[%s257 + $0xd0] sm:$0xff] %v713
        %746 = vst [vmem:[%s257 + $0xd8] sm:$0xff] %v714
        %747 = vst [vmem:[%s257 + $0xe0] sm:$0xff] %v715
        %748 = vst [vmem:[%s257 + $0xe8] sm:$0xff] %v716
        %749 = vst [vmem:[%s257 + $0xf0] sm:$0xff] %v717
        %750 = vst [vmem:[%s257 + $0xf8] sm:$0xff] %v718
      $region40: #{_lambda_.10} parent=31 // pred_fallthru
        _
      %s751 = smul.u32 32, %s19
      %p752 = scmp.lt.s32.totalorder %s751, 63
      %s753 = scalar_select %p752, %s751, 63
      %p754 = scmp.lt.s32.totalorder %s20, 0
      %s755 = scalar_select %p754, %s20, 0
      %s756 = sadd.s32 %s755, %s753
      %s757 = smul.addr %s756, 8
      %s758 = scalar_lea.vmem %s3, %s757
      // Predicated region
      $region41: #{_lambda_.10} parent=31 // pred_check
        %p759 = pneg %p135
      $region42: #{_lambda_.10} parent=31 // pred_check_branch
        %761 = sbr.rel (%p759) target = $region44
      $region43: #{_lambda_.10} parent=31 // pred_region
        %s762 = smul.u32 32, %s19
      $region44: #{_lambda_.10} parent=31 // pred_fallthru
        _
    $region32: #{_lambda_.10} parent=5 // pred_fallthru
      _
    %p763 = scmp.le.s32.totalorder 2, %s9
    // Predicated region
    $region45: #{_lambda_.10} parent=5 // pred_check
      %p764 = pneg %p763
    $region46: #{_lambda_.10} parent=5 // pred_check_branch
      %766 = sbr.rel (%p764) target = $region48
    $region47: #{_lambda_.10} parent=5 // pred_region
      %s767 = ssub.s32 %s9, 2
      // Predicated region
      $region49: #{_lambda_.10} parent=47 // pred_check
        %p768 = pneg %p141
      $region50: #{_lambda_.10} parent=47 // pred_check_branch
        %770 = sbr.rel (%p768) target = $region52
      $region51: #{_lambda_.10} parent=47 // pred_region
        %s771 = smul.u32 32, %s22
        %p772 = scmp.lt.s32.totalorder %s771, 63
        %s773 = scalar_select %p772, %s771, 63
        %p774 = scmp.lt.s32.totalorder %s23, 0
        %s775 = scalar_select %p774, %s23, 0
        %s776 = sadd.s32 %s775, %s773
        %s777 = smul.addr %s776, 8
        %s778 = scalar_lea.vmem %s3, %s777
      $region52: #{_lambda_.10} parent=47 // pred_fallthru
        _
    $region48: #{_lambda_.10} parent=5 // pred_fallthru
      _
  $region6: #{_lambda_.10} parent=0 // loop_footer
    %s13 = sadd.s32 1, %s9
  $region7: #{_lambda_.10} parent=0 // loop_footer_branch
    %8 = sbr.rel target = $region3
  $region8: #{_lambda_.10} parent=0 // loop_exit
    _

// kernel: _lambda_.11
$region0: #{_lambda_.11}
  #allocation0 [shape = 'u32[]', space=smem, size = 0x4, offset = 0x4, fixed_abs, tag = 'smem constant byte address 0x4 - core index']
  #allocation1 [shape = 'u32[72,128]{1,0:T(1,128)}', space=vmem, size = 0x9000, scoped, tag = 'internal scratch']
  #allocation2 [shape = 'f32[128,128]{1,0:T(8,128)}', space=vmem, size = 0x10000, scoped, tag = 'scratch operand']
  %s0 = inlined_call_operand.vmem [shape: f32[128,128], index: 0, kind: input, shape index: {}]
  %s1 = inlined_call_operand.vmem [shape: f32[128,128], index: 1, kind: input, shape index: {}]
  %s2 = inlined_call_operand.vmem [shape: f32[1,128], index: 2, kind: input, shape index: {}]
  %s3 = inlined_call_operand.vmem [shape: f32[128,128], index: 3, kind: output, shape index: {}]
  %s4 = sld [smem:[#allocation0]]
  $region30: #{_lambda_.11} parent=0
    _
  %s6 = ssub.s32 1, %s4
  %s7 = scalar_select 0, %s6, %s4
  // Predicated region
  $region2: #{_lambda_.11} parent=0 // pred_check
    _
  $region3: #{_lambda_.11} parent=0 // pred_check_branch
    %9 = sbr.rel (0) target = $region5
  $region4: #{_lambda_.11} parent=0 // pred_region
    _
  $region5: #{_lambda_.11} parent=0 // pred_fallthru
    _
  // Predicated region
  $region6: #{_lambda_.11} parent=0 // pred_check
    _
  $region7: #{_lambda_.11} parent=0 // pred_check_branch
    %11 = sbr.rel (0) target = $region9
  $region8: #{_lambda_.11} parent=0 // pred_region
    _
  $region9: #{_lambda_.11} parent=0 // pred_fallthru
    _
  // Predicated region
  $region10: #{_lambda_.11} parent=0 // pred_check
    _
  $region11: #{_lambda_.11} parent=0 // pred_check_branch
    %13 = sbr.rel (0) target = $region13
  $region12: #{_lambda_.11} parent=0 // pred_region
    _
  $region13: #{_lambda_.11} parent=0 // pred_fallthru
    _
  %p14 = scmp.eq.s32.totalorder 0, 0
  // Predicated region
  $region14: #{_lambda_.11} parent=0 // pred_check
    %p15 = pneg %p14
  $region15: #{_lambda_.11} parent=0 // pred_check_branch
    %17 = sbr.rel (%p15) target = $region17
  $region16: #{_lambda_.11} parent=0 // pred_region
    %18 = vst [vmem:[#allocation2] sm:$0xff] 0.0
    %19 = vst [vmem:[#allocation2 + $0x8] sm:$0xff] 0.0
    %20 = vst [vmem:[#allocation2 + $0x10] sm:$0xff] 0.0
    %21 = vst [vmem:[#allocation2 + $0x18] sm:$0xff] 0.0
    %22 = vst [vmem:[#allocation2 + $0x20] sm:$0xff] 0.0
    %23 = vst [vmem:[#allocation2 + $0x28] sm:$0xff] 0.0
    %24 = vst [vmem:[#allocation2 + $0x30] sm:$0xff] 0.0
    %25 = vst [vmem:[#allocation2 + $0x38] sm:$0xff] 0.0
    %26 = vst [vmem:[#allocation2 + $0x40] sm:$0xff] 0.0
    %27 = vst [vmem:[#allocation2 + $0x48] sm:$0xff] 0.0
    %28 = vst [vmem:[#allocation2 + $0x50] sm:$0xff] 0.0
    %29 = vst [vmem:[#allocation2 + $0x58] sm:$0xff] 0.0
    %30 = vst [vmem:[#allocation2 + $0x60] sm:$0xff] 0.0
    %31 = vst [vmem:[#allocation2 + $0x68] sm:$0xff] 0.0
    %32 = vst [vmem:[#allocation2 + $0x70] sm:$0xff] 0.0
    %33 = vst [vmem:[#allocation2 + $0x78] sm:$0xff] 0.0
  $region17: #{_lambda_.11} parent=0 // pred_fallthru
    _
  %v34 = vld [vmem:[#allocation2] sm:$0xff]
  %v35 = vld [vmem:[#allocation2 + $0x8] sm:$0xff]
  %v36 = vld [vmem:[#allocation2 + $0x10] sm:$0xff]
  %v37 = vld [vmem:[#allocation2 + $0x18] sm:$0xff]
  %v38 = vld [vmem:[#allocation2 + $0x20] sm:$0xff]
  %v39 = vld [vmem:[#allocation2 + $0x28] sm:$0xff]
  %v40 = vld [vmem:[#allocation2 + $0x30] sm:$0xff]
  %v41 = vld [vmem:[#allocation2 + $0x38] sm:$0xff]
  %v42 = vld [vmem:[#allocation2 + $0x40] sm:$0xff]
  %v43 = vld [vmem:[#allocation2 + $0x48] sm:$0xff]
  %v44 = vld [vmem:[#allocation2 + $0x50] sm:$0xff]
  %v45 = vld [vmem:[#allocation2 + $0x58] sm:$0xff]
  %v46 = vld [vmem:[#allocation2 + $0x60] sm:$0xff]
  %v47 = vld [vmem:[#allocation2 + $0x68] sm:$0xff]
  %v48 = vld [vmem:[#allocation2 + $0x70] sm:$0xff]
  %v49 = vld [vmem:[#allocation2 + $0x78] sm:$0xff]
  %v50 = vld [vmem:[%s0] sm:$0xff]
  %v51 = vld [vmem:[%s0 + $0x8] sm:$0xff]
  %v52 = vld [vmem:[%s0 + $0x10] sm:$0xff]
  %v53 = vld [vmem:[%s0 + $0x18] sm:$0xff]
  %v54 = vld [vmem:[%s0 + $0x20] sm:$0xff]
  %v55 = vld [vmem:[%s0 + $0x28] sm:$0xff]
  %v56 = vld [vmem:[%s0 + $0x30] sm:$0xff]
  %v57 = vld [vmem:[%s0 + $0x38] sm:$0xff]
  %v58 = vld [vmem:[%s0 + $0x40] sm:$0xff]
  %v59 = vld [vmem:[%s0 + $0x48] sm:$0xff]
  %v60 = vld [vmem:[%s0 + $0x50] sm:$0xff]
  %v61 = vld [vmem:[%s0 + $0x58] sm:$0xff]
  %v62 = vld [vmem:[%s0 + $0x60] sm:$0xff]
  %v63 = vld [vmem:[%s0 + $0x68] sm:$0xff]
  %v64 = vld [vmem:[%s0 + $0x70] sm:$0xff]
  %v65 = vld [vmem:[%s0 + $0x78] sm:$0xff]
  %v66 = vld [vmem:[%s1] sm:$0xff]
  %v67 = vld [vmem:[%s1 + $0x8] sm:$0xff]
  %v68 = vld [vmem:[%s1 + $0x10] sm:$0xff]
  %v69 = vld [vmem:[%s1 + $0x18] sm:$0xff]
  %v70 = vld [vmem:[%s1 + $0x20] sm:$0xff]
  %v71 = vld [vmem:[%s1 + $0x28] sm:$0xff]
  %v72 = vld [vmem:[%s1 + $0x30] sm:$0xff]
  %v73 = vld [vmem:[%s1 + $0x38] sm:$0xff]
  %v74 = vld [vmem:[%s1 + $0x40] sm:$0xff]
  %v75 = vld [vmem:[%s1 + $0x48] sm:$0xff]
  %v76 = vld [vmem:[%s1 + $0x50] sm:$0xff]
  %v77 = vld [vmem:[%s1 + $0x58] sm:$0xff]
  %v78 = vld [vmem:[%s1 + $0x60] sm:$0xff]
  %v79 = vld [vmem:[%s1 + $0x68] sm:$0xff]
  %v80 = vld [vmem:[%s1 + $0x70] sm:$0xff]
  %v81 = vld [vmem:[%s1 + $0x78] sm:$0xff]
  %82 = vmatpush.msra.mxu0 %v81
  %83 = vmatpush.msra.mxu0 %v80
  %84 = vmatpush.msra.mxu0 %v79
  %85 = vmatpush.msra.mxu0 %v78
  %86 = vmatpush.msra.mxu0 %v77
  %87 = vmatpush.msra.mxu0 %v76
  %88 = vmatpush.msra.mxu0 %v75
  %89 = vmatpush.msra.mxu0 %v74
  %90 = vmatpush.msra.mxu0 %v73
  %91 = vmatpush.msra.mxu0 %v72
  %92 = vmatpush.msra.mxu0 %v71
  %93 = vmatpush.msra.mxu0 %v70
  %94 = vmatpush.msra.mxu0 %v69
  %95 = vmatpush.msra.mxu0 %v68
  %96 = vmatpush.msra.mxu0 %v67
  %97 = vmatpush.msra.mxu0 %v66
  %98 = vmatmul.f32.gmra.mxu0 %v50
  %v99 = vpop.f32.mrf.mxu0
  %v100 = vadd.f32 0.0, %v99
  %101 = vmatmul.f32.gmra.mxu0 %v51
  %v102 = vpop.f32.mrf.mxu0
  %v103 = vadd.f32 0.0, %v102
  %104 = vmatmul.f32.gmra.mxu0 %v52
  %v105 = vpop.f32.mrf.mxu0
  %v106 = vadd.f32 0.0, %v105
  %107 = vmatmul.f32.gmra.mxu0 %v53
  %v108 = vpop.f32.mrf.mxu0
  %v109 = vadd.f32 0.0, %v108
  %110 = vmatmul.f32.gmra.mxu0 %v54
  %v111 = vpop.f32.mrf.mxu0
  %v112 = vadd.f32 0.0, %v111
  %113 = vmatmul.f32.gmra.mxu0 %v55
  %v114 = vpop.f32.mrf.mxu0
  %v115 = vadd.f32 0.0, %v114
  %116 = vmatmul.f32.gmra.mxu0 %v56
  %v117 = vpop.f32.mrf.mxu0
  %v118 = vadd.f32 0.0, %v117
  %119 = vmatmul.f32.gmra.mxu0 %v57
  %v120 = vpop.f32.mrf.mxu0
  %v121 = vadd.f32 0.0, %v120
  %122 = vmatmul.f32.gmra.mxu0 %v58
  %v123 = vpop.f32.mrf.mxu0
  %v124 = vadd.f32 0.0, %v123
  %125 = vmatmul.f32.gmra.mxu0 %v59
  %v126 = vpop.f32.mrf.mxu0
  %v127 = vadd.f32 0.0, %v126
  %128 = vmatmul.f32.gmra.mxu0 %v60
  %v129 = vpop.f32.mrf.mxu0
  %v130 = vadd.f32 0.0, %v129
  %131 = vmatmul.f32.gmra.mxu0 %v61
  %v132 = vpop.f32.mrf.mxu0
  %v133 = vadd.f32 0.0, %v132
  %134 = vmatmul.f32.gmra.mxu0 %v62
  %v135 = vpop.f32.mrf.mxu0
  %v136 = vadd.f32 0.0, %v135
  %137 = vmatmul.f32.gmra.mxu0 %v63
  %v138 = vpop.f32.mrf.mxu0
  %v139 = vadd.f32 0.0, %v138
  %140 = vmatmul.f32.gmra.mxu0 %v64
  %v141 = vpop.f32.mrf.mxu0
  %v142 = vadd.f32 0.0, %v141
  %143 = vmatmul.f32.gmra.mxu0 %v65
  %v144 = vpop.f32.mrf.mxu0
  %v145 = vadd.f32 0.0, %v144
  %146 = vdwg.mxu0
  %v147 = vadd.f32 %v34, %v100
  %v148 = vadd.f32 %v35, %v103
  %v149 = vadd.f32 %v36, %v106
  %v150 = vadd.f32 %v37, %v109
  %v151 = vadd.f32 %v38, %v112
  %v152 = vadd.f32 %v39, %v115
  %v153 = vadd.f32 %v40, %v118
  %v154 = vadd.f32 %v41, %v121
  %v155 = vadd.f32 %v42, %v124
  %v156 = vadd.f32 %v43, %v127
  %v157 = vadd.f32 %v44, %v130
  %v158 = vadd.f32 %v45, %v133
  %v159 = vadd.f32 %v46, %v136
  %v160 = vadd.f32 %v47, %v139
  %v161 = vadd.f32 %v48, %v142
  %v162 = vadd.f32 %v49, %v145
  %163 = vst [vmem:[#allocation2] sm:$0xff] %v147
  %164 = vst [vmem:[#allocation2 + $0x8] sm:$0xff] %v148
  %165 = vst [vmem:[#allocation2 + $0x10] sm:$0xff] %v149
  %166 = vst [vmem:[#allocation2 + $0x18] sm:$0xff] %v150
  %167 = vst [vmem:[#allocation2 + $0x20] sm:$0xff] %v151
  %168 = vst [vmem:[#allocation2 + $0x28] sm:$0xff] %v152
  %169 = vst [vmem:[#allocation2 + $0x30] sm:$0xff] %v153
  %170 = vst [vmem:[#allocation2 + $0x38] sm:$0xff] %v154
  %171 = vst [vmem:[#allocation2 + $0x40] sm:$0xff] %v155
  %172 = vst [vmem:[#allocation2 + $0x48] sm:$0xff] %v156
  %173 = vst [vmem:[#allocation2 + $0x50] sm:$0xff] %v157
  %174 = vst [vmem:[#allocation2 + $0x58] sm:$0xff] %v158
  %175 = vst [vmem:[#allocation2 + $0x60] sm:$0xff] %v159
  %176 = vst [vmem:[#allocation2 + $0x68] sm:$0xff] %v160
  %177 = vst [vmem:[#allocation2 + $0x70] sm:$0xff] %v161
  %178 = vst [vmem:[#allocation2 + $0x78] sm:$0xff] %v162
  // Predicated region
  $region18: #{_lambda_.11} parent=0 // pred_check
    %p179 = pneg %p14
  $region19: #{_lambda_.11} parent=0 // pred_check_branch
    %181 = sbr.rel (%p179) target = $region21
  $region20: #{_lambda_.11} parent=0 // pred_region
    %v182 = vld [vmem:[#allocation2] sm:$0xff]
    %v183 = vld [vmem:[#allocation2 + $0x8] sm:$0xff]
    %v184 = vld [vmem:[#allocation2 + $0x10] sm:$0xff]
    %v185 = vld [vmem:[#allocation2 + $0x18] sm:$0xff]
    %v186 = vld [vmem:[#allocation2 + $0x20] sm:$0xff]
    %v187 = vld [vmem:[#allocation2 + $0x28] sm:$0xff]
    %v188 = vld [vmem:[#allocation2 + $0x30] sm:$0xff]
    %v189 = vld [vmem:[#allocation2 + $0x38] sm:$0xff]
    %v190 = vld [vmem:[#allocation2 + $0x40] sm:$0xff]
    %v191 = vld [vmem:[#allocation2 + $0x48] sm:$0xff]
    %v192 = vld [vmem:[#allocation2 + $0x50] sm:$0xff]
    %v193 = vld [vmem:[#allocation2 + $0x58] sm:$0xff]
    %v194 = vld [vmem:[#allocation2 + $0x60] sm:$0xff]
    %v195 = vld [vmem:[#allocation2 + $0x68] sm:$0xff]
    %v196 = vld [vmem:[#allocation2 + $0x70] sm:$0xff]
    %v197 = vld [vmem:[#allocation2 + $0x78] sm:$0xff]
    %v198 = vld [vmem:[%s2] sm:$0x1]
    %v200 = vperm.slane %v198, 0
    %v202 = vadd.f32 %v182, %v200
    %v203 = vadd.f32 %v183, %v200
    %v204 = vadd.f32 %v184, %v200
    %v205 = vadd.f32 %v185, %v200
    %v206 = vadd.f32 %v186, %v200
    %v207 = vadd.f32 %v187, %v200
    %v208 = vadd.f32 %v188, %v200
    %v209 = vadd.f32 %v189, %v200
    %v210 = vadd.f32 %v190, %v200
    %v211 = vadd.f32 %v191, %v200
    %v212 = vadd.f32 %v192, %v200
    %v213 = vadd.f32 %v193, %v200
    %v214 = vadd.f32 %v194, %v200
    %v215 = vadd.f32 %v195, %v200
    %v216 = vadd.f32 %v196, %v200
    %v217 = vadd.f32 %v197, %v200
    %vm218 = vcmp.gt.f32.partialorder %v202, 0.0
    %vm219 = vcmp.gt.f32.partialorder %v203, 0.0
    %vm220 = vcmp.gt.f32.partialorder %v204, 0.0
    %vm221 = vcmp.gt.f32.partialorder %v205, 0.0
    %vm222 = vcmp.gt.f32.partialorder %v206, 0.0
    %vm223 = vcmp.gt.f32.partialorder %v207, 0.0
    %vm224 = vcmp.gt.f32.partialorder %v208, 0.0
    %vm225 = vcmp.gt.f32.partialorder %v209, 0.0
    %vm226 = vcmp.gt.f32.partialorder %v210, 0.0
    %vm227 = vcmp.gt.f32.partialorder %v211, 0.0
    %vm228 = vcmp.gt.f32.partialorder %v212, 0.0
    %vm229 = vcmp.gt.f32.partialorder %v213, 0.0
    %vm230 = vcmp.gt.f32.partialorder %v214, 0.0
    %vm231 = vcmp.gt.f32.partialorder %v215, 0.0
    %vm232 = vcmp.gt.f32.partialorder %v216, 0.0
    %vm233 = vcmp.gt.f32.partialorder %v217, 0.0
    %v234 = vmul.f32 %v202, 0.1
    %v235 = vmul.f32 %v203, 0.1
    %v236 = vmul.f32 %v204, 0.1
    %v237 = vmul.f32 %v205, 0.1
    %v238 = vmul.f32 %v206, 0.1
    %v239 = vmul.f32 %v207, 0.1
    %v240 = vmul.f32 %v208, 0.1
    %v241 = vmul.f32 %v209, 0.1
    %v242 = vmul.f32 %v210, 0.1
    %v243 = vmul.f32 %v211, 0.1
    %v244 = vmul.f32 %v212, 0.1
    %v245 = vmul.f32 %v213, 0.1
    %v246 = vmul.f32 %v214, 0.1
    %v247 = vmul.f32 %v215, 0.1
    %v248 = vmul.f32 %v216, 0.1
    %v249 = vmul.f32 %v217, 0.1
    %v250 = vsel %vm218, %v202, %v234
    %v251 = vsel %vm219, %v203, %v235
    %v252 = vsel %vm220, %v204, %v236
    %v253 = vsel %vm221, %v205, %v237
    %v254 = vsel %vm222, %v206, %v238
    %v255 = vsel %vm223, %v207, %v239
    %v256 = vsel %vm224, %v208, %v240
    %v257 = vsel %vm225, %v209, %v241
    %v258 = vsel %vm226, %v210, %v242
    %v259 = vsel %vm227, %v211, %v243
    %v260 = vsel %vm228, %v212, %v244
    %v261 = vsel %vm229, %v213, %v245
    %v262 = vsel %vm230, %v214, %v246
    %v263 = vsel %vm231, %v215, %v247
    %v264 = vsel %vm232, %v216, %v248
    %v265 = vsel %vm233, %v217, %v249
    %266 = vst [vmem:[%s3] sm:$0xff] %v250
    %267 = vst [vmem:[%s3 + $0x8] sm:$0xff] %v251
    %268 = vst [vmem:[%s3 + $0x10] sm:$0xff] %v252
    %269 = vst [vmem:[%s3 + $0x18] sm:$0xff] %v253
    %270 = vst [vmem:[%s3 + $0x20] sm:$0xff] %v254
    %271 = vst [vmem:[%s3 + $0x28] sm:$0xff] %v255
    %272 = vst [vmem:[%s3 + $0x30] sm:$0xff] %v256
    %273 = vst [vmem:[%s3 + $0x38] sm:$0xff] %v257
    %274 = vst [vmem:[%s3 + $0x40] sm:$0xff] %v258
    %275 = vst [vmem:[%s3 + $0x48] sm:$0xff] %v259
    %276 = vst [vmem:[%s3 + $0x50] sm:$0xff] %v260
    %277 = vst [vmem:[%s3 + $0x58] sm:$0xff] %v261
    %278 = vst [vmem:[%s3 + $0x60] sm:$0xff] %v262
    %279 = vst [vmem:[%s3 + $0x68] sm:$0xff] %v263
    %280 = vst [vmem:[%s3 + $0x70] sm:$0xff] %v264
    %281 = vst [vmem:[%s3 + $0x78] sm:$0xff] %v265
  $region21: #{_lambda_.11} parent=0 // pred_fallthru
    _
  // Predicated region
  $region22: #{_lambda_.11} parent=0 // pred_check
    _
  $region23: #{_lambda_.11} parent=0 // pred_check_branch
    %283 = sbr.rel (0) target = $region25
  $region24: #{_lambda_.11} parent=0 // pred_region
    _
  $region25: #{_lambda_.11} parent=0 // pred_fallthru
    _
  // Predicated region
  $region26: #{_lambda_.11} parent=0 // pred_check
    _
  $region27: #{_lambda_.11} parent=0 // pred_check_branch
    %285 = sbr.rel (0) target = $region29
  $region28: #{_lambda_.11} parent=0 // pred_region
    _
  $region29: #{_lambda_.11} parent=0 // pred_fallthru
    _

// kernel: _lambda_.17
$region0: #{_lambda_.17}
  #allocation0 [shape = 'u32[]', space=smem, size = 0x4, offset = 0x4, fixed_abs, tag = 'smem constant byte address 0x4 - core index']
  #allocation1 [shape = 'u32[72,128]{1,0:T(1,128)}', space=vmem, size = 0x9000, scoped, tag = 'internal scratch']
  #allocation2 [shape = 'f32[32,128]{1,0:T(8,128)}', space=vmem, size = 0x4000, scoped, tag = 'scratch operand']
  %s0 = inlined_call_operand.vmem [shape: f32[32,128], index: 0, kind: input, shape index: {}]
  %s1 = inlined_call_operand.vmem [shape: f32[128,128], index: 1, kind: input, shape index: {}]
  %s2 = inlined_call_operand.vmem [shape: f32[1,128], index: 2, kind: input, shape index: {}]
  %s3 = inlined_call_operand.vmem [shape: f32[32,128], index: 3, kind: output, shape index: {}]
  %s4 = sld [smem:[#allocation0]]
  $region30: #{_lambda_.17} parent=0
    _
  %s6 = ssub.s32 1, %s4
  %s7 = scalar_select 0, %s6, %s4
  // Predicated region
  $region2: #{_lambda_.17} parent=0 // pred_check
    _
  $region3: #{_lambda_.17} parent=0 // pred_check_branch
    %9 = sbr.rel (0) target = $region5
  $region4: #{_lambda_.17} parent=0 // pred_region
    _
  $region5: #{_lambda_.17} parent=0 // pred_fallthru
    _
  // Predicated region
  $region6: #{_lambda_.17} parent=0 // pred_check
    _
  $region7: #{_lambda_.17} parent=0 // pred_check_branch
    %11 = sbr.rel (0) target = $region9
  $region8: #{_lambda_.17} parent=0 // pred_region
    _
  $region9: #{_lambda_.17} parent=0 // pred_fallthru
    _
  // Predicated region
  $region10: #{_lambda_.17} parent=0 // pred_check
    _
  $region11: #{_lambda_.17} parent=0 // pred_check_branch
    %13 = sbr.rel (0) target = $region13
  $region12: #{_lambda_.17} parent=0 // pred_region
    _
  $region13: #{_lambda_.17} parent=0 // pred_fallthru
    _
  %p14 = scmp.eq.s32.totalorder 0, 0
  // Predicated region
  $region14: #{_lambda_.17} parent=0 // pred_check
    %p15 = pneg %p14
  $region15: #{_lambda_.17} parent=0 // pred_check_branch
    %17 = sbr.rel (%p15) target = $region17
  $region16: #{_lambda_.17} parent=0 // pred_region
    %18 = vst [vmem:[#allocation2] sm:$0xff] 0.0
    %19 = vst [vmem:[#allocation2 + $0x8] sm:$0xff] 0.0
    %20 = vst [vmem:[#allocation2 + $0x10] sm:$0xff] 0.0
    %21 = vst [vmem:[#allocation2 + $0x18] sm:$0xff] 0.0
  $region17: #{_lambda_.17} parent=0 // pred_fallthru
    _
  %v22 = vld [vmem:[#allocation2] sm:$0xff]
  %v23 = vld [vmem:[#allocation2 + $0x8] sm:$0xff]
  %v24 = vld [vmem:[#allocation2 + $0x10] sm:$0xff]
  %v25 = vld [vmem:[#allocation2 + $0x18] sm:$0xff]
  %v26 = vld [vmem:[%s0] sm:$0xff]
  %v27 = vld [vmem:[%s0 + $0x8] sm:$0xff]
  %v28 = vld [vmem:[%s0 + $0x10] sm:$0xff]
  %v29 = vld [vmem:[%s0 + $0x18] sm:$0xff]
  %v30 = vld [vmem:[%s1] sm:$0xff]
  %v31 = vld [vmem:[%s1 + $0x8] sm:$0xff]
  %v32 = vld [vmem:[%s1 + $0x10] sm:$0xff]
  %v33 = vld [vmem:[%s1 + $0x18] sm:$0xff]
  %v34 = vld [vmem:[%s1 + $0x20] sm:$0xff]
  %v35 = vld [vmem:[%s1 + $0x28] sm:$0xff]
  %v36 = vld [vmem:[%s1 + $0x30] sm:$0xff]
  %v37 = vld [vmem:[%s1 + $0x38] sm:$0xff]
  %v38 = vld [vmem:[%s1 + $0x40] sm:$0xff]
  %v39 = vld [vmem:[%s1 + $0x48] sm:$0xff]
  %v40 = vld [vmem:[%s1 + $0x50] sm:$0xff]
  %v41 = vld [vmem:[%s1 + $0x58] sm:$0xff]
  %v42 = vld [vmem:[%s1 + $0x60] sm:$0xff]
  %v43 = vld [vmem:[%s1 + $0x68] sm:$0xff]
  %v44 = vld [vmem:[%s1 + $0x70] sm:$0xff]
  %v45 = vld [vmem:[%s1 + $0x78] sm:$0xff]
  %46 = vmatpush.msra.mxu0 %v45
  %47 = vmatpush.msra.mxu0 %v44
  %48 = vmatpush.msra.mxu0 %v43
  %49 = vmatpush.msra.mxu0 %v42
  %50 = vmatpush.msra.mxu0 %v41
  %51 = vmatpush.msra.mxu0 %v40
  %52 = vmatpush.msra.mxu0 %v39
  %53 = vmatpush.msra.mxu0 %v38
  %54 = vmatpush.msra.mxu0 %v37
  %55 = vmatpush.msra.mxu0 %v36
  %56 = vmatpush.msra.mxu0 %v35
  %57 = vmatpush.msra.mxu0 %v34
  %58 = vmatpush.msra.mxu0 %v33
  %59 = vmatpush.msra.mxu0 %v32
  %60 = vmatpush.msra.mxu0 %v31
  %61 = vmatpush.msra.mxu0 %v30
  %62 = vmatmul.f32.gmra.mxu0 %v26
  %v63 = vpop.f32.mrf.mxu0
  %v64 = vadd.f32 0.0, %v63
  %65 = vmatmul.f32.gmra.mxu0 %v27
  %v66 = vpop.f32.mrf.mxu0
  %v67 = vadd.f32 0.0, %v66
  %68 = vmatmul.f32.gmra.mxu0 %v28
  %v69 = vpop.f32.mrf.mxu0
  %v70 = vadd.f32 0.0, %v69
  %71 = vmatmul.f32.gmra.mxu0 %v29
  %v72 = vpop.f32.mrf.mxu0
  %v73 = vadd.f32 0.0, %v72
  %74 = vdwg.mxu0
  %v75 = vadd.f32 %v22, %v64
  %v76 = vadd.f32 %v23, %v67
  %v77 = vadd.f32 %v24, %v70
  %v78 = vadd.f32 %v25, %v73
  %79 = vst [vmem:[#allocation2] sm:$0xff] %v75
  %80 = vst [vmem:[#allocation2 + $0x8] sm:$0xff] %v76
  %81 = vst [vmem:[#allocation2 + $0x10] sm:$0xff] %v77
  %82 = vst [vmem:[#allocation2 + $0x18] sm:$0xff] %v78
  // Predicated region
  $region18: #{_lambda_.17} parent=0 // pred_check
    %p83 = pneg %p14
  $region19: #{_lambda_.17} parent=0 // pred_check_branch
    %85 = sbr.rel (%p83) target = $region21
  $region20: #{_lambda_.17} parent=0 // pred_region
    %v86 = vld [vmem:[#allocation2] sm:$0xff]
    %v87 = vld [vmem:[#allocation2 + $0x8] sm:$0xff]
    %v88 = vld [vmem:[#allocation2 + $0x10] sm:$0xff]
    %v89 = vld [vmem:[#allocation2 + $0x18] sm:$0xff]
    %v90 = vld [vmem:[%s2] sm:$0x1]
    %v92 = vperm.slane %v90, 0
    %v94 = vadd.f32 %v86, %v92
    %v95 = vadd.f32 %v87, %v92
    %v96 = vadd.f32 %v88, %v92
    %v97 = vadd.f32 %v89, %v92
    %vm98 = vcmp.gt.f32.partialorder %v94, 0.0
    %vm99 = vcmp.gt.f32.partialorder %v95, 0.0
    %vm100 = vcmp.gt.f32.partialorder %v96, 0.0
    %vm101 = vcmp.gt.f32.partialorder %v97, 0.0
    %v102 = vmul.f32 %v94, 0.1
    %v103 = vmul.f32 %v95, 0.1
    %v104 = vmul.f32 %v96, 0.1
    %v105 = vmul.f32 %v97, 0.1
    %v106 = vsel %vm98, %v94, %v102
    %v107 = vsel %vm99, %v95, %v103
    %v108 = vsel %vm100, %v96, %v104
    %v109 = vsel %vm101, %v97, %v105
    %110 = vst [vmem:[%s3] sm:$0xff] %v106
    %111 = vst [vmem:[%s3 + $0x8] sm:$0xff] %v107
    %112 = vst [vmem:[%s3 + $0x10] sm:$0xff] %v108
    %113 = vst [vmem:[%s3 + $0x18] sm:$0xff] %v109
  $region21: #{_lambda_.17} parent=0 // pred_fallthru
    _
  // Predicated region
  $region22: #{_lambda_.17} parent=0 // pred_check
    _
  $region23: #{_lambda_.17} parent=0 // pred_check_branch
    %115 = sbr.rel (0) target = $region25
  $region24: #{_lambda_.17} parent=0 // pred_region
    _
  $region25: #{_lambda_.17} parent=0 // pred_fallthru
    _
  // Predicated region
  $region26: #{_lambda_.17} parent=0 // pred_check
    _
  $region27: #{_lambda_.17} parent=0 // pred_check_branch
    %117 = sbr.rel (0) target = $region29
  $region28: #{_lambda_.17} parent=0 // pred_region
    _
  $region29: #{_lambda_.17} parent=0 // pred_fallthru
    _

// kernel: _lambda_.14
$region0: #{_lambda_.14}
  #allocation0 [shape = 'u32[]', space=smem, size = 0x4, offset = 0x4, fixed_abs, tag = 'smem constant byte address 0x4 - core index']
  #allocation1 [shape = 'u32[72,128]{1,0:T(1,128)}', space=vmem, size = 0x9000, scoped, tag = 'internal scratch']
  #allocation2 [shape = 'f32[32,128]{1,0:T(8,128)}', space=vmem, size = 0x4000, scoped, tag = 'scratch operand']
  %s0 = inlined_call_operand.vmem [shape: f32[32,256], index: 0, kind: input, shape index: {}]
  %s1 = inlined_call_operand.vmem [shape: f32[256,128], index: 1, kind: input, shape index: {}]
  %s2 = inlined_call_operand.vmem [shape: f32[1,128], index: 2, kind: input, shape index: {}]
  %s3 = inlined_call_operand.vmem [shape: f32[32,128], index: 3, kind: output, shape index: {}]
  %s4 = sld [smem:[#allocation0]]
  $region30: #{_lambda_.14} parent=0
    _
  %s6 = ssub.s32 1, %s4
  %s7 = scalar_select 0, %s6, %s4
  // Predicated region
  $region2: #{_lambda_.14} parent=0 // pred_check
    _
  $region3: #{_lambda_.14} parent=0 // pred_check_branch
    %9 = sbr.rel (0) target = $region5
  $region4: #{_lambda_.14} parent=0 // pred_region
    _
  $region5: #{_lambda_.14} parent=0 // pred_fallthru
    _
  // Predicated region
  $region6: #{_lambda_.14} parent=0 // pred_check
    _
  $region7: #{_lambda_.14} parent=0 // pred_check_branch
    %11 = sbr.rel (0) target = $region9
  $region8: #{_lambda_.14} parent=0 // pred_region
    _
  $region9: #{_lambda_.14} parent=0 // pred_fallthru
    _
  // Predicated region
  $region10: #{_lambda_.14} parent=0 // pred_check
    _
  $region11: #{_lambda_.14} parent=0 // pred_check_branch
    %13 = sbr.rel (0) target = $region13
  $region12: #{_lambda_.14} parent=0 // pred_region
    _
  $region13: #{_lambda_.14} parent=0 // pred_fallthru
    _
  %p14 = scmp.eq.s32.totalorder 0, 0
  // Predicated region
  $region14: #{_lambda_.14} parent=0 // pred_check
    %p15 = pneg %p14
  $region15: #{_lambda_.14} parent=0 // pred_check_branch
    %17 = sbr.rel (%p15) target = $region17
  $region16: #{_lambda_.14} parent=0 // pred_region
    %18 = vst [vmem:[#allocation2] sm:$0xff] 0.0
    %19 = vst [vmem:[#allocation2 + $0x8] sm:$0xff] 0.0
    %20 = vst [vmem:[#allocation2 + $0x10] sm:$0xff] 0.0
    %21 = vst [vmem:[#allocation2 + $0x18] sm:$0xff] 0.0
  $region17: #{_lambda_.14} parent=0 // pred_fallthru
    _
  %v22 = vld [vmem:[#allocation2] sm:$0xff]
  %v23 = vld [vmem:[#allocation2 + $0x8] sm:$0xff]
  %v24 = vld [vmem:[#allocation2 + $0x10] sm:$0xff]
  %v25 = vld [vmem:[#allocation2 + $0x18] sm:$0xff]
  %v26 = vld [vmem:[%s0] sm:$0xff]
  %v27 = vld [vmem:[%s0 + $0x8] sm:$0xff]
  %v28 = vld [vmem:[%s0 + $0x10] sm:$0xff]
  %v29 = vld [vmem:[%s0 + $0x18] sm:$0xff]
  %v30 = vld [vmem:[%s0 + $0x20] sm:$0xff]
  %v31 = vld [vmem:[%s0 + $0x28] sm:$0xff]
  %v32 = vld [vmem:[%s0 + $0x30] sm:$0xff]
  %v33 = vld [vmem:[%s0 + $0x38] sm:$0xff]
  %v34 = vld [vmem:[%s1] sm:$0xff]
  %v35 = vld [vmem:[%s1 + $0x8] sm:$0xff]
  %v36 = vld [vmem:[%s1 + $0x10] sm:$0xff]
  %v37 = vld [vmem:[%s1 + $0x18] sm:$0xff]
  %v38 = vld [vmem:[%s1 + $0x20] sm:$0xff]
  %v39 = vld [vmem:[%s1 + $0x28] sm:$0xff]
  %v40 = vld [vmem:[%s1 + $0x30] sm:$0xff]
  %v41 = vld [vmem:[%s1 + $0x38] sm:$0xff]
  %v42 = vld [vmem:[%s1 + $0x40] sm:$0xff]
  %v43 = vld [vmem:[%s1 + $0x48] sm:$0xff]
  %v44 = vld [vmem:[%s1 + $0x50] sm:$0xff]
  %v45 = vld [vmem:[%s1 + $0x58] sm:$0xff]
  %v46 = vld [vmem:[%s1 + $0x60] sm:$0xff]
  %v47 = vld [vmem:[%s1 + $0x68] sm:$0xff]
  %v48 = vld [vmem:[%s1 + $0x70] sm:$0xff]
  %v49 = vld [vmem:[%s1 + $0x78] sm:$0xff]
  %v50 = vld [vmem:[%s1 + $0x80] sm:$0xff]
  %v51 = vld [vmem:[%s1 + $0x88] sm:$0xff]
  %v52 = vld [vmem:[%s1 + $0x90] sm:$0xff]
  %v53 = vld [vmem:[%s1 + $0x98] sm:$0xff]
  %v54 = vld [vmem:[%s1 + $0xa0] sm:$0xff]
  %v55 = vld [vmem:[%s1 + $0xa8] sm:$0xff]
  %v56 = vld [vmem:[%s1 + $0xb0] sm:$0xff]
  %v57 = vld [vmem:[%s1 + $0xb8] sm:$0xff]
  %v58 = vld [vmem:[%s1 + $0xc0] sm:$0xff]
  %v59 = vld [vmem:[%s1 + $0xc8] sm:$0xff]
  %v60 = vld [vmem:[%s1 + $0xd0] sm:$0xff]
  %v61 = vld [vmem:[%s1 + $0xd8] sm:$0xff]
  %v62 = vld [vmem:[%s1 + $0xe0] sm:$0xff]
  %v63 = vld [vmem:[%s1 + $0xe8] sm:$0xff]
  %v64 = vld [vmem:[%s1 + $0xf0] sm:$0xff]
  %v65 = vld [vmem:[%s1 + $0xf8] sm:$0xff]
  %66 = vmatpush.msra.mxu0 %v49
  %67 = vmatpush.msra.mxu0 %v48
  %68 = vmatpush.msra.mxu0 %v47
  %69 = vmatpush.msra.mxu0 %v46
  %70 = vmatpush.msra.mxu0 %v45
  %71 = vmatpush.msra.mxu0 %v44
  %72 = vmatpush.msra.mxu0 %v43
  %73 = vmatpush.msra.mxu0 %v42
  %74 = vmatpush.msra.mxu0 %v41
  %75 = vmatpush.msra.mxu0 %v40
  %76 = vmatpush.msra.mxu0 %v39
  %77 = vmatpush.msra.mxu0 %v38
  %78 = vmatpush.msra.mxu0 %v37
  %79 = vmatpush.msra.mxu0 %v36
  %80 = vmatpush.msra.mxu0 %v35
  %81 = vmatpush.msra.mxu0 %v34
  %82 = vmatmul.f32.gmra.mxu0 %v26
  %v83 = vpop.f32.mrf.mxu0
  %v84 = vadd.f32 0.0, %v83
  %85 = vmatmul.f32.gmra.mxu0 %v28
  %v86 = vpop.f32.mrf.mxu0
  %v87 = vadd.f32 0.0, %v86
  %88 = vmatmul.f32.gmra.mxu0 %v30
  %v89 = vpop.f32.mrf.mxu0
  %v90 = vadd.f32 0.0, %v89
  %91 = vmatmul.f32.gmra.mxu0 %v32
  %v92 = vpop.f32.mrf.mxu0
  %v93 = vadd.f32 0.0, %v92
  %94 = vdwg.mxu0
  %95 = vmatpush.msra.mxu0 %v65
  %96 = vmatpush.msra.mxu0 %v64
  %97 = vmatpush.msra.mxu0 %v63
  %98 = vmatpush.msra.mxu0 %v62
  %99 = vmatpush.msra.mxu0 %v61
  %100 = vmatpush.msra.mxu0 %v60
  %101 = vmatpush.msra.mxu0 %v59
  %102 = vmatpush.msra.mxu0 %v58
  %103 = vmatpush.msra.mxu0 %v57
  %104 = vmatpush.msra.mxu0 %v56
  %105 = vmatpush.msra.mxu0 %v55
  %106 = vmatpush.msra.mxu0 %v54
  %107 = vmatpush.msra.mxu0 %v53
  %108 = vmatpush.msra.mxu0 %v52
  %109 = vmatpush.msra.mxu0 %v51
  %110 = vmatpush.msra.mxu0 %v50
  %111 = vmatmul.f32.gmra.mxu0 %v27
  %v112 = vpop.f32.mrf.mxu0
  %v113 = vadd.f32 %v84, %v112
  %114 = vmatmul.f32.gmra.mxu0 %v29
  %v115 = vpop.f32.mrf.mxu0
  %v116 = vadd.f32 %v87, %v115
  %117 = vmatmul.f32.gmra.mxu0 %v31
  %v118 = vpop.f32.mrf.mxu0
  %v119 = vadd.f32 %v90, %v118
  %120 = vmatmul.f32.gmra.mxu0 %v33
  %v121 = vpop.f32.mrf.mxu0
  %v122 = vadd.f32 %v93, %v121
  %123 = vdwg.mxu0
  %v124 = vadd.f32 %v22, %v113
  %v125 = vadd.f32 %v23, %v116
  %v126 = vadd.f32 %v24, %v119
  %v127 = vadd.f32 %v25, %v122
  %128 = vst [vmem:[#allocation2] sm:$0xff] %v124
  %129 = vst [vmem:[#allocation2 + $0x8] sm:$0xff] %v125
  %130 = vst [vmem:[#allocation2 + $0x10] sm:$0xff] %v126
  %131 = vst [vmem:[#allocation2 + $0x18] sm:$0xff] %v127
  // Predicated region
  $region18: #{_lambda_.14} parent=0 // pred_check
    %p132 = pneg %p14
  $region19: #{_lambda_.14} parent=0 // pred_check_branch
    %134 = sbr.rel (%p132) target = $region21
  $region20: #{_lambda_.14} parent=0 // pred_region
    %v135 = vld [vmem:[#allocation2] sm:$0xff]
    %v136 = vld [vmem:[#allocation2 + $0x8] sm:$0xff]
    %v137 = vld [vmem:[#allocation2 + $0x10] sm:$0xff]
    %v138 = vld [vmem:[#allocation2 + $0x18] sm:$0xff]
    %v139 = vld [vmem:[%s2] sm:$0x1]
    %v141 = vperm.slane %v139, 0
    %v143 = vadd.f32 %v135, %v141
    %v144 = vadd.f32 %v136, %v141
    %v145 = vadd.f32 %v137, %v141
    %v146 = vadd.f32 %v138, %v141
    %vm147 = vcmp.gt.f32.partialorder %v143, 0.0
    %vm148 = vcmp.gt.f32.partialorder %v144, 0.0
    %vm149 = vcmp.gt.f32.partialorder %v145, 0.0
    %vm150 = vcmp.gt.f32.partialorder %v146, 0.0
    %v151 = vmul.f32 %v143, 0.1
    %v152 = vmul.f32 %v144, 0.1
    %v153 = vmul.f32 %v145, 0.1
    %v154 = vmul.f32 %v146, 0.1
    %v155 = vsel %vm147, %v143, %v151
    %v156 = vsel %vm148, %v144, %v152
    %v157 = vsel %vm149, %v145, %v153
    %v158 = vsel %vm150, %v146, %v154
    %159 = vst [vmem:[%s3] sm:$0xff] %v155
    %160 = vst [vmem:[%s3 + $0x8] sm:$0xff] %v156
    %161 = vst [vmem:[%s3 + $0x10] sm:$0xff] %v157
    %162 = vst [vmem:[%s3 + $0x18] sm:$0xff] %v158
  $region21: #{_lambda_.14} parent=0 // pred_fallthru
    _
  // Predicated region
  $region22: #{_lambda_.14} parent=0 // pred_check
    _
  $region23: #{_lambda_.14} parent=0 // pred_check_branch
    %164 = sbr.rel (0) target = $region25
  $region24: #{_lambda_.14} parent=0 // pred_region
    _
  $region25: #{_lambda_.14} parent=0 // pred_fallthru
    _
  // Predicated region
  $region26: #{_lambda_.14} parent=0 // pred_check
    _
  $region27: #{_lambda_.14} parent=0 // pred_check_branch
    %166 = sbr.rel (0) target = $region29
  $region28: #{_lambda_.14} parent=0 // pred_region
    _
  $region29: #{_lambda_.14} parent=0 // pred_fallthru
    _

// kernel: _lambda_.18
$region0: #{_lambda_.18}
  #allocation0 [shape = 'u32[]', space=smem, size = 0x4, offset = 0x4, fixed_abs, tag = 'smem constant byte address 0x4 - core index']
  #allocation1 [shape = 'u32[72,128]{1,0:T(1,128)}', space=vmem, size = 0x9000, scoped, tag = 'internal scratch']
  #allocation2 [shape = 'f32[128,128]{1,0:T(8,128)}', space=vmem, size = 0x10000, scoped, tag = 'scratch operand']
  %s0 = inlined_call_operand.vmem [shape: f32[128,128], index: 0, kind: input, shape index: {}]
  %s1 = inlined_call_operand.vmem [shape: f32[128,128], index: 1, kind: input, shape index: {}]
  %s2 = inlined_call_operand.vmem [shape: f32[1,128], index: 2, kind: input, shape index: {}]
  %s3 = inlined_call_operand.vmem [shape: f32[128,128], index: 3, kind: output, shape index: {}]
  %s4 = sld [smem:[#allocation0]]
  $region30: #{_lambda_.18} parent=0
    _
  %s6 = ssub.s32 1, %s4
  %s7 = scalar_select 0, %s6, %s4
  // Predicated region
  $region2: #{_lambda_.18} parent=0 // pred_check
    _
  $region3: #{_lambda_.18} parent=0 // pred_check_branch
    %9 = sbr.rel (0) target = $region5
  $region4: #{_lambda_.18} parent=0 // pred_region
    _
  $region5: #{_lambda_.18} parent=0 // pred_fallthru
    _
  // Predicated region
  $region6: #{_lambda_.18} parent=0 // pred_check
    _
  $region7: #{_lambda_.18} parent=0 // pred_check_branch
    %11 = sbr.rel (0) target = $region9
  $region8: #{_lambda_.18} parent=0 // pred_region
    _
  $region9: #{_lambda_.18} parent=0 // pred_fallthru
    _
  // Predicated region
  $region10: #{_lambda_.18} parent=0 // pred_check
    _
  $region11: #{_lambda_.18} parent=0 // pred_check_branch
    %13 = sbr.rel (0) target = $region13
  $region12: #{_lambda_.18} parent=0 // pred_region
    _
  $region13: #{_lambda_.18} parent=0 // pred_fallthru
    _
  %p14 = scmp.eq.s32.totalorder 0, 0
  // Predicated region
  $region14: #{_lambda_.18} parent=0 // pred_check
    %p15 = pneg %p14
  $region15: #{_lambda_.18} parent=0 // pred_check_branch
    %17 = sbr.rel (%p15) target = $region17
  $region16: #{_lambda_.18} parent=0 // pred_region
    %18 = vst [vmem:[#allocation2] sm:$0xff] 0.0
    %19 = vst [vmem:[#allocation2 + $0x8] sm:$0xff] 0.0
    %20 = vst [vmem:[#allocation2 + $0x10] sm:$0xff] 0.0
    %21 = vst [vmem:[#allocation2 + $0x18] sm:$0xff] 0.0
    %22 = vst [vmem:[#allocation2 + $0x20] sm:$0xff] 0.0
    %23 = vst [vmem:[#allocation2 + $0x28] sm:$0xff] 0.0
    %24 = vst [vmem:[#allocation2 + $0x30] sm:$0xff] 0.0
    %25 = vst [vmem:[#allocation2 + $0x38] sm:$0xff] 0.0
    %26 = vst [vmem:[#allocation2 + $0x40] sm:$0xff] 0.0
    %27 = vst [vmem:[#allocation2 + $0x48] sm:$0xff] 0.0
    %28 = vst [vmem:[#allocation2 + $0x50] sm:$0xff] 0.0
    %29 = vst [vmem:[#allocation2 + $0x58] sm:$0xff] 0.0
    %30 = vst [vmem:[#allocation2 + $0x60] sm:$0xff] 0.0
    %31 = vst [vmem:[#allocation2 + $0x68] sm:$0xff] 0.0
    %32 = vst [vmem:[#allocation2 + $0x70] sm:$0xff] 0.0
    %33 = vst [vmem:[#allocation2 + $0x78] sm:$0xff] 0.0
  $region17: #{_lambda_.18} parent=0 // pred_fallthru
    _
  %v34 = vld [vmem:[#allocation2] sm:$0xff]
  %v35 = vld [vmem:[#allocation2 + $0x8] sm:$0xff]
  %v36 = vld [vmem:[#allocation2 + $0x10] sm:$0xff]
  %v37 = vld [vmem:[#allocation2 + $0x18] sm:$0xff]
  %v38 = vld [vmem:[#allocation2 + $0x20] sm:$0xff]
  %v39 = vld [vmem:[#allocation2 + $0x28] sm:$0xff]
  %v40 = vld [vmem:[#allocation2 + $0x30] sm:$0xff]
  %v41 = vld [vmem:[#allocation2 + $0x38] sm:$0xff]
  %v42 = vld [vmem:[#allocation2 + $0x40] sm:$0xff]
  %v43 = vld [vmem:[#allocation2 + $0x48] sm:$0xff]
  %v44 = vld [vmem:[#allocation2 + $0x50] sm:$0xff]
  %v45 = vld [vmem:[#allocation2 + $0x58] sm:$0xff]
  %v46 = vld [vmem:[#allocation2 + $0x60] sm:$0xff]
  %v47 = vld [vmem:[#allocation2 + $0x68] sm:$0xff]
  %v48 = vld [vmem:[#allocation2 + $0x70] sm:$0xff]
  %v49 = vld [vmem:[#allocation2 + $0x78] sm:$0xff]
  %v50 = vld [vmem:[%s0] sm:$0xff]
  %v51 = vld [vmem:[%s0 + $0x8] sm:$0xff]
  %v52 = vld [vmem:[%s0 + $0x10] sm:$0xff]
  %v53 = vld [vmem:[%s0 + $0x18] sm:$0xff]
  %v54 = vld [vmem:[%s0 + $0x20] sm:$0xff]
  %v55 = vld [vmem:[%s0 + $0x28] sm:$0xff]
  %v56 = vld [vmem:[%s0 + $0x30] sm:$0xff]
  %v57 = vld [vmem:[%s0 + $0x38] sm:$0xff]
  %v58 = vld [vmem:[%s0 + $0x40] sm:$0xff]
  %v59 = vld [vmem:[%s0 + $0x48] sm:$0xff]
  %v60 = vld [vmem:[%s0 + $0x50] sm:$0xff]
  %v61 = vld [vmem:[%s0 + $0x58] sm:$0xff]
  %v62 = vld [vmem:[%s0 + $0x60] sm:$0xff]
  %v63 = vld [vmem:[%s0 + $0x68] sm:$0xff]
  %v64 = vld [vmem:[%s0 + $0x70] sm:$0xff]
  %v65 = vld [vmem:[%s0 + $0x78] sm:$0xff]
  %v66 = vld [vmem:[%s1] sm:$0xff]
  %v67 = vld [vmem:[%s1 + $0x8] sm:$0xff]
  %v68 = vld [vmem:[%s1 + $0x10] sm:$0xff]
  %v69 = vld [vmem:[%s1 + $0x18] sm:$0xff]
  %v70 = vld [vmem:[%s1 + $0x20] sm:$0xff]
  %v71 = vld [vmem:[%s1 + $0x28] sm:$0xff]
  %v72 = vld [vmem:[%s1 + $0x30] sm:$0xff]
  %v73 = vld [vmem:[%s1 + $0x38] sm:$0xff]
  %v74 = vld [vmem:[%s1 + $0x40] sm:$0xff]
  %v75 = vld [vmem:[%s1 + $0x48] sm:$0xff]
  %v76 = vld [vmem:[%s1 + $0x50] sm:$0xff]
  %v77 = vld [vmem:[%s1 + $0x58] sm:$0xff]
  %v78 = vld [vmem:[%s1 + $0x60] sm:$0xff]
  %v79 = vld [vmem:[%s1 + $0x68] sm:$0xff]
  %v80 = vld [vmem:[%s1 + $0x70] sm:$0xff]
  %v81 = vld [vmem:[%s1 + $0x78] sm:$0xff]
  %82 = vmatpush.msra.mxu0 %v81
  %83 = vmatpush.msra.mxu0 %v80
  %84 = vmatpush.msra.mxu0 %v79
  %85 = vmatpush.msra.mxu0 %v78
  %86 = vmatpush.msra.mxu0 %v77
  %87 = vmatpush.msra.mxu0 %v76
  %88 = vmatpush.msra.mxu0 %v75
  %89 = vmatpush.msra.mxu0 %v74
  %90 = vmatpush.msra.mxu0 %v73
  %91 = vmatpush.msra.mxu0 %v72
  %92 = vmatpush.msra.mxu0 %v71
  %93 = vmatpush.msra.mxu0 %v70
  %94 = vmatpush.msra.mxu0 %v69
  %95 = vmatpush.msra.mxu0 %v68
  %96 = vmatpush.msra.mxu0 %v67
  %97 = vmatpush.msra.mxu0 %v66
  %98 = vmatmul.f32.gmra.mxu0 %v50
  %v99 = vpop.f32.mrf.mxu0
  %v100 = vadd.f32 0.0, %v99
  %101 = vmatmul.f32.gmra.mxu0 %v51
  %v102 = vpop.f32.mrf.mxu0
  %v103 = vadd.f32 0.0, %v102
  %104 = vmatmul.f32.gmra.mxu0 %v52
  %v105 = vpop.f32.mrf.mxu0
  %v106 = vadd.f32 0.0, %v105
  %107 = vmatmul.f32.gmra.mxu0 %v53
  %v108 = vpop.f32.mrf.mxu0
  %v109 = vadd.f32 0.0, %v108
  %110 = vmatmul.f32.gmra.mxu0 %v54
  %v111 = vpop.f32.mrf.mxu0
  %v112 = vadd.f32 0.0, %v111
  %113 = vmatmul.f32.gmra.mxu0 %v55
  %v114 = vpop.f32.mrf.mxu0
  %v115 = vadd.f32 0.0, %v114
  %116 = vmatmul.f32.gmra.mxu0 %v56
  %v117 = vpop.f32.mrf.mxu0
  %v118 = vadd.f32 0.0, %v117
  %119 = vmatmul.f32.gmra.mxu0 %v57
  %v120 = vpop.f32.mrf.mxu0
  %v121 = vadd.f32 0.0, %v120
  %122 = vmatmul.f32.gmra.mxu0 %v58
  %v123 = vpop.f32.mrf.mxu0
  %v124 = vadd.f32 0.0, %v123
  %125 = vmatmul.f32.gmra.mxu0 %v59
  %v126 = vpop.f32.mrf.mxu0
  %v127 = vadd.f32 0.0, %v126
  %128 = vmatmul.f32.gmra.mxu0 %v60
  %v129 = vpop.f32.mrf.mxu0
  %v130 = vadd.f32 0.0, %v129
  %131 = vmatmul.f32.gmra.mxu0 %v61
  %v132 = vpop.f32.mrf.mxu0
  %v133 = vadd.f32 0.0, %v132
  %134 = vmatmul.f32.gmra.mxu0 %v62
  %v135 = vpop.f32.mrf.mxu0
  %v136 = vadd.f32 0.0, %v135
  %137 = vmatmul.f32.gmra.mxu0 %v63
  %v138 = vpop.f32.mrf.mxu0
  %v139 = vadd.f32 0.0, %v138
  %140 = vmatmul.f32.gmra.mxu0 %v64
  %v141 = vpop.f32.mrf.mxu0
  %v142 = vadd.f32 0.0, %v141
  %143 = vmatmul.f32.gmra.mxu0 %v65
  %v144 = vpop.f32.mrf.mxu0
  %v145 = vadd.f32 0.0, %v144
  %146 = vdwg.mxu0
  %v147 = vadd.f32 %v34, %v100
  %v148 = vadd.f32 %v35, %v103
  %v149 = vadd.f32 %v36, %v106
  %v150 = vadd.f32 %v37, %v109
  %v151 = vadd.f32 %v38, %v112
  %v152 = vadd.f32 %v39, %v115
  %v153 = vadd.f32 %v40, %v118
  %v154 = vadd.f32 %v41, %v121
  %v155 = vadd.f32 %v42, %v124
  %v156 = vadd.f32 %v43, %v127
  %v157 = vadd.f32 %v44, %v130
  %v158 = vadd.f32 %v45, %v133
  %v159 = vadd.f32 %v46, %v136
  %v160 = vadd.f32 %v47, %v139
  %v161 = vadd.f32 %v48, %v142
  %v162 = vadd.f32 %v49, %v145
  %163 = vst [vmem:[#allocation2] sm:$0xff] %v147
  %164 = vst [vmem:[#allocation2 + $0x8] sm:$0xff] %v148
  %165 = vst [vmem:[#allocation2 + $0x10] sm:$0xff] %v149
  %166 = vst [vmem:[#allocation2 + $0x18] sm:$0xff] %v150
  %167 = vst [vmem:[#allocation2 + $0x20] sm:$0xff] %v151
  %168 = vst [vmem:[#allocation2 + $0x28] sm:$0xff] %v152
  %169 = vst [vmem:[#allocation2 + $0x30] sm:$0xff] %v153
  %170 = vst [vmem:[#allocation2 + $0x38] sm:$0xff] %v154
  %171 = vst [vmem:[#allocation2 + $0x40] sm:$0xff] %v155
  %172 = vst [vmem:[#allocation2 + $0x48] sm:$0xff] %v156
  %173 = vst [vmem:[#allocation2 + $0x50] sm:$0xff] %v157
  %174 = vst [vmem:[#allocation2 + $0x58] sm:$0xff] %v158
  %175 = vst [vmem:[#allocation2 + $0x60] sm:$0xff] %v159
  %176 = vst [vmem:[#allocation2 + $0x68] sm:$0xff] %v160
  %177 = vst [vmem:[#allocation2 + $0x70] sm:$0xff] %v161
  %178 = vst [vmem:[#allocation2 + $0x78] sm:$0xff] %v162
  // Predicated region
  $region18: #{_lambda_.18} parent=0 // pred_check
    %p179 = pneg %p14
  $region19: #{_lambda_.18} parent=0 // pred_check_branch
    %181 = sbr.rel (%p179) target = $region21
  $region20: #{_lambda_.18} parent=0 // pred_region
    %v182 = vld [vmem:[#allocation2] sm:$0xff]
    %v183 = vld [vmem:[#allocation2 + $0x8] sm:$0xff]
    %v184 = vld [vmem:[#allocation2 + $0x10] sm:$0xff]
    %v185 = vld [vmem:[#allocation2 + $0x18] sm:$0xff]
    %v186 = vld [vmem:[#allocation2 + $0x20] sm:$0xff]
    %v187 = vld [vmem:[#allocation2 + $0x28] sm:$0xff]
    %v188 = vld [vmem:[#allocation2 + $0x30] sm:$0xff]
    %v189 = vld [vmem:[#allocation2 + $0x38] sm:$0xff]
    %v190 = vld [vmem:[#allocation2 + $0x40] sm:$0xff]
    %v191 = vld [vmem:[#allocation2 + $0x48] sm:$0xff]
    %v192 = vld [vmem:[#allocation2 + $0x50] sm:$0xff]
    %v193 = vld [vmem:[#allocation2 + $0x58] sm:$0xff]
    %v194 = vld [vmem:[#allocation2 + $0x60] sm:$0xff]
    %v195 = vld [vmem:[#allocation2 + $0x68] sm:$0xff]
    %v196 = vld [vmem:[#allocation2 + $0x70] sm:$0xff]
    %v197 = vld [vmem:[#allocation2 + $0x78] sm:$0xff]
    %v198 = vld [vmem:[%s2] sm:$0x1]
    %v200 = vperm.slane %v198, 0
    %v202 = vadd.f32 %v182, %v200
    %v203 = vadd.f32 %v183, %v200
    %v204 = vadd.f32 %v184, %v200
    %v205 = vadd.f32 %v185, %v200
    %v206 = vadd.f32 %v186, %v200
    %v207 = vadd.f32 %v187, %v200
    %v208 = vadd.f32 %v188, %v200
    %v209 = vadd.f32 %v189, %v200
    %v210 = vadd.f32 %v190, %v200
    %v211 = vadd.f32 %v191, %v200
    %v212 = vadd.f32 %v192, %v200
    %v213 = vadd.f32 %v193, %v200
    %v214 = vadd.f32 %v194, %v200
    %v215 = vadd.f32 %v195, %v200
    %v216 = vadd.f32 %v196, %v200
    %v217 = vadd.f32 %v197, %v200
    %218 = vst [vmem:[%s3] sm:$0xff] %v202
    %219 = vst [vmem:[%s3 + $0x8] sm:$0xff] %v203
    %220 = vst [vmem:[%s3 + $0x10] sm:$0xff] %v204
    %221 = vst [vmem:[%s3 + $0x18] sm:$0xff] %v205
    %222 = vst [vmem:[%s3 + $0x20] sm:$0xff] %v206
    %223 = vst [vmem:[%s3 + $0x28] sm:$0xff] %v207
    %224 = vst [vmem:[%s3 + $0x30] sm:$0xff] %v208
    %225 = vst [vmem:[%s3 + $0x38] sm:$0xff] %v209
    %226 = vst [vmem:[%s3 + $0x40] sm:$0xff] %v210
    %227 = vst [vmem:[%s3 + $0x48] sm:$0xff] %v211
    %228 = vst [vmem:[%s3 + $0x50] sm:$0xff] %v212
    %229 = vst [vmem:[%s3 + $0x58] sm:$0xff] %v213
    %230 = vst [vmem:[%s3 + $0x60] sm:$0xff] %v214
    %231 = vst [vmem:[%s3 + $0x68] sm:$0xff] %v215
    %232 = vst [vmem:[%s3 + $0x70] sm:$0xff] %v216
    %233 = vst [vmem:[%s3 + $0x78] sm:$0xff] %v217
  $region21: #{_lambda_.18} parent=0 // pred_fallthru
    _
  // Predicated region
  $region22: #{_lambda_.18} parent=0 // pred_check
    _
  $region23: #{_lambda_.18} parent=0 // pred_check_branch
    %235 = sbr.rel (0) target = $region25
  $region24: #{_lambda_.18} parent=0 // pred_region
    _
  $region25: #{_lambda_.18} parent=0 // pred_fallthru
    _
  // Predicated region
  $region26: #{_lambda_.18} parent=0 // pred_check
    _
  $region27: #{_lambda_.18} parent=0 // pred_check_branch
    %237 = sbr.rel (0) target = $region29
  $region28: #{_lambda_.18} parent=0 // pred_region
    _
  $region29: #{_lambda_.18} parent=0 // pred_fallthru
    _

// kernel: _lambda_.15
$region0: #{_lambda_.15}
  #allocation0 [shape = 'u32[]', space=smem, size = 0x4, offset = 0x4, fixed_abs, tag = 'smem constant byte address 0x4 - core index']
  #allocation1 [shape = 'u32[72,128]{1,0:T(1,128)}', space=vmem, size = 0x9000, scoped, tag = 'internal scratch']
  #allocation2 [shape = 'f32[32,128]{1,0:T(8,128)}', space=vmem, size = 0x4000, scoped, tag = 'scratch operand']
  %s0 = inlined_call_operand.vmem [shape: f32[32,128], index: 0, kind: input, shape index: {}]
  %s1 = inlined_call_operand.vmem [shape: f32[128,128], index: 1, kind: input, shape index: {}]
  %s2 = inlined_call_operand.vmem [shape: f32[1,128], index: 2, kind: input, shape index: {}]
  %s3 = inlined_call_operand.vmem [shape: f32[32,128], index: 3, kind: output, shape index: {}]
  %s4 = sld [smem:[#allocation0]]
  $region30: #{_lambda_.15} parent=0
    _
  %s6 = ssub.s32 1, %s4
  %s7 = scalar_select 0, %s6, %s4
  // Predicated region
  $region2: #{_lambda_.15} parent=0 // pred_check
    _
  $region3: #{_lambda_.15} parent=0 // pred_check_branch
    %9 = sbr.rel (0) target = $region5
  $region4: #{_lambda_.15} parent=0 // pred_region
    _
  $region5: #{_lambda_.15} parent=0 // pred_fallthru
    _
  // Predicated region
  $region6: #{_lambda_.15} parent=0 // pred_check
    _
  $region7: #{_lambda_.15} parent=0 // pred_check_branch
    %11 = sbr.rel (0) target = $region9
  $region8: #{_lambda_.15} parent=0 // pred_region
    _
  $region9: #{_lambda_.15} parent=0 // pred_fallthru
    _
  // Predicated region
  $region10: #{_lambda_.15} parent=0 // pred_check
    _
  $region11: #{_lambda_.15} parent=0 // pred_check_branch
    %13 = sbr.rel (0) target = $region13
  $region12: #{_lambda_.15} parent=0 // pred_region
    _
  $region13: #{_lambda_.15} parent=0 // pred_fallthru
    _
  %p14 = scmp.eq.s32.totalorder 0, 0
  // Predicated region
  $region14: #{_lambda_.15} parent=0 // pred_check
    %p15 = pneg %p14
  $region15: #{_lambda_.15} parent=0 // pred_check_branch
    %17 = sbr.rel (%p15) target = $region17
  $region16: #{_lambda_.15} parent=0 // pred_region
    %18 = vst [vmem:[#allocation2] sm:$0xff] 0.0
    %19 = vst [vmem:[#allocation2 + $0x8] sm:$0xff] 0.0
    %20 = vst [vmem:[#allocation2 + $0x10] sm:$0xff] 0.0
    %21 = vst [vmem:[#allocation2 + $0x18] sm:$0xff] 0.0
  $region17: #{_lambda_.15} parent=0 // pred_fallthru
    _
  %v22 = vld [vmem:[#allocation2] sm:$0xff]
  %v23 = vld [vmem:[#allocation2 + $0x8] sm:$0xff]
  %v24 = vld [vmem:[#allocation2 + $0x10] sm:$0xff]
  %v25 = vld [vmem:[#allocation2 + $0x18] sm:$0xff]
  %v26 = vld [vmem:[%s0] sm:$0xff]
  %v27 = vld [vmem:[%s0 + $0x8] sm:$0xff]
  %v28 = vld [vmem:[%s0 + $0x10] sm:$0xff]
  %v29 = vld [vmem:[%s0 + $0x18] sm:$0xff]
  %v30 = vld [vmem:[%s1] sm:$0xff]
  %v31 = vld [vmem:[%s1 + $0x8] sm:$0xff]
  %v32 = vld [vmem:[%s1 + $0x10] sm:$0xff]
  %v33 = vld [vmem:[%s1 + $0x18] sm:$0xff]
  %v34 = vld [vmem:[%s1 + $0x20] sm:$0xff]
  %v35 = vld [vmem:[%s1 + $0x28] sm:$0xff]
  %v36 = vld [vmem:[%s1 + $0x30] sm:$0xff]
  %v37 = vld [vmem:[%s1 + $0x38] sm:$0xff]
  %v38 = vld [vmem:[%s1 + $0x40] sm:$0xff]
  %v39 = vld [vmem:[%s1 + $0x48] sm:$0xff]
  %v40 = vld [vmem:[%s1 + $0x50] sm:$0xff]
  %v41 = vld [vmem:[%s1 + $0x58] sm:$0xff]
  %v42 = vld [vmem:[%s1 + $0x60] sm:$0xff]
  %v43 = vld [vmem:[%s1 + $0x68] sm:$0xff]
  %v44 = vld [vmem:[%s1 + $0x70] sm:$0xff]
  %v45 = vld [vmem:[%s1 + $0x78] sm:$0xff]
  %46 = vmatpush.msra.mxu0 %v45
  %47 = vmatpush.msra.mxu0 %v44
  %48 = vmatpush.msra.mxu0 %v43
  %49 = vmatpush.msra.mxu0 %v42
  %50 = vmatpush.msra.mxu0 %v41
  %51 = vmatpush.msra.mxu0 %v40
  %52 = vmatpush.msra.mxu0 %v39
  %53 = vmatpush.msra.mxu0 %v38
  %54 = vmatpush.msra.mxu0 %v37
  %55 = vmatpush.msra.mxu0 %v36
  %56 = vmatpush.msra.mxu0 %v35
  %57 = vmatpush.msra.mxu0 %v34
  %58 = vmatpush.msra.mxu0 %v33
  %59 = vmatpush.msra.mxu0 %v32
  %60 = vmatpush.msra.mxu0 %v31
  %61 = vmatpush.msra.mxu0 %v30
  %62 = vmatmul.f32.gmra.mxu0 %v26
  %v63 = vpop.f32.mrf.mxu0
  %v64 = vadd.f32 0.0, %v63
  %65 = vmatmul.f32.gmra.mxu0 %v27
  %v66 = vpop.f32.mrf.mxu0
  %v67 = vadd.f32 0.0, %v66
  %68 = vmatmul.f32.gmra.mxu0 %v28
  %v69 = vpop.f32.mrf.mxu0
  %v70 = vadd.f32 0.0, %v69
  %71 = vmatmul.f32.gmra.mxu0 %v29
  %v72 = vpop.f32.mrf.mxu0
  %v73 = vadd.f32 0.0, %v72
  %74 = vdwg.mxu0
  %v75 = vadd.f32 %v22, %v64
  %v76 = vadd.f32 %v23, %v67
  %v77 = vadd.f32 %v24, %v70
  %v78 = vadd.f32 %v25, %v73
  %79 = vst [vmem:[#allocation2] sm:$0xff] %v75
  %80 = vst [vmem:[#allocation2 + $0x8] sm:$0xff] %v76
  %81 = vst [vmem:[#allocation2 + $0x10] sm:$0xff] %v77
  %82 = vst [vmem:[#allocation2 + $0x18] sm:$0xff] %v78
  // Predicated region
  $region18: #{_lambda_.15} parent=0 // pred_check
    %p83 = pneg %p14
  $region19: #{_lambda_.15} parent=0 // pred_check_branch
    %85 = sbr.rel (%p83) target = $region21
  $region20: #{_lambda_.15} parent=0 // pred_region
    %v86 = vld [vmem:[#allocation2] sm:$0xff]
    %v87 = vld [vmem:[#allocation2 + $0x8] sm:$0xff]
    %v88 = vld [vmem:[#allocation2 + $0x10] sm:$0xff]
    %v89 = vld [vmem:[#allocation2 + $0x18] sm:$0xff]
    %v90 = vld [vmem:[%s2] sm:$0x1]
    %v92 = vperm.slane %v90, 0
    %v94 = vadd.f32 %v86, %v92
    %v95 = vadd.f32 %v87, %v92
    %v96 = vadd.f32 %v88, %v92
    %v97 = vadd.f32 %v89, %v92
    %98 = vst [vmem:[%s3] sm:$0xff] %v94
    %99 = vst [vmem:[%s3 + $0x8] sm:$0xff] %v95
    %100 = vst [vmem:[%s3 + $0x10] sm:$0xff] %v96
    %101 = vst [vmem:[%s3 + $0x18] sm:$0xff] %v97
  $region21: #{_lambda_.15} parent=0 // pred_fallthru
    _
  // Predicated region
  $region22: #{_lambda_.15} parent=0 // pred_check
    _
  $region23: #{_lambda_.15} parent=0 // pred_check_branch
    %103 = sbr.rel (0) target = $region25
  $region24: #{_lambda_.15} parent=0 // pred_region
    _
  $region25: #{_lambda_.15} parent=0 // pred_fallthru
    _
  // Predicated region
  $region26: #{_lambda_.15} parent=0 // pred_check
    _
  $region27: #{_lambda_.15} parent=0 // pred_check_branch
    %105 = sbr.rel (0) target = $region29
  $region28: #{_lambda_.15} parent=0 // pred_region
    _
  $region29: #{_lambda_.15} parent=0 // pred_fallthru
    _

// kernel: _lambda_.19
$region0: #{_lambda_.19}
  #allocation0 [shape = 'u32[]', space=smem, size = 0x4, offset = 0x4, fixed_abs, tag = 'smem constant byte address 0x4 - core index']
  #allocation1 [shape = 'u32[72,128]{1,0:T(1,128)}', space=vmem, size = 0x9000, scoped, tag = 'internal scratch']
  %s0 = inlined_call_operand.vmem [shape: f32[8,384], index: 0, kind: input, shape index: {}]
  %s1 = inlined_call_operand.vmem [shape: f32[8,384], index: 1, kind: output, shape index: {}]
  %s2 = sld [smem:[#allocation0]]
  $region14: #{_lambda_.19} parent=0
    _
  %s4 = ssub.s32 1, %s2
  %s5 = scalar_select 0, %s4, %s2
  // Predicated region
  $region2: #{_lambda_.19} parent=0 // pred_check
    _
  $region3: #{_lambda_.19} parent=0 // pred_check_branch
    %7 = sbr.rel (0) target = $region5
  $region4: #{_lambda_.19} parent=0 // pred_region
    _
  $region5: #{_lambda_.19} parent=0 // pred_fallthru
    _
  %v8 = vld [vmem:[%s0] sm:$0xff]
  %v9 = vld [vmem:[%s0 + $0x8] sm:$0xff]
  %v10 = vld [vmem:[%s0 + $0x10] sm:$0xff]
  %v11 = vlaneseq
  %v12 = vshrl.u32 %v11, 7
  %v13 = vlaneseq
  %v14 = vand.u32 %v13, 127
  %v15 = vadd.s32 %v14, 128
  %v16 = vadd.s32 %v14, 256
  %s17 = smul.u32 0, 384
  %v18 = vstv %s17
  %v19 = vadd.s32 %v14, %v18
  %v20 = vadd.s32 %v15, %v18
  %v21 = vadd.s32 %v16, %v18
  %v22 = vcvt.s32.f32 %v19
  %v23 = vcvt.s32.f32 %v20
  %v24 = vcvt.s32.f32 %v21
  %v25 = vrcp.pop 192.0
  %v26 = vmul.f32 192.0, %v25
  %v27 = vsub.f32 1.0, %v26
  %v28 = vmul.f32 %v25, %v27
  %v29 = vadd.f32 %v25, %v28
  %vm30 = vweird.f32 %v25
  %v31 = vsel %vm30, %v25, %v29
  %v32 = vmul.f32 %v22, %v31
  %v33 = vmul.f32 %v23, %v31
  %v34 = vmul.f32 %v24, %v31
  %v35 = vfloor.f32 %v32
  %v36 = vfloor.f32 %v33
  %v37 = vfloor.f32 %v34
  %v38 = vmul.f32 %v35, 192.0
  %v39 = vmul.f32 %v36, 192.0
  %v40 = vmul.f32 %v37, 192.0
  %v41 = vsub.f32 %v22, %v38
  %v42 = vsub.f32 %v23, %v39
  %v43 = vsub.f32 %v24, %v40
  %v44 = vrcp.pop 3.0
  %v45 = vmul.f32 3.0, %v44
  %v46 = vsub.f32 1.0, %v45
  %v47 = vmul.f32 %v44, %v46
  %v48 = vadd.f32 %v44, %v47
  %vm49 = vweird.f32 %v44
  %v50 = vsel %vm49, %v44, %v48
  %v51 = vmul.f32 %v41, %v50
  %v52 = vmul.f32 %v42, %v50
  %v53 = vmul.f32 %v43, %v50
  %v54 = vfloor.f32 %v51
  %v55 = vfloor.f32 %v52
  %v56 = vfloor.f32 %v53
  %v57 = vmul.f32 %v54, 3.0
  %v58 = vmul.f32 %v55, 3.0
  %v59 = vmul.f32 %v56, 3.0
  %v60 = vsub.f32 %v41, %v57
  %v61 = vsub.f32 %v42, %v58
  %v62 = vsub.f32 %v43, %v59
  %v63 = vrcp.pop 8.0
  %v64 = vmul.f32 8.0, %v63
  %v65 = vsub.f32 1.0, %v64
  %v66 = vmul.f32 %v63, %v65
  %v67 = vadd.f32 %v63, %v66
  %vm68 = vweird.f32 %v63
  %v69 = vsel %vm68, %v63, %v67
  %v70 = vmul.f32 %v54, %v69
  %v71 = vmul.f32 %v55, %v69
  %v72 = vmul.f32 %v56, %v69
  %v73 = vfloor.f32 %v70
  %v74 = vfloor.f32 %v71
  %v75 = vfloor.f32 %v72
  %v76 = vmul.f32 %v73, 8.0
  %v77 = vmul.f32 %v74, 8.0
  %v78 = vmul.f32 %v75, 8.0
  %v79 = vsub.f32 %v54, %v76
  %v80 = vsub.f32 %v55, %v77
  %v81 = vsub.f32 %v56, %v78
  %v82 = vsub.f32 %v60, 1.0
  %v83 = vsub.f32 %v61, 1.0
  %v84 = vsub.f32 %v62, 1.0
  %v85 = vand.u32 2147483647, %v82
  %v86 = vand.u32 2147483647, %v83
  %v87 = vand.u32 2147483647, %v84
  %vm88 = vcmp.lt.f32.partialorder %v85, 0.5
  %vm89 = vcmp.lt.f32.partialorder %v86, 0.5
  %vm90 = vcmp.lt.f32.partialorder %v87, 0.5
  %v91 = vsel %vm88, 2.0, 1.0
  %v92 = vsel %vm89, 2.0, 1.0
  %v93 = vsel %vm90, 2.0, 1.0
  %v94 = vsel %vm88, 2.5, 1.5
  %v95 = vsel %vm89, 2.5, 1.5
  %v96 = vsel %vm90, 2.5, 1.5
  %v97 = vsub.f32 %v60, 2.0
  %v98 = vsub.f32 %v61, 2.0
  %v99 = vsub.f32 %v62, 2.0
  %v100 = vand.u32 2147483647, %v97
  %v101 = vand.u32 2147483647, %v98
  %v102 = vand.u32 2147483647, %v99
  %vm103 = vcmp.lt.f32.partialorder %v100, 0.5
  %vm104 = vcmp.lt.f32.partialorder %v101, 0.5
  %vm105 = vcmp.lt.f32.partialorder %v102, 0.5
  %v106 = vsel %vm103, 3.0, %v91
  %v107 = vsel %vm104, 3.0, %v92
  %v108 = vsel %vm105, 3.0, %v93
  %v109 = vsel %vm103, 3.5, %v94
  %v110 = vsel %vm104, 3.5, %v95
  %v111 = vsel %vm105, 3.5, %v96
  %vm112 = vcmp.eq.s32.totalorder %v12, 0
  %vm113 = vcmp.eq.s32.totalorder %v12, 1
  %v114 = vsel %vm113, %v73, 0.0
  %v115 = vsel %vm113, %v74, 0.0
  %v116 = vsel %vm113, %v75, 0.0
  %v117 = vsel %vm112, %v79, %v114
  %v118 = vsel %vm112, %v80, %v115
  %v119 = vsel %vm112, %v81, %v116
  %vm120 = vcmp.eq.s32.totalorder %v12, 2
  %v121 = vsel %vm120, %v106, %v109
  %v122 = vsel %vm120, %v107, %v110
  %v123 = vsel %vm120, %v108, %v111
  %vm124 = vcmp.eq.s32.totalorder %v12, 3
  %vm125 = vmor %vm120, %vm124
  %v126 = vand.u32 2147483647, %v8
  %v127 = vand.u32 2147483647, %v9
  %v128 = vand.u32 2147483647, %v10
  %v129 = vsub.f32 0.0, %v126
  %v130 = vsub.f32 0.0, %v127
  %v131 = vsub.f32 0.0, %v128
  %v132 = vmul.f32 %v129, 1.442695
  %v133 = vpow.pop %v132
  %v134 = vmul.f32 %v130, 1.442695
  %v135 = vpow.pop %v134
  %v136 = vmul.f32 %v131, 1.442695
  %v137 = vpow.pop %v136
  %v138 = vadd.f32 %v133, 1.0
  %v139 = vadd.f32 %v135, 1.0
  %v140 = vadd.f32 %v137, 1.0
  %v141 = vrcp.pop %v138
  %v142 = vmul.f32 %v138, %v141
  %v143 = vsub.f32 1.0, %v142
  %v144 = vmul.f32 %v141, %v143
  %v145 = vadd.f32 %v141, %v144
  %vm146 = vweird.f32 %v138
  %vm147 = vweird.f32 %v141
  %vm148 = vmor %vm146, %vm147
  %v149 = vsel %vm148, %v141, %v145
  %v150 = vand.u32 2147483647, %v138
  %vm151 = vcmp.eq.f32.partialorder %v150, 8.507059e+37
  %v152 = vand.u32 %v138, 2147483648
  %v153 = vor.u32 1.1754944e-38, %v152
  %v154 = vsel %vm151, %v153, %v149
  %v155 = vmul.f32 1.0, %v154
  %v156 = vrcp.pop %v139
  %v157 = vmul.f32 %v139, %v156
  %v158 = vsub.f32 1.0, %v157
  %v159 = vmul.f32 %v156, %v158
  %v160 = vadd.f32 %v156, %v159
  %vm161 = vweird.f32 %v139
  %vm162 = vweird.f32 %v156
  %vm163 = vmor %vm161, %vm162
  %v164 = vsel %vm163, %v156, %v160
  %v165 = vand.u32 2147483647, %v139
  %vm166 = vcmp.eq.f32.partialorder %v165, 8.507059e+37
  %v167 = vand.u32 %v139, 2147483648
  %v168 = vor.u32 1.1754944e-38, %v167
  %v169 = vsel %vm166, %v168, %v164
  %v170 = vmul.f32 1.0, %v169
  %v171 = vrcp.pop %v140
  %v172 = vmul.f32 %v140, %v171
  %v173 = vsub.f32 1.0, %v172
  %v174 = vmul.f32 %v171, %v173
  %v175 = vadd.f32 %v171, %v174
  %vm176 = vweird.f32 %v140
  %vm177 = vweird.f32 %v171
  %vm178 = vmor %vm176, %vm177
  %v179 = vsel %vm178, %v171, %v175
  %v180 = vand.u32 2147483647, %v140
  %vm181 = vcmp.eq.f32.partialorder %v180, 8.507059e+37
  %v182 = vand.u32 %v140, 2147483648
  %v183 = vor.u32 1.1754944e-38, %v182
  %v184 = vsel %vm181, %v183, %v179
  %v185 = vmul.f32 1.0, %v184
  %vm186 = vcmp.ge.f32.partialorder %v8, 0.0
  %vm187 = vcmp.ge.f32.partialorder %v9, 0.0
  %vm188 = vcmp.ge.f32.partialorder %v10, 0.0
  %v189 = vmul.f32 %v133, %v155
  %v190 = vmul.f32 %v135, %v170
  %v191 = vmul.f32 %v137, %v185
  %v192 = vsel %vm186, %v155, %v189
  %v193 = vsel %vm187, %v170, %v190
  %v194 = vsel %vm188, %v185, %v191
  %v195 = vrcp.pop %v133
  %v196 = vmul.f32 %v133, %v195
  %v197 = vsub.f32 1.0, %v196
  %v198 = vmul.f32 %v195, %v197
  %v199 = vadd.f32 %v195, %v198
  %vm200 = vweird.f32 %v133
  %vm201 = vweird.f32 %v195
  %vm202 = vmor %vm200, %vm201
  %v203 = vsel %vm202, %v195, %v199
  %v204 = vand.u32 2147483647, %v133
  %vm205 = vcmp.eq.f32.partialorder %v204, 8.507059e+37
  %v206 = vand.u32 %v133, 2147483648
  %v207 = vor.u32 1.1754944e-38, %v206
  %v208 = vsel %vm205, %v207, %v203
  %v209 = vmul.f32 1.0, %v208
  %v210 = vrcp.pop %v135
  %v211 = vmul.f32 %v135, %v210
  %v212 = vsub.f32 1.0, %v211
  %v213 = vmul.f32 %v210, %v212
  %v214 = vadd.f32 %v210, %v213
  %vm215 = vweird.f32 %v135
  %vm216 = vweird.f32 %v210
  %vm217 = vmor %vm215, %vm216
  %v218 = vsel %vm217, %v210, %v214
  %v219 = vand.u32 2147483647, %v135
  %vm220 = vcmp.eq.f32.partialorder %v219, 8.507059e+37
  %v221 = vand.u32 %v135, 2147483648
  %v222 = vor.u32 1.1754944e-38, %v221
  %v223 = vsel %vm220, %v222, %v218
  %v224 = vmul.f32 1.0, %v223
  %v225 = vrcp.pop %v137
  %v226 = vmul.f32 %v137, %v225
  %v227 = vsub.f32 1.0, %v226
  %v228 = vmul.f32 %v225, %v227
  %v229 = vadd.f32 %v225, %v228
  %vm230 = vweird.f32 %v137
  %vm231 = vweird.f32 %v225
  %vm232 = vmor %vm230, %vm231
  %v233 = vsel %vm232, %v225, %v229
  %v234 = vand.u32 2147483647, %v137
  %vm235 = vcmp.eq.f32.partialorder %v234, 8.507059e+37
  %v236 = vand.u32 %v137, 2147483648
  %v237 = vor.u32 1.1754944e-38, %v236
  %v238 = vsel %vm235, %v237, %v233
  %v239 = vmul.f32 1.0, %v238
  %v240 = vsel %vm186, %v209, %v133
  %v241 = vsel %vm187, %v224, %v135
  %v242 = vsel %vm188, %v239, %v137
  %v243 = vmul.f32 %v240, %v121
  %v244 = vmul.f32 %v241, %v122
  %v245 = vmul.f32 %v242, %v123
  %v246 = vadd.f32 %v192, %v117
  %v247 = vadd.f32 %v193, %v118
  %v248 = vadd.f32 %v194, %v119
  %v249 = vsel %vm125, %v243, %v246
  %v250 = vsel %vm125, %v244, %v247
  %v251 = vsel %vm125, %v245, %v248
  %vm252 = vcmp.lt.s32.totalorder %v12, 4
  %v253 = vsel %vm252, 2.0, 1.0
  %v254 = vmul.f32 %v249, %v253
  %v255 = vmul.f32 %v250, %v253
  %v256 = vmul.f32 %v251, %v253
  %257 = vst [vmem:[%s1] sm:$0xff] %v254
  %258 = vst [vmem:[%s1 + $0x8] sm:$0xff] %v255
  %259 = vst [vmem:[%s1 + $0x10] sm:$0xff] %v256
  // Predicated region
  $region6: #{_lambda_.19} parent=0 // pred_check
    _
  $region7: #{_lambda_.19} parent=0 // pred_check_branch
    %261 = sbr.rel (0) target = $region9
  $region8: #{_lambda_.19} parent=0 // pred_region
    _
  $region9: #{_lambda_.19} parent=0 // pred_fallthru
    _
  // Predicated region
  $region10: #{_lambda_.19} parent=0 // pred_check
    _
  $region11: #{_lambda_.19} parent=0 // pred_check_branch
    %263 = sbr.rel (0) target = $region13
  $region12: #{_lambda_.19} parent=0 // pred_region
    _
  $region13: #{_lambda_.19} parent=0 // pred_fallthru
    _

// kernel: _lambda_.16
$region0: #{_lambda_.16}
  #allocation0 [shape = 'u32[]', space=smem, size = 0x4, offset = 0x4, fixed_abs, tag = 'smem constant byte address 0x4 - core index']
  #allocation1 [shape = 'u32[72,128]{1,0:T(1,128)}', space=vmem, size = 0x9000, scoped, tag = 'internal scratch']
  %s0 = inlined_call_operand.vmem [shape: f32[8,128], index: 0, kind: input, shape index: {}]
  %s1 = inlined_call_operand.vmem [shape: f32[8,128], index: 1, kind: output, shape index: {}]
  %s2 = sld [smem:[#allocation0]]
  $region14: #{_lambda_.16} parent=0
    _
  %s4 = ssub.s32 1, %s2
  %s5 = scalar_select 0, %s4, %s2
  // Predicated region
  $region2: #{_lambda_.16} parent=0 // pred_check
    _
  $region3: #{_lambda_.16} parent=0 // pred_check_branch
    %7 = sbr.rel (0) target = $region5
  $region4: #{_lambda_.16} parent=0 // pred_region
    _
  $region5: #{_lambda_.16} parent=0 // pred_fallthru
    _
  %v8 = vld [vmem:[%s0] sm:$0xff]
  %v9 = vlaneseq
  %v10 = vshrl.u32 %v9, 7
  %v11 = vlaneseq
  %v12 = vand.u32 %v11, 127
  %s13 = smul.u32 0, 128
  %v14 = vstv %s13
  %v15 = vadd.s32 %v12, %v14
  %v16 = vcvt.s32.f32 %v15
  %v17 = vrcp.pop 48.0
  %v18 = vmul.f32 48.0, %v17
  %v19 = vsub.f32 1.0, %v18
  %v20 = vmul.f32 %v17, %v19
  %v21 = vadd.f32 %v17, %v20
  %vm22 = vweird.f32 %v17
  %v23 = vsel %vm22, %v17, %v21
  %v24 = vmul.f32 %v16, %v23
  %v25 = vfloor.f32 %v24
  %v26 = vmul.f32 %v25, 48.0
  %v27 = vsub.f32 %v16, %v26
  %v28 = vrcp.pop 3.0
  %v29 = vmul.f32 3.0, %v28
  %v30 = vsub.f32 1.0, %v29
  %v31 = vmul.f32 %v28, %v30
  %v32 = vadd.f32 %v28, %v31
  %vm33 = vweird.f32 %v28
  %v34 = vsel %vm33, %v28, %v32
  %v35 = vmul.f32 %v27, %v34
  %v36 = vfloor.f32 %v35
  %v37 = vmul.f32 %v36, 3.0
  %v38 = vsub.f32 %v27, %v37
  %v39 = vrcp.pop 4.0
  %v40 = vmul.f32 4.0, %v39
  %v41 = vsub.f32 1.0, %v40
  %v42 = vmul.f32 %v39, %v41
  %v43 = vadd.f32 %v39, %v42
  %vm44 = vweird.f32 %v39
  %v45 = vsel %vm44, %v39, %v43
  %v46 = vmul.f32 %v36, %v45
  %v47 = vfloor.f32 %v46
  %v48 = vmul.f32 %v47, 4.0
  %v49 = vsub.f32 %v36, %v48
  %v50 = vsub.f32 %v38, 1.0
  %v51 = vand.u32 2147483647, %v50
  %vm52 = vcmp.lt.f32.partialorder %v51, 0.5
  %v53 = vsel %vm52, 2.5, 2.0
  %v54 = vsel %vm52, 2.75, 2.25
  %v55 = vsub.f32 %v38, 2.0
  %v56 = vand.u32 2147483647, %v55
  %vm57 = vcmp.lt.f32.partialorder %v56, 0.5
  %v58 = vsel %vm57, 3.0, %v53
  %v59 = vsel %vm57, 3.25, %v54
  %vm60 = vcmp.eq.s32.totalorder %v10, 0
  %vm61 = vcmp.eq.s32.totalorder %v10, 1
  %v62 = vsel %vm61, %v47, 0.0
  %v63 = vsel %vm60, %v49, %v62
  %vm64 = vcmp.eq.s32.totalorder %v10, 2
  %v65 = vsel %vm64, %v58, %v59
  %vm66 = vcmp.eq.s32.totalorder %v10, 3
  %vm67 = vmor %vm64, %vm66
  %v68 = vand.u32 2147483647, %v8
  %v69 = vsub.f32 0.0, %v68
  %v70 = vmul.f32 %v69, 1.442695
  %v71 = vpow.pop %v70
  %v72 = vadd.f32 %v71, 1.0
  %v73 = vrcp.pop %v72
  %v74 = vmul.f32 %v72, %v73
  %v75 = vsub.f32 1.0, %v74
  %v76 = vmul.f32 %v73, %v75
  %v77 = vadd.f32 %v73, %v76
  %vm78 = vweird.f32 %v72
  %vm79 = vweird.f32 %v73
  %vm80 = vmor %vm78, %vm79
  %v81 = vsel %vm80, %v73, %v77
  %v82 = vand.u32 2147483647, %v72
  %vm83 = vcmp.eq.f32.partialorder %v82, 8.507059e+37
  %v84 = vand.u32 %v72, 2147483648
  %v85 = vor.u32 1.1754944e-38, %v84
  %v86 = vsel %vm83, %v85, %v81
  %v87 = vmul.f32 1.0, %v86
  %vm88 = vcmp.ge.f32.partialorder %v8, 0.0
  %v89 = vmul.f32 %v71, %v87
  %v90 = vsel %vm88, %v87, %v89
  %v91 = vrcp.pop %v71
  %v92 = vmul.f32 %v71, %v91
  %v93 = vsub.f32 1.0, %v92
  %v94 = vmul.f32 %v91, %v93
  %v95 = vadd.f32 %v91, %v94
  %vm96 = vweird.f32 %v71
  %vm97 = vweird.f32 %v91
  %vm98 = vmor %vm96, %vm97
  %v99 = vsel %vm98, %v91, %v95
  %v100 = vand.u32 2147483647, %v71
  %vm101 = vcmp.eq.f32.partialorder %v100, 8.507059e+37
  %v102 = vand.u32 %v71, 2147483648
  %v103 = vor.u32 1.1754944e-38, %v102
  %v104 = vsel %vm101, %v103, %v99
  %v105 = vmul.f32 1.0, %v104
  %v106 = vsel %vm88, %v105, %v71
  %v107 = vmul.f32 %v106, %v65
  %v108 = vadd.f32 %v90, %v63
  %v109 = vsel %vm67, %v107, %v108
  %vm110 = vcmp.lt.s32.totalorder %v10, 4
  %v111 = vsel %vm110, 4.0, 1.0
  %v112 = vmul.f32 %v109, %v111
  %113 = vst [vmem:[%s1] sm:$0xff] %v112
  // Predicated region
  $region6: #{_lambda_.16} parent=0 // pred_check
    _
  $region7: #{_lambda_.16} parent=0 // pred_check_branch
    %115 = sbr.rel (0) target = $region9
  $region8: #{_lambda_.16} parent=0 // pred_region
    _
  $region9: #{_lambda_.16} parent=0 // pred_fallthru
    _
  // Predicated region
  $region10: #{_lambda_.16} parent=0 // pred_check
    _
  $region11: #{_lambda_.16} parent=0 // pred_check_branch
    %117 = sbr.rel (0) target = $region13
  $region12: #{_lambda_.16} parent=0 // pred_region
    _
  $region13: #{_lambda_.16} parent=0 // pred_fallthru
    _

</llo_original>
